<compile_context>
chip_gen: v5e
topology: v5e:2x2
jax: 0.10.0
libtpu: 0.0.40
codegen_flags: <defaults>
</compile_context>

<pallas_src>
import functools

import jax
import jax.numpy as jnp
from jax.experimental import pallas as pl
from jax.experimental.pallas import tpu as pltpu


def _erf(z):
    # Abramowitz & Stegun 7.1.26 rational approximation, |err| < 1.5e-7 (~f32 eps),
    # so GELU matches PyTorch's exact (erf-based) nn.GELU to f32 precision.
    # exp() routes to the EUP; the polynomial stays on the VPU.
    p = 0.3275911
    a1, a2, a3, a4, a5 = 0.254829592, -0.284496736, 1.421413741, -1.453152027, 1.061405429
    za = jnp.abs(z)
    t = 1.0 / (1.0 + p * za)
    poly = ((((a5 * t + a4) * t + a3) * t + a2) * t + a1) * t
    y = 1.0 - poly * jnp.exp(-za * za)
    return jnp.where(z < 0.0, -y, y)


def _gelu_exact(x):
    return 0.5 * x * (1.0 + _erf(x * 0.7071067811865476))


def _layernorm(x, w, b, eps=1e-5):
    # PyTorch nn.LayerNorm: biased variance, eps inside rsqrt. All in f32.
    mu = jnp.mean(x, axis=-1, keepdims=True)
    var = jnp.mean(jnp.square(x - mu), axis=-1, keepdims=True)
    return (x - mu) * jax.lax.rsqrt(var + eps) * w + b


def swin_block_kernel(x_ref,
                      n1w_ref, n1b_ref,
                      wqkv_ref, bqkv_ref,
                      projw_ref, projb_ref,
                      n2w_ref, n2b_ref,
                      fc1w_ref, fc1b_ref,
                      fc2w_ref, fc2b_ref,
                      o_ref, *, num_heads):
    f32 = jnp.float32
    bf16 = jnp.bfloat16

    B, C, N = x_ref.shape
    H = num_heads
    hd = C // H
    G = B * H
    BN = B * N

    # (B, C, N) HBM layout -> (B*N, C) compute layout; in-VMEM minor transpose (XLU),
    # replacing the former wrapper-side HBM transposes.
    x = jnp.transpose(x_ref[...], (0, 2, 1)).reshape(BN, C)              # (BN, C) f32

    # ---------------- attention branch (pre-norm) ----------------
    xn = _layernorm(x, n1w_ref[...], n1b_ref[...])                       # (BN, C) f32
    # Single fused, lane-dense qkv matmul; scale pre-folded into the q columns.
    qkv = jnp.dot(xn.astype(bf16), wqkv_ref[...],
                  preferred_element_type=f32) + bqkv_ref[...]            # (BN, 3C) f32
    qkv = qkv.astype(bf16)

    # Head reslice (small bf16 relayouts): leading reshape + batched minor transpose +
    # static sublane slices.  k stays in (G, hd, N) so the score matmul contracts the rhs
    # on its sublane axis (no implied per-head transpose inside the dot).
    qkv_t = jnp.transpose(qkv.reshape(B, N, 3 * C), (0, 2, 1))           # (B, 3C, N)
    q_t = qkv_t[:, 0 * C:1 * C, :].reshape(G, hd, N)                     # (G, hd, N)
    k_t = qkv_t[:, 1 * C:2 * C, :].reshape(G, hd, N)                     # (G, hd, N)
    v_t = qkv_t[:, 2 * C:3 * C, :].reshape(G, hd, N)                     # (G, hd, N)
    q = jnp.transpose(q_t, (0, 2, 1))                                    # (G, N, hd)
    v = jnp.transpose(v_t, (0, 2, 1))                                    # (G, N, hd)

    # Batch and heads fused into one batched-matmul stream, f32 MXU accumulation.
    s = jnp.einsum('gqd,gdk->gqk', q, k_t, preferred_element_type=f32)   # (G, N, N)
    s = s - jnp.max(s, axis=-1, keepdims=True)
    e = jnp.exp(s)                                                       # EUP
    p = e * pl.reciprocal(jnp.sum(e, axis=-1, keepdims=True), approx=True)

    ctx = jnp.einsum('gqk,gkd->gqd', p.astype(bf16), v,
                     preferred_element_type=f32)                         # (G, N, hd)

    # Head-merge fused into ONE output-projection matmul with K = H*hd.
    ctx_m = jnp.transpose(
        jnp.transpose(ctx.astype(bf16), (0, 2, 1)).reshape(B, C, N),     # (B, C, N)
        (0, 2, 1)).reshape(BN, C)                                        # (BN, C) bf16
    attn_out = jnp.dot(ctx_m, projw_ref[...],
                       preferred_element_type=f32) + projb_ref[...]      # (BN, C) f32
    x1 = x + attn_out                                                    # shortcut + attn

    # ---------------- MLP branch (pre-norm): full 128-row matmuls ----------------
    xn2 = _layernorm(x1, n2w_ref[...], n2b_ref[...])
    h1 = jnp.dot(xn2.astype(bf16), fc1w_ref[...],
                 preferred_element_type=f32) + fc1b_ref[...]             # (BN, 4C)
    act = _gelu_exact(h1)
    h2 = jnp.dot(act.astype(bf16), fc2w_ref[...],
                 preferred_element_type=f32) + fc2b_ref[...]             # (BN, C)

    # Back to the (B, C, N) HBM layout inside the kernel (minor transpose).
    y = x1 + h2
    o_ref[...] = jnp.transpose(y.reshape(B, N, C), (0, 2, 1))


def _prepare_weights(params, num_heads):
    """Pack / pre-transform parameters for the kernel (one-time, outside the kernel)."""
    bf16 = jnp.bfloat16
    C = params["projw"].shape[0]
    hd = C // num_heads
    scale = hd ** (-0.5)

    # Fold the attention scale into the q columns (first C outputs) of the fused
    # (C, 3C) qkv weight and its (1, 3C) bias, in f32, then cast the weight to bf16.
    scale_cols = jnp.concatenate([jnp.full((C,), scale, jnp.float32),
                                  jnp.ones((2 * C,), jnp.float32)])
    wqkv = (params["qkvw"] * scale_cols[None, :]).astype(bf16)    # (C, 3C) bf16
    bqkv = params["qkvb"] * scale_cols[None, :]                   # (1, 3C) f32

    return [
        params["n1w"], params["n1b"],
        wqkv, bqkv,
        params["projw"].astype(bf16), params["projb"],
        params["n2w"], params["n2b"],
        params["fc1w"].astype(bf16), params["fc1b"],
        params["fc2w"].astype(bf16), params["fc2b"],
    ]


def swin_transformer_block(x, params, num_heads):
    """x: (B, C, h, w) float32 (NCHW, like PyTorch). Returns (B, C, h, w) float32."""
    B, C, h, w = x.shape
    N = h * w

    # Free reshape only -- the (B, C, N) <-> (B*N, C) transposes happen inside the kernel.
    xt = x.reshape(B, C, N).astype(jnp.float32)
    weights = _prepare_weights(params, num_heads)

    def full_spec(arr):
        nd = arr.ndim
        return pl.BlockSpec(arr.shape, lambda i, _nd=nd: (0,) * _nd)

    in_specs = [full_spec(xt)] + [full_spec(a) for a in weights]

    yt = pl.pallas_call(
        functools.partial(swin_block_kernel, num_heads=num_heads),
        out_shape=jax.ShapeDtypeStruct((B, C, N), jnp.float32),
        grid=(1,),                                   # single fused step at this size
        in_specs=in_specs,
        out_specs=pl.BlockSpec((B, C, N), lambda i: (0, 0, 0)),
        compiler_params=pltpu.CompilerParams(dimension_semantics=("arbitrary",)),
    )(xt, *weights)

    return yt.reshape(B, C, h, w)


def init_params(key, dim):
    """Deterministic synthetic parameters. Linear weights are stored pre-transposed
    (in, out) relative to PyTorch's (out, in); biases are kept as (1, out) rows."""
    ks = jax.random.split(key, 8)
    s = 0.02
    return {
        "n1w": jnp.ones((1, dim), jnp.float32),
        "n1b": jnp.zeros((1, dim), jnp.float32),
        "qkvw": s * jax.random.normal(ks[0], (dim, 3 * dim), jnp.float32),
        "qkvb": s * jax.random.normal(ks[1], (1, 3 * dim), jnp.float32),
        "projw": s * jax.random.normal(ks[2], (dim, dim), jnp.float32),
        "projb": s * jax.random.normal(ks[3], (1, dim), jnp.float32),
        "n2w": jnp.ones((1, dim), jnp.float32),
        "n2b": jnp.zeros((1, dim), jnp.float32),
        "fc1w": s * jax.random.normal(ks[4], (dim, 4 * dim), jnp.float32),
        "fc1b": s * jax.random.normal(ks[5], (1, 4 * dim), jnp.float32),
        "fc2w": s * jax.random.normal(ks[6], (4 * dim, dim), jnp.float32),
        "fc2b": s * jax.random.normal(ks[7], (1, dim), jnp.float32),
    }


if __name__ == "__main__":
    key = jax.random.PRNGKey(0)
    B, dim, num_heads, hh, ww = 2, 32, 4, 8, 8
    window_size = (8, 8)  # unpacked in the reference forward but unused by the compute

    kx, kp = jax.random.split(key)
    x = jax.random.normal(kx, (B, dim, hh, ww), jnp.float32)
    params = init_params(kp, dim)

    out = swin_transformer_block(x, params, num_heads)
    jax.block_until_ready(out)
    assert out.shape == (B, dim, hh, ww) and out.dtype == jnp.float32
    assert bool(jnp.all(jnp.isfinite(out)))
    print("KERNEL_OK")
</pallas_src>

<mosaic_0001>
module attributes {stable_mosaic.version = 11 : i64} {
  func.func @swin_block_kernel(%arg0: i32, %arg1: memref<2x32x64xf32, #tpu.memory_space<vmem>>, %arg2: memref<1x32xf32, #tpu.memory_space<vmem>>, %arg3: memref<1x32xf32, #tpu.memory_space<vmem>>, %arg4: memref<32x96xbf16, #tpu.memory_space<vmem>>, %arg5: memref<1x96xf32, #tpu.memory_space<vmem>>, %arg6: memref<32x32xbf16, #tpu.memory_space<vmem>>, %arg7: memref<1x32xf32, #tpu.memory_space<vmem>>, %arg8: memref<1x32xf32, #tpu.memory_space<vmem>>, %arg9: memref<1x32xf32, #tpu.memory_space<vmem>>, %arg10: memref<32x128xbf16, #tpu.memory_space<vmem>>, %arg11: memref<1x128xf32, #tpu.memory_space<vmem>>, %arg12: memref<128x32xbf16, #tpu.memory_space<vmem>>, %arg13: memref<1x32xf32, #tpu.memory_space<vmem>>, %arg14: memref<2x32x64xf32, #tpu.memory_space<vmem>>) attributes {dimension_semantics = [#tpu.dimension_semantics<arbitrary>], iteration_bounds = array<i64: 1>, scalar_prefetch = 0 : i64, scratch_operands = 0 : i64, tpu.core_type = #tpu.core_type<tc>, window_params = [{pipeline_mode = #tpu.pipeline_mode<synchronous>, transform_indices = @transform_0, window_bounds = array<i64: 2, 32, 64>}, {pipeline_mode = #tpu.pipeline_mode<synchronous>, transform_indices = @transform_1, window_bounds = array<i64: 1, 32>}, {pipeline_mode = #tpu.pipeline_mode<synchronous>, transform_indices = @transform_2, window_bounds = array<i64: 1, 32>}, {pipeline_mode = #tpu.pipeline_mode<synchronous>, transform_indices = @transform_3, window_bounds = array<i64: 32, 96>}, {pipeline_mode = #tpu.pipeline_mode<synchronous>, transform_indices = @transform_4, window_bounds = array<i64: 1, 96>}, {pipeline_mode = #tpu.pipeline_mode<synchronous>, transform_indices = @transform_5, window_bounds = array<i64: 32, 32>}, {pipeline_mode = #tpu.pipeline_mode<synchronous>, transform_indices = @transform_6, window_bounds = array<i64: 1, 32>}, {pipeline_mode = #tpu.pipeline_mode<synchronous>, transform_indices = @transform_7, window_bounds = array<i64: 1, 32>}, {pipeline_mode = #tpu.pipeline_mode<synchronous>, transform_indices = @transform_8, window_bounds = array<i64: 1, 32>}, {pipeline_mode = #tpu.pipeline_mode<synchronous>, transform_indices = @transform_9, window_bounds = array<i64: 32, 128>}, {pipeline_mode = #tpu.pipeline_mode<synchronous>, transform_indices = @transform_10, window_bounds = array<i64: 1, 128>}, {pipeline_mode = #tpu.pipeline_mode<synchronous>, transform_indices = @transform_11, window_bounds = array<i64: 128, 32>}, {pipeline_mode = #tpu.pipeline_mode<synchronous>, transform_indices = @transform_12, window_bounds = array<i64: 1, 32>}, {pipeline_mode = #tpu.pipeline_mode<synchronous>, transform_indices = @transform_13, window_bounds = array<i64: 2, 32, 64>}]} {
    %c0 = arith.constant 0 : index
    %c0_0 = arith.constant 0 : index
    %c0_1 = arith.constant 0 : index
    %0 = vector.load %arg1[%c0, %c0_0, %c0_1] : memref<2x32x64xf32, #tpu.memory_space<vmem>>, vector<2x32x64xf32>
    %1 = tpu.transpose %0, [0, 2, 1] : vector<2x32x64xf32> -> vector<2x64x32xf32>
    %2 = vector.shape_cast %1 : vector<2x64x32xf32> to vector<128x32xf32>
    %c0_2 = arith.constant 0 : index
    %c0_3 = arith.constant 0 : index
    %3 = vector.load %arg2[%c0_2, %c0_3] : memref<1x32xf32, #tpu.memory_space<vmem>>, vector<1x32xf32>
    %c0_4 = arith.constant 0 : index
    %c0_5 = arith.constant 0 : index
    %4 = vector.load %arg3[%c0_4, %c0_5] : memref<1x32xf32, #tpu.memory_space<vmem>>, vector<1x32xf32>
    %cst = arith.constant dense<0.000000e+00> : vector<128xf32>
    %5 = vector.multi_reduction <add>, %2, %cst [1] : vector<128x32xf32> to vector<128xf32>
    %6 = vector.shape_cast %5 : vector<128xf32> to vector<128x1xf32>
    %cst_6 = arith.constant 3.200000e+01 : f32
    %7 = vector.broadcast %cst_6 : f32 to vector<128x1xf32>
    %8 = arith.divf %6, %7 : vector<128x1xf32>
    %9 = vector.broadcast %8 : vector<128x1xf32> to vector<128x32xf32>
    %10 = arith.subf %2, %9 : vector<128x32xf32>
    %11 = arith.mulf %10, %10 : vector<128x32xf32>
    %cst_7 = arith.constant dense<0.000000e+00> : vector<128xf32>
    %12 = vector.multi_reduction <add>, %11, %cst_7 [1] : vector<128x32xf32> to vector<128xf32>
    %13 = vector.shape_cast %12 : vector<128xf32> to vector<128x1xf32>
    %cst_8 = arith.constant 3.200000e+01 : f32
    %14 = vector.broadcast %cst_8 : f32 to vector<128x1xf32>
    %15 = arith.divf %13, %14 : vector<128x1xf32>
    %16 = vector.broadcast %8 : vector<128x1xf32> to vector<128x32xf32>
    %17 = arith.subf %2, %16 : vector<128x32xf32>
    %cst_9 = arith.constant 9.99999974E-6 : f32
    %18 = vector.broadcast %cst_9 : f32 to vector<128x1xf32>
    %19 = arith.addf %15, %18 : vector<128x1xf32>
    %20 = math.rsqrt %19 : vector<128x1xf32>
    %21 = vector.broadcast %20 : vector<128x1xf32> to vector<128x32xf32>
    %22 = arith.mulf %17, %21 : vector<128x32xf32>
    %23 = vector.broadcast %3 : vector<1x32xf32> to vector<128x32xf32>
    %24 = arith.mulf %22, %23 : vector<128x32xf32>
    %25 = vector.broadcast %4 : vector<1x32xf32> to vector<128x32xf32>
    %26 = arith.addf %24, %25 : vector<128x32xf32>
    %27 = arith.truncf %26 : vector<128x32xf32> to vector<128x32xbf16>
    %c0_10 = arith.constant 0 : index
    %c0_11 = arith.constant 0 : index
    %28 = vector.load %arg4[%c0_10, %c0_11] : memref<32x96xbf16, #tpu.memory_space<vmem>>, vector<32x96xbf16>
    %cst_12 = arith.constant dense<0.000000e+00> : vector<128x96xf32>
    %29 = tpu.matmul %27, %28, %cst_12 {dimension_numbers = #tpu.dot_dimension_numbers<[1], [0], [0], [1], [0, 0, 1, 1], [], []>} : vector<128x32xbf16>, vector<32x96xbf16>, vector<128x96xf32> -> vector<128x96xf32>
    %c0_13 = arith.constant 0 : index
    %c0_14 = arith.constant 0 : index
    %30 = vector.load %arg5[%c0_13, %c0_14] : memref<1x96xf32, #tpu.memory_space<vmem>>, vector<1x96xf32>
    %31 = vector.broadcast %30 : vector<1x96xf32> to vector<128x96xf32>
    %32 = arith.addf %29, %31 : vector<128x96xf32>
    %33 = arith.truncf %32 : vector<128x96xf32> to vector<128x96xbf16>
    %34 = vector.shape_cast %33 : vector<128x96xbf16> to vector<2x64x96xbf16>
    %35 = tpu.transpose %34, [0, 2, 1] : vector<2x64x96xbf16> -> vector<2x96x64xbf16>
    %36 = vector.extract_strided_slice %35 {offsets = [0, 0, 0], sizes = [2, 32, 64], strides = [1, 1, 1]} : vector<2x96x64xbf16> to vector<2x32x64xbf16>
    %37 = vector.shape_cast %36 : vector<2x32x64xbf16> to vector<8x8x64xbf16>
    %38 = vector.extract_strided_slice %35 {offsets = [0, 32, 0], sizes = [2, 32, 64], strides = [1, 1, 1]} : vector<2x96x64xbf16> to vector<2x32x64xbf16>
    %39 = vector.shape_cast %38 : vector<2x32x64xbf16> to vector<8x8x64xbf16>
    %40 = vector.extract_strided_slice %35 {offsets = [0, 64, 0], sizes = [2, 32, 64], strides = [1, 1, 1]} : vector<2x96x64xbf16> to vector<2x32x64xbf16>
    %41 = vector.shape_cast %40 : vector<2x32x64xbf16> to vector<8x8x64xbf16>
    %42 = tpu.transpose %37, [0, 2, 1] : vector<8x8x64xbf16> -> vector<8x64x8xbf16>
    %43 = tpu.transpose %41, [0, 2, 1] : vector<8x8x64xbf16> -> vector<8x64x8xbf16>
    "tpu.trace_start"() <{level = 10 : i32, message = "gqd,gdk->gqk"}> : () -> ()
    %cst_15 = arith.constant dense<0.000000e+00> : vector<8x64x64xf32>
    %44 = tpu.matmul %42, %39, %cst_15 {dimension_numbers = #tpu.dot_dimension_numbers<[2], [1], [1], [2], [0, 0, 0, 1, 1, 2], [0], [0]>} : vector<8x64x8xbf16>, vector<8x8x64xbf16>, vector<8x64x64xf32> -> vector<8x64x64xf32>
    "tpu.trace_stop"() : () -> ()
    %cst_16 = arith.constant dense<0xFF800000> : vector<8x64xf32>
    %45 = vector.multi_reduction <maximumf>, %44, %cst_16 [2] : vector<8x64x64xf32> to vector<8x64xf32>
    %46 = vector.shape_cast %45 : vector<8x64xf32> to vector<8x64x1xf32>
    %47 = vector.broadcast %46 : vector<8x64x1xf32> to vector<8x64x64xf32>
    %48 = arith.subf %44, %47 : vector<8x64x64xf32>
    %49 = math.exp %48 : vector<8x64x64xf32>
    %cst_17 = arith.constant dense<0.000000e+00> : vector<8x64xf32>
    %50 = vector.multi_reduction <add>, %49, %cst_17 [2] : vector<8x64x64xf32> to vector<8x64xf32>
    %51 = vector.shape_cast %50 : vector<8x64xf32> to vector<8x64x1xf32>
    %52 = tpu.reciprocal %51 {approx = true} : vector<8x64x1xf32> -> vector<8x64x1xf32>
    %53 = vector.broadcast %52 : vector<8x64x1xf32> to vector<8x64x64xf32>
    %54 = arith.mulf %49, %53 : vector<8x64x64xf32>
    %55 = arith.truncf %54 : vector<8x64x64xf32> to vector<8x64x64xbf16>
    "tpu.trace_start"() <{level = 10 : i32, message = "gqk,gkd->gqd"}> : () -> ()
    %cst_18 = arith.constant dense<0.000000e+00> : vector<8x64x8xf32>
    %56 = tpu.matmul %55, %43, %cst_18 {dimension_numbers = #tpu.dot_dimension_numbers<[2], [1], [1], [2], [0, 0, 0, 1, 1, 2], [0], [0]>} : vector<8x64x64xbf16>, vector<8x64x8xbf16>, vector<8x64x8xf32> -> vector<8x64x8xf32>
    "tpu.trace_stop"() : () -> ()
    %57 = arith.truncf %56 : vector<8x64x8xf32> to vector<8x64x8xbf16>
    %58 = tpu.transpose %57, [0, 2, 1] : vector<8x64x8xbf16> -> vector<8x8x64xbf16>
    %59 = vector.shape_cast %58 : vector<8x8x64xbf16> to vector<2x32x64xbf16>
    %60 = tpu.transpose %59, [0, 2, 1] : vector<2x32x64xbf16> -> vector<2x64x32xbf16>
    %61 = vector.shape_cast %60 : vector<2x64x32xbf16> to vector<128x32xbf16>
    %c0_19 = arith.constant 0 : index
    %c0_20 = arith.constant 0 : index
    %62 = vector.load %arg6[%c0_19, %c0_20] : memref<32x32xbf16, #tpu.memory_space<vmem>>, vector<32x32xbf16>
    %cst_21 = arith.constant dense<0.000000e+00> : vector<128x32xf32>
    %63 = tpu.matmul %61, %62, %cst_21 {dimension_numbers = #tpu.dot_dimension_numbers<[1], [0], [0], [1], [0, 0, 1, 1], [], []>} : vector<128x32xbf16>, vector<32x32xbf16>, vector<128x32xf32> -> vector<128x32xf32>
    %c0_22 = arith.constant 0 : index
    %c0_23 = arith.constant 0 : index
    %64 = vector.load %arg7[%c0_22, %c0_23] : memref<1x32xf32, #tpu.memory_space<vmem>>, vector<1x32xf32>
    %65 = vector.broadcast %64 : vector<1x32xf32> to vector<128x32xf32>
    %66 = arith.addf %63, %65 : vector<128x32xf32>
    %67 = arith.addf %2, %66 : vector<128x32xf32>
    %c0_24 = arith.constant 0 : index
    %c0_25 = arith.constant 0 : index
    %68 = vector.load %arg8[%c0_24, %c0_25] : memref<1x32xf32, #tpu.memory_space<vmem>>, vector<1x32xf32>
    %c0_26 = arith.constant 0 : index
    %c0_27 = arith.constant 0 : index
    %69 = vector.load %arg9[%c0_26, %c0_27] : memref<1x32xf32, #tpu.memory_space<vmem>>, vector<1x32xf32>
    %cst_28 = arith.constant dense<0.000000e+00> : vector<128xf32>
    %70 = vector.multi_reduction <add>, %67, %cst_28 [1] : vector<128x32xf32> to vector<128xf32>
    %71 = vector.shape_cast %70 : vector<128xf32> to vector<128x1xf32>
    %cst_29 = arith.constant 3.200000e+01 : f32
    %72 = vector.broadcast %cst_29 : f32 to vector<128x1xf32>
    %73 = arith.divf %71, %72 : vector<128x1xf32>
    %74 = vector.broadcast %73 : vector<128x1xf32> to vector<128x32xf32>
    %75 = arith.subf %67, %74 : vector<128x32xf32>
    %76 = arith.mulf %75, %75 : vector<128x32xf32>
    %cst_30 = arith.constant dense<0.000000e+00> : vector<128xf32>
    %77 = vector.multi_reduction <add>, %76, %cst_30 [1] : vector<128x32xf32> to vector<128xf32>
    %78 = vector.shape_cast %77 : vector<128xf32> to vector<128x1xf32>
    %cst_31 = arith.constant 3.200000e+01 : f32
    %79 = vector.broadcast %cst_31 : f32 to vector<128x1xf32>
    %80 = arith.divf %78, %79 : vector<128x1xf32>
    %81 = vector.broadcast %73 : vector<128x1xf32> to vector<128x32xf32>
    %82 = arith.subf %67, %81 : vector<128x32xf32>
    %cst_32 = arith.constant 9.99999974E-6 : f32
    %83 = vector.broadcast %cst_32 : f32 to vector<128x1xf32>
    %84 = arith.addf %80, %83 : vector<128x1xf32>
    %85 = math.rsqrt %84 : vector<128x1xf32>
    %86 = vector.broadcast %85 : vector<128x1xf32> to vector<128x32xf32>
    %87 = arith.mulf %82, %86 : vector<128x32xf32>
    %88 = vector.broadcast %68 : vector<1x32xf32> to vector<128x32xf32>
    %89 = arith.mulf %87, %88 : vector<128x32xf32>
    %90 = vector.broadcast %69 : vector<1x32xf32> to vector<128x32xf32>
    %91 = arith.addf %89, %90 : vector<128x32xf32>
    %92 = arith.truncf %91 : vector<128x32xf32> to vector<128x32xbf16>
    %c0_33 = arith.constant 0 : index
    %c0_34 = arith.constant 0 : index
    %93 = vector.load %arg10[%c0_33, %c0_34] : memref<32x128xbf16, #tpu.memory_space<vmem>>, vector<32x128xbf16>
    %cst_35 = arith.constant dense<0.000000e+00> : vector<128x128xf32>
    %94 = tpu.matmul %92, %93, %cst_35 {dimension_numbers = #tpu.dot_dimension_numbers<[1], [0], [0], [1], [0, 0, 1, 1], [], []>} : vector<128x32xbf16>, vector<32x128xbf16>, vector<128x128xf32> -> vector<128x128xf32>
    %c0_36 = arith.constant 0 : index
    %c0_37 = arith.constant 0 : index
    %95 = vector.load %arg11[%c0_36, %c0_37] : memref<1x128xf32, #tpu.memory_space<vmem>>, vector<1x128xf32>
    %96 = vector.broadcast %95 : vector<1x128xf32> to vector<128x128xf32>
    %97 = arith.addf %94, %96 : vector<128x128xf32>
    %cst_38 = arith.constant 5.000000e-01 : f32
    %98 = vector.broadcast %cst_38 : f32 to vector<128x128xf32>
    %99 = arith.mulf %98, %97 : vector<128x128xf32>
    %cst_39 = arith.constant 0.707106769 : f32
    %100 = vector.broadcast %cst_39 : f32 to vector<128x128xf32>
    %101 = arith.mulf %97, %100 : vector<128x128xf32>
    %102 = math.absf %101 : vector<128x128xf32>
    %cst_40 = arith.constant 0.327591091 : f32
    %103 = vector.broadcast %cst_40 : f32 to vector<128x128xf32>
    %104 = arith.mulf %103, %102 : vector<128x128xf32>
    %cst_41 = arith.constant 1.000000e+00 : f32
    %105 = vector.broadcast %cst_41 : f32 to vector<128x128xf32>
    %106 = arith.addf %105, %104 : vector<128x128xf32>
    %cst_42 = arith.constant 1.000000e+00 : f32
    %107 = vector.broadcast %cst_42 : f32 to vector<128x128xf32>
    %108 = arith.divf %107, %106 : vector<128x128xf32>
    %cst_43 = arith.constant 1.06140542 : f32
    %109 = vector.broadcast %cst_43 : f32 to vector<128x128xf32>
    %110 = arith.mulf %109, %108 : vector<128x128xf32>
    %cst_44 = arith.constant -1.45315206 : f32
    %111 = vector.broadcast %cst_44 : f32 to vector<128x128xf32>
    %112 = arith.addf %110, %111 : vector<128x128xf32>
    %113 = arith.mulf %112, %108 : vector<128x128xf32>
    %cst_45 = arith.constant 1.42141378 : f32
    %114 = vector.broadcast %cst_45 : f32 to vector<128x128xf32>
    %115 = arith.addf %113, %114 : vector<128x128xf32>
    %116 = arith.mulf %115, %108 : vector<128x128xf32>
    %cst_46 = arith.constant -0.284496725 : f32
    %117 = vector.broadcast %cst_46 : f32 to vector<128x128xf32>
    %118 = arith.addf %116, %117 : vector<128x128xf32>
    %119 = arith.mulf %118, %108 : vector<128x128xf32>
    %cst_47 = arith.constant 0.254829586 : f32
    %120 = vector.broadcast %cst_47 : f32 to vector<128x128xf32>
    %121 = arith.addf %119, %120 : vector<128x128xf32>
    %122 = arith.mulf %121, %108 : vector<128x128xf32>
    %cst_48 = arith.constant 0.000000e+00 : f32
    %123 = vector.broadcast %cst_48 : f32 to vector<128x128xf32>
    %124 = arith.subf %123, %102 : vector<128x128xf32>
    %125 = arith.mulf %124, %102 : vector<128x128xf32>
    %126 = math.exp %125 : vector<128x128xf32>
    %127 = arith.mulf %122, %126 : vector<128x128xf32>
    %cst_49 = arith.constant 1.000000e+00 : f32
    %128 = vector.broadcast %cst_49 : f32 to vector<128x128xf32>
    %129 = arith.subf %128, %127 : vector<128x128xf32>
    %cst_50 = arith.constant 0.000000e+00 : f32
    %130 = vector.broadcast %cst_50 : f32 to vector<128x128xf32>
    %131 = arith.cmpf olt, %101, %130 : vector<128x128xf32>
    %cst_51 = arith.constant 0.000000e+00 : f32
    %132 = vector.broadcast %cst_51 : f32 to vector<128x128xf32>
    %133 = arith.subf %132, %129 : vector<128x128xf32>
    %134 = arith.select %131, %133, %129 : vector<128x128xi1>, vector<128x128xf32>
    %cst_52 = arith.constant 1.000000e+00 : f32
    %135 = vector.broadcast %cst_52 : f32 to vector<128x128xf32>
    %136 = arith.addf %135, %134 : vector<128x128xf32>
    %137 = arith.mulf %99, %136 : vector<128x128xf32>
    %138 = arith.truncf %137 : vector<128x128xf32> to vector<128x128xbf16>
    %c0_53 = arith.constant 0 : index
    %c0_54 = arith.constant 0 : index
    %139 = vector.load %arg12[%c0_53, %c0_54] : memref<128x32xbf16, #tpu.memory_space<vmem>>, vector<128x32xbf16>
    %cst_55 = arith.constant dense<0.000000e+00> : vector<128x32xf32>
    %140 = tpu.matmul %138, %139, %cst_55 {dimension_numbers = #tpu.dot_dimension_numbers<[1], [0], [0], [1], [0, 0, 1, 1], [], []>} : vector<128x128xbf16>, vector<128x32xbf16>, vector<128x32xf32> -> vector<128x32xf32>
    %c0_56 = arith.constant 0 : index
    %c0_57 = arith.constant 0 : index
    %141 = vector.load %arg13[%c0_56, %c0_57] : memref<1x32xf32, #tpu.memory_space<vmem>>, vector<1x32xf32>
    %142 = vector.broadcast %141 : vector<1x32xf32> to vector<128x32xf32>
    %143 = arith.addf %140, %142 : vector<128x32xf32>
    %144 = arith.addf %67, %143 : vector<128x32xf32>
    %145 = vector.shape_cast %144 : vector<128x32xf32> to vector<2x64x32xf32>
    %146 = tpu.transpose %145, [0, 2, 1] : vector<2x64x32xf32> -> vector<2x32x64xf32>
    %c0_58 = arith.constant 0 : index
    %c0_59 = arith.constant 0 : index
    %c0_60 = arith.constant 0 : index
    %147 = vector.load %arg14[%c0_58, %c0_59, %c0_60] : memref<2x32x64xf32, #tpu.memory_space<vmem>>, vector<2x32x64xf32>
    tpu.vector_store %arg14[%c0_58, %c0_59, %c0_60], %146 {strides = array<i32>} : memref<2x32x64xf32, #tpu.memory_space<vmem>>, vector<2x32x64xf32>,
    return
  }
  func.func @transform_0(%arg0: i32) -> (i32, i32, i32) {
    %c0_i32 = arith.constant 0 : i32
    %c0_i32_0 = arith.constant 0 : i32
    %c0_i32_1 = arith.constant 0 : i32
    %c0_i32_2 = arith.constant 0 : i32
    return %c0_i32, %c0_i32_0, %c0_i32_1 : i32, i32, i32
  }
  func.func @transform_1(%arg0: i32) -> (i32, i32) {
    %c0_i32 = arith.constant 0 : i32
    %c0_i32_0 = arith.constant 0 : i32
    %c0_i32_1 = arith.constant 0 : i32
    return %c0_i32, %c0_i32_0 : i32, i32
  }
  func.func @transform_2(%arg0: i32) -> (i32, i32) {
    %c0_i32 = arith.constant 0 : i32
    %c0_i32_0 = arith.constant 0 : i32
    %c0_i32_1 = arith.constant 0 : i32
    return %c0_i32, %c0_i32_0 : i32, i32
  }
  func.func @transform_3(%arg0: i32) -> (i32, i32) {
    %c0_i32 = arith.constant 0 : i32
    %c0_i32_0 = arith.constant 0 : i32
    %c0_i32_1 = arith.constant 0 : i32
    return %c0_i32, %c0_i32_0 : i32, i32
  }
  func.func @transform_4(%arg0: i32) -> (i32, i32) {
    %c0_i32 = arith.constant 0 : i32
    %c0_i32_0 = arith.constant 0 : i32
    %c0_i32_1 = arith.constant 0 : i32
    return %c0_i32, %c0_i32_0 : i32, i32
  }
  func.func @transform_5(%arg0: i32) -> (i32, i32) {
    %c0_i32 = arith.constant 0 : i32
    %c0_i32_0 = arith.constant 0 : i32
    %c0_i32_1 = arith.constant 0 : i32
    return %c0_i32, %c0_i32_0 : i32, i32
  }
  func.func @transform_6(%arg0: i32) -> (i32, i32) {
    %c0_i32 = arith.constant 0 : i32
    %c0_i32_0 = arith.constant 0 : i32
    %c0_i32_1 = arith.constant 0 : i32
    return %c0_i32, %c0_i32_0 : i32, i32
  }
  func.func @transform_7(%arg0: i32) -> (i32, i32) {
    %c0_i32 = arith.constant 0 : i32
    %c0_i32_0 = arith.constant 0 : i32
    %c0_i32_1 = arith.constant 0 : i32
    return %c0_i32, %c0_i32_0 : i32, i32
  }
  func.func @transform_8(%arg0: i32) -> (i32, i32) {
    %c0_i32 = arith.constant 0 : i32
    %c0_i32_0 = arith.constant 0 : i32
    %c0_i32_1 = arith.constant 0 : i32
    return %c0_i32, %c0_i32_0 : i32, i32
  }
  func.func @transform_9(%arg0: i32) -> (i32, i32) {
    %c0_i32 = arith.constant 0 : i32
    %c0_i32_0 = arith.constant 0 : i32
    %c0_i32_1 = arith.constant 0 : i32
    return %c0_i32, %c0_i32_0 : i32, i32
  }
  func.func @transform_10(%arg0: i32) -> (i32, i32) {
    %c0_i32 = arith.constant 0 : i32
    %c0_i32_0 = arith.constant 0 : i32
    %c0_i32_1 = arith.constant 0 : i32
    return %c0_i32, %c0_i32_0 : i32, i32
  }
  func.func @transform_11(%arg0: i32) -> (i32, i32) {
    %c0_i32 = arith.constant 0 : i32
    %c0_i32_0 = arith.constant 0 : i32
    %c0_i32_1 = arith.constant 0 : i32
    return %c0_i32, %c0_i32_0 : i32, i32
  }
  func.func @transform_12(%arg0: i32) -> (i32, i32) {
    %c0_i32 = arith.constant 0 : i32
    %c0_i32_0 = arith.constant 0 : i32
    %c0_i32_1 = arith.constant 0 : i32
    return %c0_i32, %c0_i32_0 : i32, i32
  }
  func.func @transform_13(%arg0: i32) -> (i32, i32, i32) {
    %c0_i32 = arith.constant 0 : i32
    %c0_i32_0 = arith.constant 0 : i32
    %c0_i32_1 = arith.constant 0 : i32
    %c0_i32_2 = arith.constant 0 : i32
    return %c0_i32, %c0_i32_0, %c0_i32_1 : i32, i32, i32
  }
}

</mosaic_0001>

<llo_original>
// kernel: tpu_custom_call.1
$region0: #{tpu_custom_call.1}
  #allocation0 [shape = 'u32[]', space=smem, size = 0x4, offset = 0x4, fixed_abs, tag = 'smem constant byte address 0x4 - core index']
  #allocation1 [shape = 'u32[72,128]{1,0:T(1,128)}', space=vmem, size = 0x9000, scoped, tag = 'internal scratch']
  %s0 = inlined_call_operand.vmem [shape: f32[2,32,64], index: 0, kind: input, shape index: {}]
  %s1 = inlined_call_operand.hbm [shape: f32[1,32], index: 1, kind: input, shape index: {}]
  %s2 = inlined_call_operand.vmem [shape: f32[1,32], index: 2, kind: input, shape index: {}]
  %s3 = inlined_call_operand.vmem [shape: bf16[32,96], index: 3, kind: input, shape index: {}]
  %s4 = inlined_call_operand.vmem [shape: f32[1,96], index: 4, kind: input, shape index: {}]
  %s5 = inlined_call_operand.hbm [shape: bf16[32,32], index: 5, kind: input, shape index: {}]
  %s6 = inlined_call_operand.vmem [shape: f32[1,32], index: 6, kind: input, shape index: {}]
  %s7 = inlined_call_operand.vmem [shape: f32[1,32], index: 7, kind: input, shape index: {}]
  %s8 = inlined_call_operand.vmem [shape: f32[1,32], index: 8, kind: input, shape index: {}]
  %s9 = inlined_call_operand.hbm [shape: bf16[32,128], index: 9, kind: input, shape index: {}]
  %s10 = inlined_call_operand.vmem [shape: f32[1,128], index: 10, kind: input, shape index: {}]
  %s11 = inlined_call_operand.vmem [shape: bf16[128,32], index: 11, kind: input, shape index: {}]
  %s12 = inlined_call_operand.vmem [shape: f32[1,32], index: 12, kind: input, shape index: {}]
  %s13 = inlined_call_operand.hbm [shape: f32[2,32,64], index: 13, kind: output, shape index: {}]
  %s14 = sld [smem:[#allocation0]]
  $region74: #{tpu_custom_call.1} parent=0
    _
  %s16 = ssub.s32 1, %s14
  %s17 = scalar_select 0, %s16, %s14
  $region1: #{tpu_custom_call.1} parent=0
    #allocation2 [shape = 'u8[512]{0}', space=vmem, size = 0x400, scoped, tag = 'input window, operand 1, single buffered']
    #allocation3 [shape = 's32[1]{0}', space=sflag, size = 0x4, scoped, tag = 'scoped memory for tpu_custom_call.1']
    #allocation4 [shape = 's32[1]{0}', space=sflag, size = 0x4, scoped, tag = 'scoped memory for tpu_custom_call.1']
    #allocation5 [shape = 'u8[8192]{0}', space=vmem, size = 0x2000, scoped, tag = 'input window, operand 5, single buffered']
    #allocation6 [shape = 's32[1]{0}', space=sflag, size = 0x4, scoped, tag = 'scoped memory for tpu_custom_call.1']
    #allocation7 [shape = 'u8[8192]{0}', space=vmem, size = 0x2000, scoped, tag = 'input window, operand 9, single buffered']
    #allocation8 [shape = 'u8[32768]{0}', space=vmem, size = 0x8000, scoped, tag = 'output window, operand 0, single buffered']
    %18 = vsyncpa [#allocation3], 0
    %19 = vsyncpa [#allocation6], 0
    %20 = vsyncpa [#allocation4], 0
    // Predicated region
    $region2: #{tpu_custom_call.1} parent=1 // pred_check
      _
    $region3: #{tpu_custom_call.1} parent=1 // pred_check_branch
      %22 = sbr.rel (0) target = $region5
    $region4: #{tpu_custom_call.1} parent=1 // pred_region
      _
    $region5: #{tpu_custom_call.1} parent=1 // pred_fallthru
      _
    // Predicated region
    $region6: #{tpu_custom_call.1} parent=1 // pred_check
      _
    $region7: #{tpu_custom_call.1} parent=1 // pred_check_branch
      %24 = sbr.rel (0) target = $region9
    $region8: #{tpu_custom_call.1} parent=1 // pred_region
      %26 = vsyncadd [#allocation3], 0
      %s28 = sshll.u32 %s1, 4
      %s29 = int_to_ptr.hbm [resolvable:$true] %s28
      %s30 = sshll.u32 [#allocation2], 4
      %s31 = int_to_ptr.vmem [resolvable:$true] %s30
      %33 = dma.hbm_to_vmem [thread:$0]  %s29, 16, %s31, [#allocation3]
    $region9: #{tpu_custom_call.1} parent=1 // pred_fallthru
      _
    // Predicated region
    $region10: #{tpu_custom_call.1} parent=1 // pred_check
      _
    $region11: #{tpu_custom_call.1} parent=1 // pred_check_branch
      %35 = sbr.rel (0) target = $region13
    $region12: #{tpu_custom_call.1} parent=1 // pred_region
      _
    $region13: #{tpu_custom_call.1} parent=1 // pred_fallthru
      _
    // Predicated region
    $region14: #{tpu_custom_call.1} parent=1 // pred_check
      _
    $region15: #{tpu_custom_call.1} parent=1 // pred_check_branch
      %37 = sbr.rel (0) target = $region17
    $region16: #{tpu_custom_call.1} parent=1 // pred_region
      _
    $region17: #{tpu_custom_call.1} parent=1 // pred_fallthru
      _
    // Predicated region
    $region18: #{tpu_custom_call.1} parent=1 // pred_check
      _
    $region19: #{tpu_custom_call.1} parent=1 // pred_check_branch
      %39 = sbr.rel (0) target = $region21
    $region20: #{tpu_custom_call.1} parent=1 // pred_region
      _
    $region21: #{tpu_custom_call.1} parent=1 // pred_fallthru
      _
    // Predicated region
    $region22: #{tpu_custom_call.1} parent=1 // pred_check
      _
    $region23: #{tpu_custom_call.1} parent=1 // pred_check_branch
      %41 = sbr.rel (0) target = $region25
    $region24: #{tpu_custom_call.1} parent=1 // pred_region
      %43 = vsyncadd [#allocation6], 0
      %s44 = sshll.u32 %s5, 4
      %s45 = int_to_ptr.hbm [resolvable:$true] %s44
      %s46 = sshll.u32 [#allocation5], 4
      %s47 = int_to_ptr.vmem [resolvable:$true] %s46
      %52 = dma.hbm_to_vmem [thread:$0]  %s45, 256, %s47, [#allocation6], 64, 64, 4
    $region25: #{tpu_custom_call.1} parent=1 // pred_fallthru
      _
    // Predicated region
    $region26: #{tpu_custom_call.1} parent=1 // pred_check
      _
    $region27: #{tpu_custom_call.1} parent=1 // pred_check_branch
      %54 = sbr.rel (0) target = $region29
    $region28: #{tpu_custom_call.1} parent=1 // pred_region
      _
    $region29: #{tpu_custom_call.1} parent=1 // pred_fallthru
      _
    // Predicated region
    $region30: #{tpu_custom_call.1} parent=1 // pred_check
      _
    $region31: #{tpu_custom_call.1} parent=1 // pred_check_branch
      %56 = sbr.rel (0) target = $region33
    $region32: #{tpu_custom_call.1} parent=1 // pred_region
      _
    $region33: #{tpu_custom_call.1} parent=1 // pred_fallthru
      _
    // Predicated region
    $region34: #{tpu_custom_call.1} parent=1 // pred_check
      _
    $region35: #{tpu_custom_call.1} parent=1 // pred_check_branch
      %58 = sbr.rel (0) target = $region37
    $region36: #{tpu_custom_call.1} parent=1 // pred_region
      _
    $region37: #{tpu_custom_call.1} parent=1 // pred_fallthru
      _
    // Predicated region
    $region38: #{tpu_custom_call.1} parent=1 // pred_check
      _
    $region39: #{tpu_custom_call.1} parent=1 // pred_check_branch
      %60 = sbr.rel (0) target = $region41
    $region40: #{tpu_custom_call.1} parent=1 // pred_region
      %62 = vsyncadd [#allocation6], 0
      %s63 = sshll.u32 %s9, 4
      %s64 = int_to_ptr.hbm [resolvable:$true] %s63
      %s65 = sshll.u32 [#allocation7], 4
      %s66 = int_to_ptr.vmem [resolvable:$true] %s65
      %71 = dma.hbm_to_vmem [thread:$0]  %s64, 256, %s66, [#allocation6], 64, 64, 4
    $region41: #{tpu_custom_call.1} parent=1 // pred_fallthru
      _
    // Predicated region
    $region42: #{tpu_custom_call.1} parent=1 // pred_check
      _
    $region43: #{tpu_custom_call.1} parent=1 // pred_check_branch
      %73 = sbr.rel (0) target = $region45
    $region44: #{tpu_custom_call.1} parent=1 // pred_region
      _
    $region45: #{tpu_custom_call.1} parent=1 // pred_fallthru
      _
    // Predicated region
    $region46: #{tpu_custom_call.1} parent=1 // pred_check
      _
    $region47: #{tpu_custom_call.1} parent=1 // pred_check_branch
      %75 = sbr.rel (0) target = $region49
    $region48: #{tpu_custom_call.1} parent=1 // pred_region
      _
    $region49: #{tpu_custom_call.1} parent=1 // pred_fallthru
      _
    // Predicated region
    $region50: #{tpu_custom_call.1} parent=1 // pred_check
      _
    $region51: #{tpu_custom_call.1} parent=1 // pred_check_branch
      %77 = sbr.rel (0) target = $region53
    $region52: #{tpu_custom_call.1} parent=1 // pred_region
      _
    $region53: #{tpu_custom_call.1} parent=1 // pred_fallthru
      _
    // Predicated region
    $region54: #{tpu_custom_call.1} parent=1 // pred_check
      _
    $region55: #{tpu_custom_call.1} parent=1 // pred_check_branch
      %79 = sbr.rel (0) target = $region57
    $region56: #{tpu_custom_call.1} parent=1 // pred_region
      %81 = dma.done [#allocation3], 16
    $region57: #{tpu_custom_call.1} parent=1 // pred_fallthru
      _
    // Predicated region
    $region58: #{tpu_custom_call.1} parent=1 // pred_check
      _
    $region59: #{tpu_custom_call.1} parent=1 // pred_check_branch
      %83 = sbr.rel (0) target = $region61
    $region60: #{tpu_custom_call.1} parent=1 // pred_region
      %85 = dma.done [#allocation6], 256
    $region61: #{tpu_custom_call.1} parent=1 // pred_fallthru
      _
    // Predicated region
    $region62: #{tpu_custom_call.1} parent=1 // pred_check
      _
    $region63: #{tpu_custom_call.1} parent=1 // pred_check_branch
      %87 = sbr.rel (0) target = $region65
    $region64: #{tpu_custom_call.1} parent=1 // pred_region
      %89 = dma.done [#allocation6], 256
    $region65: #{tpu_custom_call.1} parent=1 // pred_fallthru
      _
    %v91 = vld [vmem:[%s0] sm:$0xff]
    %v92 = vld [vmem:[%s0 + $0x8] sm:$0xff]
    %v93 = vld [vmem:[%s0 + $0x10] sm:$0xff]
    %v94 = vld [vmem:[%s0 + $0x18] sm:$0xff]
    %v95 = vld [vmem:[%s0 + $0x20] sm:$0xff]
    %v96 = vld [vmem:[%s0 + $0x28] sm:$0xff]
    %v97 = vld [vmem:[%s0 + $0x30] sm:$0xff]
    %v98 = vld [vmem:[%s0 + $0x38] sm:$0xff]
    %99 = vxpose.xlu0.b32.start [1/16] %v91, 128
    %100 = vxpose.xlu0.b32.cont [2/16] %v92, 128
    %101 = vxpose.xlu0.b32.cont [3/16] %v93, 128
    %102 = vxpose.xlu0.b32.cont [4/16] %v94, 128
    %103 = vxpose.xlu0.b32.cont [5/16] 0.0, 128
    %104 = vxpose.xlu0.b32.cont [6/16] 0.0, 128
    %105 = vxpose.xlu0.b32.cont [7/16] 0.0, 128
    %106 = vxpose.xlu0.b32.cont [8/16] 0.0, 128
    %107 = vxpose.xlu0.b32.cont [9/16] 0.0, 128
    %108 = vxpose.xlu0.b32.cont [10/16] 0.0, 128
    %109 = vxpose.xlu0.b32.cont [11/16] 0.0, 128
    %110 = vxpose.xlu0.b32.cont [12/16] 0.0, 128
    %111 = vxpose.xlu0.b32.cont [13/16] 0.0, 128
    %112 = vxpose.xlu0.b32.cont [14/16] 0.0, 128
    %113 = vxpose.xlu0.b32.cont [15/16] 0.0, 128
    %114 = vxpose.xlu0.b32.end [16/16] 0.0, 128
    %v115 = vpop.trf.xlu0
    %v116 = vpop.trf.xlu0
    %v117 = vpop.trf.xlu0
    %v118 = vpop.trf.xlu0
    %v119 = vpop.trf.xlu0
    %v120 = vpop.trf.xlu0
    %v121 = vpop.trf.xlu0
    %v122 = vpop.trf.xlu0
    %v123 = vpop.trf.xlu0
    %v124 = vpop.trf.xlu0
    %v125 = vpop.trf.xlu0
    %v126 = vpop.trf.xlu0
    %v127 = vpop.trf.xlu0
    %v128 = vpop.trf.xlu0
    %v129 = vpop.trf.xlu0
    %v130 = vpop.trf.xlu0
    %131 = vxpose.xlu0.b32.start [1/16] %v95, 128
    %132 = vxpose.xlu0.b32.cont [2/16] %v96, 128
    %133 = vxpose.xlu0.b32.cont [3/16] %v97, 128
    %134 = vxpose.xlu0.b32.cont [4/16] %v98, 128
    %135 = vxpose.xlu0.b32.cont [5/16] 0.0, 128
    %136 = vxpose.xlu0.b32.cont [6/16] 0.0, 128
    %137 = vxpose.xlu0.b32.cont [7/16] 0.0, 128
    %138 = vxpose.xlu0.b32.cont [8/16] 0.0, 128
    %139 = vxpose.xlu0.b32.cont [9/16] 0.0, 128
    %140 = vxpose.xlu0.b32.cont [10/16] 0.0, 128
    %141 = vxpose.xlu0.b32.cont [11/16] 0.0, 128
    %142 = vxpose.xlu0.b32.cont [12/16] 0.0, 128
    %143 = vxpose.xlu0.b32.cont [13/16] 0.0, 128
    %144 = vxpose.xlu0.b32.cont [14/16] 0.0, 128
    %145 = vxpose.xlu0.b32.cont [15/16] 0.0, 128
    %146 = vxpose.xlu0.b32.end [16/16] 0.0, 128
    %v147 = vpop.trf.xlu0
    %v148 = vpop.trf.xlu0
    %v149 = vpop.trf.xlu0
    %v150 = vpop.trf.xlu0
    %v151 = vpop.trf.xlu0
    %v152 = vpop.trf.xlu0
    %v153 = vpop.trf.xlu0
    %v154 = vpop.trf.xlu0
    %v155 = vpop.trf.xlu0
    %v156 = vpop.trf.xlu0
    %v157 = vpop.trf.xlu0
    %v158 = vpop.trf.xlu0
    %v159 = vpop.trf.xlu0
    %v160 = vpop.trf.xlu0
    %v161 = vpop.trf.xlu0
    %v162 = vpop.trf.xlu0
    %v163 = vld [vmem:[#allocation2] sm:$0x1]
    %v164 = vld [vmem:[%s2] sm:$0x1]
    %vm165 = vcmask 261120
    %v166 = vsel %vm165, %v115, 0.0
    %167 = vadd.xlane.f32.xlu0 %v166
    %v168 = vpop.xlane.xlu0 %167
    %v169 = vsel %vm165, %v116, 0.0
    %170 = vadd.xlane.f32.xlu0 %v169
    %v171 = vpop.xlane.xlu0 %170
    %v172 = vsel %vm165, %v117, 0.0
    %173 = vadd.xlane.f32.xlu0 %v172
    %v174 = vpop.xlane.xlu0 %173
    %v175 = vsel %vm165, %v118, 0.0
    %176 = vadd.xlane.f32.xlu0 %v175
    %v177 = vpop.xlane.xlu0 %176
    %v178 = vsel %vm165, %v119, 0.0
    %179 = vadd.xlane.f32.xlu0 %v178
    %v180 = vpop.xlane.xlu0 %179
    %v181 = vsel %vm165, %v120, 0.0
    %182 = vadd.xlane.f32.xlu0 %v181
    %v183 = vpop.xlane.xlu0 %182
    %v184 = vsel %vm165, %v121, 0.0
    %185 = vadd.xlane.f32.xlu0 %v184
    %v186 = vpop.xlane.xlu0 %185
    %v187 = vsel %vm165, %v122, 0.0
    %188 = vadd.xlane.f32.xlu0 %v187
    %v189 = vpop.xlane.xlu0 %188
    %v190 = vsel %vm165, %v147, 0.0
    %191 = vadd.xlane.f32.xlu0 %v190
    %v192 = vpop.xlane.xlu0 %191
    %v193 = vsel %vm165, %v148, 0.0
    %194 = vadd.xlane.f32.xlu0 %v193
    %v195 = vpop.xlane.xlu0 %194
    %v196 = vsel %vm165, %v149, 0.0
    %197 = vadd.xlane.f32.xlu0 %v196
    %v198 = vpop.xlane.xlu0 %197
    %v199 = vsel %vm165, %v150, 0.0
    %200 = vadd.xlane.f32.xlu0 %v199
    %v201 = vpop.xlane.xlu0 %200
    %v202 = vsel %vm165, %v151, 0.0
    %203 = vadd.xlane.f32.xlu0 %v202
    %v204 = vpop.xlane.xlu0 %203
    %v205 = vsel %vm165, %v152, 0.0
    %206 = vadd.xlane.f32.xlu0 %v205
    %v207 = vpop.xlane.xlu0 %206
    %v208 = vsel %vm165, %v153, 0.0
    %209 = vadd.xlane.f32.xlu0 %v208
    %v210 = vpop.xlane.xlu0 %209
    %v211 = vsel %vm165, %v154, 0.0
    %212 = vadd.xlane.f32.xlu0 %v211
    %v213 = vpop.xlane.xlu0 %212
    %v214 = vrcp.pop 32.0
    %v215 = vmul.f32 32.0, %v214
    %v216 = vsub.f32 1.0, %v215
    %v217 = vmul.f32 %v214, %v216
    %v218 = vadd.f32 %v214, %v217
    %vm219 = vweird.f32 %v214
    %v220 = vsel %vm219, %v214, %v218
    %v221 = vmul.f32 %v168, %v220
    %v222 = vmul.f32 %v171, %v220
    %v223 = vmul.f32 %v174, %v220
    %v224 = vmul.f32 %v177, %v220
    %v225 = vmul.f32 %v180, %v220
    %v226 = vmul.f32 %v183, %v220
    %v227 = vmul.f32 %v186, %v220
    %v228 = vmul.f32 %v189, %v220
    %v229 = vmul.f32 %v192, %v220
    %v230 = vmul.f32 %v195, %v220
    %v231 = vmul.f32 %v198, %v220
    %v232 = vmul.f32 %v201, %v220
    %v233 = vmul.f32 %v204, %v220
    %v234 = vmul.f32 %v207, %v220
    %v235 = vmul.f32 %v210, %v220
    %v236 = vmul.f32 %v213, %v220
    %v237 = vsub.f32 %v115, %v221
    %v238 = vsub.f32 %v116, %v222
    %v239 = vsub.f32 %v117, %v223
    %v240 = vsub.f32 %v118, %v224
    %v241 = vsub.f32 %v119, %v225
    %v242 = vsub.f32 %v120, %v226
    %v243 = vsub.f32 %v121, %v227
    %v244 = vsub.f32 %v122, %v228
    %v245 = vsub.f32 %v147, %v229
    %v246 = vsub.f32 %v148, %v230
    %v247 = vsub.f32 %v149, %v231
    %v248 = vsub.f32 %v150, %v232
    %v249 = vsub.f32 %v151, %v233
    %v250 = vsub.f32 %v152, %v234
    %v251 = vsub.f32 %v153, %v235
    %v252 = vsub.f32 %v154, %v236
    %v253 = vmul.f32 %v237, %v237
    %v254 = vmul.f32 %v238, %v238
    %v255 = vmul.f32 %v239, %v239
    %v256 = vmul.f32 %v240, %v240
    %v257 = vmul.f32 %v241, %v241
    %v258 = vmul.f32 %v242, %v242
    %v259 = vmul.f32 %v243, %v243
    %v260 = vmul.f32 %v244, %v244
    %v261 = vmul.f32 %v245, %v245
    %v262 = vmul.f32 %v246, %v246
    %v263 = vmul.f32 %v247, %v247
    %v264 = vmul.f32 %v248, %v248
    %v265 = vmul.f32 %v249, %v249
    %v266 = vmul.f32 %v250, %v250
    %v267 = vmul.f32 %v251, %v251
    %v268 = vmul.f32 %v252, %v252
    %v269 = vsel %vm165, %v253, 0.0
    %270 = vadd.xlane.f32.xlu0 %v269
    %v271 = vpop.xlane.xlu0 %270
    %v272 = vsel %vm165, %v254, 0.0
    %273 = vadd.xlane.f32.xlu0 %v272
    %v274 = vpop.xlane.xlu0 %273
    %v275 = vsel %vm165, %v255, 0.0
    %276 = vadd.xlane.f32.xlu0 %v275
    %v277 = vpop.xlane.xlu0 %276
    %v278 = vsel %vm165, %v256, 0.0
    %279 = vadd.xlane.f32.xlu0 %v278
    %v280 = vpop.xlane.xlu0 %279
    %v281 = vsel %vm165, %v257, 0.0
    %282 = vadd.xlane.f32.xlu0 %v281
    %v283 = vpop.xlane.xlu0 %282
    %v284 = vsel %vm165, %v258, 0.0
    %285 = vadd.xlane.f32.xlu0 %v284
    %v286 = vpop.xlane.xlu0 %285
    %v287 = vsel %vm165, %v259, 0.0
    %288 = vadd.xlane.f32.xlu0 %v287
    %v289 = vpop.xlane.xlu0 %288
    %v290 = vsel %vm165, %v260, 0.0
    %291 = vadd.xlane.f32.xlu0 %v290
    %v292 = vpop.xlane.xlu0 %291
    %v293 = vsel %vm165, %v261, 0.0
    %294 = vadd.xlane.f32.xlu0 %v293
    %v295 = vpop.xlane.xlu0 %294
    %v296 = vsel %vm165, %v262, 0.0
    %297 = vadd.xlane.f32.xlu0 %v296
    %v298 = vpop.xlane.xlu0 %297
    %v299 = vsel %vm165, %v263, 0.0
    %300 = vadd.xlane.f32.xlu0 %v299
    %v301 = vpop.xlane.xlu0 %300
    %v302 = vsel %vm165, %v264, 0.0
    %303 = vadd.xlane.f32.xlu0 %v302
    %v304 = vpop.xlane.xlu0 %303
    %v305 = vsel %vm165, %v265, 0.0
    %306 = vadd.xlane.f32.xlu0 %v305
    %v307 = vpop.xlane.xlu0 %306
    %v308 = vsel %vm165, %v266, 0.0
    %309 = vadd.xlane.f32.xlu0 %v308
    %v310 = vpop.xlane.xlu0 %309
    %v311 = vsel %vm165, %v267, 0.0
    %312 = vadd.xlane.f32.xlu0 %v311
    %v313 = vpop.xlane.xlu0 %312
    %v314 = vsel %vm165, %v268, 0.0
    %315 = vadd.xlane.f32.xlu0 %v314
    %v316 = vpop.xlane.xlu0 %315
    %v317 = vmul.f32 %v271, %v220
    %v318 = vmul.f32 %v274, %v220
    %v319 = vmul.f32 %v277, %v220
    %v320 = vmul.f32 %v280, %v220
    %v321 = vmul.f32 %v283, %v220
    %v322 = vmul.f32 %v286, %v220
    %v323 = vmul.f32 %v289, %v220
    %v324 = vmul.f32 %v292, %v220
    %v325 = vmul.f32 %v295, %v220
    %v326 = vmul.f32 %v298, %v220
    %v327 = vmul.f32 %v301, %v220
    %v328 = vmul.f32 %v304, %v220
    %v329 = vmul.f32 %v307, %v220
    %v330 = vmul.f32 %v310, %v220
    %v331 = vmul.f32 %v313, %v220
    %v332 = vmul.f32 %v316, %v220
    %v333 = vadd.f32 %v317, 1e-05
    %v334 = vadd.f32 %v318, 1e-05
    %v335 = vadd.f32 %v319, 1e-05
    %v336 = vadd.f32 %v320, 1e-05
    %v337 = vadd.f32 %v321, 1e-05
    %v338 = vadd.f32 %v322, 1e-05
    %v339 = vadd.f32 %v323, 1e-05
    %v340 = vadd.f32 %v324, 1e-05
    %v341 = vadd.f32 %v325, 1e-05
    %v342 = vadd.f32 %v326, 1e-05
    %v343 = vadd.f32 %v327, 1e-05
    %v344 = vadd.f32 %v328, 1e-05
    %v345 = vadd.f32 %v329, 1e-05
    %v346 = vadd.f32 %v330, 1e-05
    %v347 = vadd.f32 %v331, 1e-05
    %v348 = vadd.f32 %v332, 1e-05
    %v349 = vrsqrt.pop %v333
    %v350 = vmul.f32 %v349, %v333
    %v351 = vmul.f32 %v350, %v349
    %v352 = vmul.f32 0.5, %v351
    %v353 = vsub.f32 1.5, %v352
    %v354 = vmul.f32 %v349, %v353
    %vm355 = vweird.f32 %v333
    %vm356 = vweird.f32 %v349
    %vm357 = vmor %vm355, %vm356
    %v358 = vsel %vm357, %v349, %v354
    %v359 = vrsqrt.pop %v334
    %v360 = vmul.f32 %v359, %v334
    %v361 = vmul.f32 %v360, %v359
    %v362 = vmul.f32 0.5, %v361
    %v363 = vsub.f32 1.5, %v362
    %v364 = vmul.f32 %v359, %v363
    %vm365 = vweird.f32 %v334
    %vm366 = vweird.f32 %v359
    %vm367 = vmor %vm365, %vm366
    %v368 = vsel %vm367, %v359, %v364
    %v369 = vrsqrt.pop %v335
    %v370 = vmul.f32 %v369, %v335
    %v371 = vmul.f32 %v370, %v369
    %v372 = vmul.f32 0.5, %v371
    %v373 = vsub.f32 1.5, %v372
    %v374 = vmul.f32 %v369, %v373
    %vm375 = vweird.f32 %v335
    %vm376 = vweird.f32 %v369
    %vm377 = vmor %vm375, %vm376
    %v378 = vsel %vm377, %v369, %v374
    %v379 = vrsqrt.pop %v336
    %v380 = vmul.f32 %v379, %v336
    %v381 = vmul.f32 %v380, %v379
    %v382 = vmul.f32 0.5, %v381
    %v383 = vsub.f32 1.5, %v382
    %v384 = vmul.f32 %v379, %v383
    %vm385 = vweird.f32 %v336
    %vm386 = vweird.f32 %v379
    %vm387 = vmor %vm385, %vm386
    %v388 = vsel %vm387, %v379, %v384
    %v389 = vrsqrt.pop %v337
    %v390 = vmul.f32 %v389, %v337
    %v391 = vmul.f32 %v390, %v389
    %v392 = vmul.f32 0.5, %v391
    %v393 = vsub.f32 1.5, %v392
    %v394 = vmul.f32 %v389, %v393
    %vm395 = vweird.f32 %v337
    %vm396 = vweird.f32 %v389
    %vm397 = vmor %vm395, %vm396
    %v398 = vsel %vm397, %v389, %v394
    %v399 = vrsqrt.pop %v338
    %v400 = vmul.f32 %v399, %v338
    %v401 = vmul.f32 %v400, %v399
    %v402 = vmul.f32 0.5, %v401
    %v403 = vsub.f32 1.5, %v402
    %v404 = vmul.f32 %v399, %v403
    %vm405 = vweird.f32 %v338
    %vm406 = vweird.f32 %v399
    %vm407 = vmor %vm405, %vm406
    %v408 = vsel %vm407, %v399, %v404
    %v409 = vrsqrt.pop %v339
    %v410 = vmul.f32 %v409, %v339
    %v411 = vmul.f32 %v410, %v409
    %v412 = vmul.f32 0.5, %v411
    %v413 = vsub.f32 1.5, %v412
    %v414 = vmul.f32 %v409, %v413
    %vm415 = vweird.f32 %v339
    %vm416 = vweird.f32 %v409
    %vm417 = vmor %vm415, %vm416
    %v418 = vsel %vm417, %v409, %v414
    %v419 = vrsqrt.pop %v340
    %v420 = vmul.f32 %v419, %v340
    %v421 = vmul.f32 %v420, %v419
    %v422 = vmul.f32 0.5, %v421
    %v423 = vsub.f32 1.5, %v422
    %v424 = vmul.f32 %v419, %v423
    %vm425 = vweird.f32 %v340
    %vm426 = vweird.f32 %v419
    %vm427 = vmor %vm425, %vm426
    %v428 = vsel %vm427, %v419, %v424
    %v429 = vrsqrt.pop %v341
    %v430 = vmul.f32 %v429, %v341
    %v431 = vmul.f32 %v430, %v429
    %v432 = vmul.f32 0.5, %v431
    %v433 = vsub.f32 1.5, %v432
    %v434 = vmul.f32 %v429, %v433
    %vm435 = vweird.f32 %v341
    %vm436 = vweird.f32 %v429
    %vm437 = vmor %vm435, %vm436
    %v438 = vsel %vm437, %v429, %v434
    %v439 = vrsqrt.pop %v342
    %v440 = vmul.f32 %v439, %v342
    %v441 = vmul.f32 %v440, %v439
    %v442 = vmul.f32 0.5, %v441
    %v443 = vsub.f32 1.5, %v442
    %v444 = vmul.f32 %v439, %v443
    %vm445 = vweird.f32 %v342
    %vm446 = vweird.f32 %v439
    %vm447 = vmor %vm445, %vm446
    %v448 = vsel %vm447, %v439, %v444
    %v449 = vrsqrt.pop %v343
    %v450 = vmul.f32 %v449, %v343
    %v451 = vmul.f32 %v450, %v449
    %v452 = vmul.f32 0.5, %v451
    %v453 = vsub.f32 1.5, %v452
    %v454 = vmul.f32 %v449, %v453
    %vm455 = vweird.f32 %v343
    %vm456 = vweird.f32 %v449
    %vm457 = vmor %vm455, %vm456
    %v458 = vsel %vm457, %v449, %v454
    %v459 = vrsqrt.pop %v344
    %v460 = vmul.f32 %v459, %v344
    %v461 = vmul.f32 %v460, %v459
    %v462 = vmul.f32 0.5, %v461
    %v463 = vsub.f32 1.5, %v462
    %v464 = vmul.f32 %v459, %v463
    %vm465 = vweird.f32 %v344
    %vm466 = vweird.f32 %v459
    %vm467 = vmor %vm465, %vm466
    %v468 = vsel %vm467, %v459, %v464
    %v469 = vrsqrt.pop %v345
    %v470 = vmul.f32 %v469, %v345
    %v471 = vmul.f32 %v470, %v469
    %v472 = vmul.f32 0.5, %v471
    %v473 = vsub.f32 1.5, %v472
    %v474 = vmul.f32 %v469, %v473
    %vm475 = vweird.f32 %v345
    %vm476 = vweird.f32 %v469
    %vm477 = vmor %vm475, %vm476
    %v478 = vsel %vm477, %v469, %v474
    %v479 = vrsqrt.pop %v346
    %v480 = vmul.f32 %v479, %v346
    %v481 = vmul.f32 %v480, %v479
    %v482 = vmul.f32 0.5, %v481
    %v483 = vsub.f32 1.5, %v482
    %v484 = vmul.f32 %v479, %v483
    %vm485 = vweird.f32 %v346
    %vm486 = vweird.f32 %v479
    %vm487 = vmor %vm485, %vm486
    %v488 = vsel %vm487, %v479, %v484
    %v489 = vrsqrt.pop %v347
    %v490 = vmul.f32 %v489, %v347
    %v491 = vmul.f32 %v490, %v489
    %v492 = vmul.f32 0.5, %v491
    %v493 = vsub.f32 1.5, %v492
    %v494 = vmul.f32 %v489, %v493
    %vm495 = vweird.f32 %v347
    %vm496 = vweird.f32 %v489
    %vm497 = vmor %vm495, %vm496
    %v498 = vsel %vm497, %v489, %v494
    %v499 = vrsqrt.pop %v348
    %v500 = vmul.f32 %v499, %v348
    %v501 = vmul.f32 %v500, %v499
    %v502 = vmul.f32 0.5, %v501
    %v503 = vsub.f32 1.5, %v502
    %v504 = vmul.f32 %v499, %v503
    %vm505 = vweird.f32 %v348
    %vm506 = vweird.f32 %v499
    %vm507 = vmor %vm505, %vm506
    %v508 = vsel %vm507, %v499, %v504
    %v509 = vmul.f32 %v237, %v358
    %v510 = vmul.f32 %v238, %v368
    %v511 = vmul.f32 %v239, %v378
    %v512 = vmul.f32 %v240, %v388
    %v513 = vmul.f32 %v241, %v398
    %v514 = vmul.f32 %v242, %v408
    %v515 = vmul.f32 %v243, %v418
    %v516 = vmul.f32 %v244, %v428
    %v517 = vmul.f32 %v245, %v438
    %v518 = vmul.f32 %v246, %v448
    %v519 = vmul.f32 %v247, %v458
    %v520 = vmul.f32 %v248, %v468
    %v521 = vmul.f32 %v249, %v478
    %v522 = vmul.f32 %v250, %v488
    %v523 = vmul.f32 %v251, %v498
    %v524 = vmul.f32 %v252, %v508
    %v526 = vperm.slane %v163, 0
    %v528 = vmul.f32 %v509, %v526
    %v529 = vmul.f32 %v510, %v526
    %v530 = vmul.f32 %v511, %v526
    %v531 = vmul.f32 %v512, %v526
    %v532 = vmul.f32 %v513, %v526
    %v533 = vmul.f32 %v514, %v526
    %v534 = vmul.f32 %v515, %v526
    %v535 = vmul.f32 %v516, %v526
    %v536 = vmul.f32 %v517, %v526
    %v537 = vmul.f32 %v518, %v526
    %v538 = vmul.f32 %v519, %v526
    %v539 = vmul.f32 %v520, %v526
    %v540 = vmul.f32 %v521, %v526
    %v541 = vmul.f32 %v522, %v526
    %v542 = vmul.f32 %v523, %v526
    %v543 = vmul.f32 %v524, %v526
    %v545 = vperm.slane %v164, 0
    %v547 = vadd.f32 %v528, %v545
    %v548 = vadd.f32 %v529, %v545
    %v549 = vadd.f32 %v530, %v545
    %v550 = vadd.f32 %v531, %v545
    %v551 = vadd.f32 %v532, %v545
    %v552 = vadd.f32 %v533, %v545
    %v553 = vadd.f32 %v534, %v545
    %v554 = vadd.f32 %v535, %v545
    %v555 = vadd.f32 %v536, %v545
    %v556 = vadd.f32 %v537, %v545
    %v557 = vadd.f32 %v538, %v545
    %v558 = vadd.f32 %v539, %v545
    %v559 = vadd.f32 %v540, %v545
    %v560 = vadd.f32 %v541, %v545
    %v561 = vadd.f32 %v542, %v545
    %v562 = vadd.f32 %v543, %v545
    %v563 = vpack.c.bf16 %v548, %v547
    %v564 = vpack.c.bf16 %v550, %v549
    %v565 = vpack.c.bf16 %v552, %v551
    %v566 = vpack.c.bf16 %v554, %v553
    %v567 = vpack.c.bf16 %v556, %v555
    %v568 = vpack.c.bf16 %v558, %v557
    %v569 = vpack.c.bf16 %v560, %v559
    %v570 = vpack.c.bf16 %v562, %v561
    %v571 = vld [vmem:[%s3] sm:$0xf]
    %v572 = vld [vmem:[%s3 + $0x4] sm:$0xf]
    %v573 = vld [vmem:[%s3 + $0x8] sm:$0xf]
    %v574 = vld [vmem:[%s3 + $0xc] sm:$0xf]
    %v575 = vld [vmem:[%s4] sm:$0x1]
    %v577 = vperm.slane %v575, 0
    %v583 = vunpack.c.l.b16 %v571
    %v584 = vunpack.c.l.b16 %v572
    %v585 = vunpack.c.l.b16 %v573
    %v586 = vunpack.c.l.b16 %v574
    %v587 = vpack.c.b16 %v584, %v583
    %v588 = vpack.c.b16 %v586, %v585
    %v592 = vsel %vm165, %v563, 0
    %v595 = vsel %vm165, %v564, 0
    %v598 = vsel %vm165, %v565, 0
    %v601 = vsel %vm165, %v566, 0
    %v604 = vsel %vm165, %v567, 0
    %v607 = vsel %vm165, %v568, 0
    %v610 = vsel %vm165, %v569, 0
    %v613 = vsel %vm165, %v570, 0
    %615 = vmatpush.bf16.msra.mxu0 0
    %616 = vmatpush.bf16.msra.mxu0 0
    %617 = vmatpush.bf16.msra.mxu0 0
    %618 = vmatpush.bf16.msra.mxu0 0
    %619 = vmatpush.bf16.msra.mxu0 0
    %620 = vmatpush.bf16.msra.mxu0 0
    %621 = vmatpush.bf16.msra.mxu0 %v588
    %622 = vmatpush.bf16.msra.mxu0 %v587
    %623 = vmatmul.bf16.gmra.mxu0 %v592
    %v624 = vpop.f32.mrf.mxu0
    %v625 = vadd.f32 %v577, %v624
    %v626 = vpop.f32.mrf.mxu0
    %v627 = vadd.f32 %v577, %v626
    %628 = vmatmul.bf16.gmra.mxu0 %v595
    %v629 = vpop.f32.mrf.mxu0
    %v630 = vadd.f32 %v577, %v629
    %v631 = vpop.f32.mrf.mxu0
    %v632 = vadd.f32 %v577, %v631
    %633 = vmatmul.bf16.gmra.mxu0 %v598
    %v634 = vpop.f32.mrf.mxu0
    %v635 = vadd.f32 %v577, %v634
    %v636 = vpop.f32.mrf.mxu0
    %v637 = vadd.f32 %v577, %v636
    %638 = vmatmul.bf16.gmra.mxu0 %v601
    %v639 = vpop.f32.mrf.mxu0
    %v640 = vadd.f32 %v577, %v639
    %v641 = vpop.f32.mrf.mxu0
    %v642 = vadd.f32 %v577, %v641
    %643 = vmatmul.bf16.gmra.mxu0 %v604
    %v644 = vpop.f32.mrf.mxu0
    %v645 = vadd.f32 %v577, %v644
    %v646 = vpop.f32.mrf.mxu0
    %v647 = vadd.f32 %v577, %v646
    %648 = vmatmul.bf16.gmra.mxu0 %v607
    %v649 = vpop.f32.mrf.mxu0
    %v650 = vadd.f32 %v577, %v649
    %v651 = vpop.f32.mrf.mxu0
    %v652 = vadd.f32 %v577, %v651
    %653 = vmatmul.bf16.gmra.mxu0 %v610
    %v654 = vpop.f32.mrf.mxu0
    %v655 = vadd.f32 %v577, %v654
    %v656 = vpop.f32.mrf.mxu0
    %v657 = vadd.f32 %v577, %v656
    %658 = vmatmul.bf16.gmra.mxu0 %v613
    %v659 = vpop.f32.mrf.mxu0
    %v660 = vadd.f32 %v577, %v659
    %v661 = vpop.f32.mrf.mxu0
    %v662 = vadd.f32 %v577, %v661
    %663 = vdwg.mxu0
    %v664 = vpack.c.bf16 %v625, %v625
    %v665 = vpack.c.bf16 %v627, %v627
    %v666 = vpack.c.bf16 %v630, %v630
    %v667 = vpack.c.bf16 %v632, %v632
    %v668 = vpack.c.bf16 %v635, %v635
    %v669 = vpack.c.bf16 %v637, %v637
    %v670 = vpack.c.bf16 %v640, %v640
    %v671 = vpack.c.bf16 %v642, %v642
    %v672 = vpack.c.bf16 %v645, %v645
    %v673 = vpack.c.bf16 %v647, %v647
    %v674 = vpack.c.bf16 %v650, %v650
    %v675 = vpack.c.bf16 %v652, %v652
    %v676 = vpack.c.bf16 %v655, %v655
    %v677 = vpack.c.bf16 %v657, %v657
    %v678 = vpack.c.bf16 %v660, %v660
    %v679 = vpack.c.bf16 %v662, %v662
    %v696 = vunpack.c.l.b16 %v664
    %v697 = vunpack.c.l.b16 %v665
    %v698 = vunpack.c.l.b16 %v666
    %v699 = vunpack.c.l.b16 %v667
    %v700 = vunpack.c.l.b16 %v668
    %v701 = vunpack.c.l.b16 %v669
    %v702 = vunpack.c.l.b16 %v670
    %v703 = vunpack.c.l.b16 %v671
    %v704 = vunpack.c.l.b16 %v672
    %v705 = vunpack.c.l.b16 %v673
    %v706 = vunpack.c.l.b16 %v674
    %v707 = vunpack.c.l.b16 %v675
    %v708 = vunpack.c.l.b16 %v676
    %v709 = vunpack.c.l.b16 %v677
    %v710 = vunpack.c.l.b16 %v678
    %v711 = vunpack.c.l.b16 %v679
    %v712 = vpack.c.b16 %v697, %v696
    %v713 = vpack.c.b16 %v699, %v698
    %v714 = vpack.c.b16 %v701, %v700
    %v715 = vpack.c.b16 %v703, %v702
    %v716 = vpack.c.b16 %v705, %v704
    %v717 = vpack.c.b16 %v707, %v706
    %v718 = vpack.c.b16 %v709, %v708
    %v719 = vpack.c.b16 %v711, %v710
    %728 = vxpose.xlu0.c.b16.start [1/8] %v712, 128
    %729 = vxpose.xlu0.c.b16.cont [2/8] %v713, 128
    %730 = vxpose.xlu0.c.b16.cont [3/8] %v714, 128
    %731 = vxpose.xlu0.c.b16.cont [4/8] %v715, 128
    %732 = vxpose.xlu0.c.b16.cont [5/8] 0, 128
    %733 = vxpose.xlu0.c.b16.cont [6/8] 0, 128
    %734 = vxpose.xlu0.c.b16.cont [7/8] 0, 128
    %735 = vxpose.xlu0.c.b16.end [8/8] 0, 128
    %v736 = vpop.trf.xlu0
    %v737 = vpop.trf.xlu0
    %v738 = vpop.trf.xlu0
    %v739 = vpop.trf.xlu0
    %v740 = vpop.trf.xlu0
    %v741 = vpop.trf.xlu0
    %v742 = vpop.trf.xlu0
    %v743 = vpop.trf.xlu0
    %744 = vxpose.xlu0.c.b16.start [1/8] %v716, 128
    %745 = vxpose.xlu0.c.b16.cont [2/8] %v717, 128
    %746 = vxpose.xlu0.c.b16.cont [3/8] %v718, 128
    %747 = vxpose.xlu0.c.b16.cont [4/8] %v719, 128
    %748 = vxpose.xlu0.c.b16.cont [5/8] 0, 128
    %749 = vxpose.xlu0.c.b16.cont [6/8] 0, 128
    %750 = vxpose.xlu0.c.b16.cont [7/8] 0, 128
    %751 = vxpose.xlu0.c.b16.end [8/8] 0, 128
    %v752 = vpop.trf.xlu0
    %v753 = vpop.trf.xlu0
    %v754 = vpop.trf.xlu0
    %v755 = vpop.trf.xlu0
    %v756 = vpop.trf.xlu0
    %v757 = vpop.trf.xlu0
    %v758 = vpop.trf.xlu0
    %v759 = vpop.trf.xlu0
    %v764 = vunpack.c.l.b16 %v736
    %v765 = vunpack.c.h.b16 %v736
    %v766 = vunpack.c.l.b16 %v737
    %v767 = vunpack.c.h.b16 %v737
    %v768 = vunpack.c.l.b16 %v752
    %v769 = vunpack.c.h.b16 %v752
    %v770 = vunpack.c.l.b16 %v753
    %v771 = vunpack.c.h.b16 %v753
    %v772 = vpack.c.b16 %v764, %v764
    %v773 = vpack.c.b16 %v765, %v765
    %v774 = vpack.c.b16 %v766, %v766
    %v775 = vpack.c.b16 %v767, %v767
    %v776 = vpack.c.b16 %v768, %v768
    %v777 = vpack.c.b16 %v769, %v769
    %v778 = vpack.c.b16 %v770, %v770
    %v779 = vpack.c.b16 %v771, %v771
    %v792 = vunpack.c.l.b16 %v738
    %v793 = vunpack.c.h.b16 %v738
    %v794 = vunpack.c.l.b16 %v739
    %v795 = vunpack.c.h.b16 %v739
    %v796 = vunpack.c.l.b16 %v754
    %v797 = vunpack.c.h.b16 %v754
    %v798 = vunpack.c.l.b16 %v755
    %v799 = vunpack.c.h.b16 %v755
    %v800 = vpack.c.b16 %v792, %v792
    %v801 = vpack.c.b16 %v793, %v793
    %v802 = vpack.c.b16 %v794, %v794
    %v803 = vpack.c.b16 %v795, %v795
    %v804 = vpack.c.b16 %v796, %v796
    %v805 = vpack.c.b16 %v797, %v797
    %v806 = vpack.c.b16 %v798, %v798
    %v807 = vpack.c.b16 %v799, %v799
    %v812 = vunpack.c.l.b16 %v740
    %v813 = vunpack.c.h.b16 %v740
    %v814 = vunpack.c.l.b16 %v741
    %v815 = vunpack.c.h.b16 %v741
    %v816 = vunpack.c.l.b16 %v756
    %v817 = vunpack.c.h.b16 %v756
    %v818 = vunpack.c.l.b16 %v757
    %v819 = vunpack.c.h.b16 %v757
    %v820 = vpack.c.b16 %v812, %v812
    %v821 = vpack.c.b16 %v813, %v813
    %v822 = vpack.c.b16 %v814, %v814
    %v823 = vpack.c.b16 %v815, %v815
    %v824 = vpack.c.b16 %v816, %v816
    %v825 = vpack.c.b16 %v817, %v817
    %v826 = vpack.c.b16 %v818, %v818
    %v827 = vpack.c.b16 %v819, %v819
    %828 = vxpose.xlu0.c.b16.start [1/8] %v772, 128
    %829 = vxpose.xlu0.c.b16.cont [2/8] 0, 128
    %830 = vxpose.xlu0.c.b16.cont [3/8] 0, 128
    %831 = vxpose.xlu0.c.b16.cont [4/8] 0, 128
    %832 = vxpose.xlu0.c.b16.cont [5/8] 0, 128
    %833 = vxpose.xlu0.c.b16.cont [6/8] 0, 128
    %834 = vxpose.xlu0.c.b16.cont [7/8] 0, 128
    %835 = vxpose.xlu0.c.b16.end [8/8] 0, 128
    %v836 = vpop.trf.xlu0
    %v837 = vpop.trf.xlu0
    %v838 = vpop.trf.xlu0
    %v839 = vpop.trf.xlu0
    %v840 = vpop.trf.xlu0
    %v841 = vpop.trf.xlu0
    %v842 = vpop.trf.xlu0
    %v843 = vpop.trf.xlu0
    %844 = vxpose.xlu0.c.b16.start [1/8] %v773, 128
    %845 = vxpose.xlu0.c.b16.cont [2/8] 0, 128
    %846 = vxpose.xlu0.c.b16.cont [3/8] 0, 128
    %847 = vxpose.xlu0.c.b16.cont [4/8] 0, 128
    %848 = vxpose.xlu0.c.b16.cont [5/8] 0, 128
    %849 = vxpose.xlu0.c.b16.cont [6/8] 0, 128
    %850 = vxpose.xlu0.c.b16.cont [7/8] 0, 128
    %851 = vxpose.xlu0.c.b16.end [8/8] 0, 128
    %v852 = vpop.trf.xlu0
    %v853 = vpop.trf.xlu0
    %v854 = vpop.trf.xlu0
    %v855 = vpop.trf.xlu0
    %v856 = vpop.trf.xlu0
    %v857 = vpop.trf.xlu0
    %v858 = vpop.trf.xlu0
    %v859 = vpop.trf.xlu0
    %860 = vxpose.xlu0.c.b16.start [1/8] %v774, 128
    %861 = vxpose.xlu0.c.b16.cont [2/8] 0, 128
    %862 = vxpose.xlu0.c.b16.cont [3/8] 0, 128
    %863 = vxpose.xlu0.c.b16.cont [4/8] 0, 128
    %864 = vxpose.xlu0.c.b16.cont [5/8] 0, 128
    %865 = vxpose.xlu0.c.b16.cont [6/8] 0, 128
    %866 = vxpose.xlu0.c.b16.cont [7/8] 0, 128
    %867 = vxpose.xlu0.c.b16.end [8/8] 0, 128
    %v868 = vpop.trf.xlu0
    %v869 = vpop.trf.xlu0
    %v870 = vpop.trf.xlu0
    %v871 = vpop.trf.xlu0
    %v872 = vpop.trf.xlu0
    %v873 = vpop.trf.xlu0
    %v874 = vpop.trf.xlu0
    %v875 = vpop.trf.xlu0
    %876 = vxpose.xlu0.c.b16.start [1/8] %v775, 128
    %877 = vxpose.xlu0.c.b16.cont [2/8] 0, 128
    %878 = vxpose.xlu0.c.b16.cont [3/8] 0, 128
    %879 = vxpose.xlu0.c.b16.cont [4/8] 0, 128
    %880 = vxpose.xlu0.c.b16.cont [5/8] 0, 128
    %881 = vxpose.xlu0.c.b16.cont [6/8] 0, 128
    %882 = vxpose.xlu0.c.b16.cont [7/8] 0, 128
    %883 = vxpose.xlu0.c.b16.end [8/8] 0, 128
    %v884 = vpop.trf.xlu0
    %v885 = vpop.trf.xlu0
    %v886 = vpop.trf.xlu0
    %v887 = vpop.trf.xlu0
    %v888 = vpop.trf.xlu0
    %v889 = vpop.trf.xlu0
    %v890 = vpop.trf.xlu0
    %v891 = vpop.trf.xlu0
    %892 = vxpose.xlu0.c.b16.start [1/8] %v776, 128
    %893 = vxpose.xlu0.c.b16.cont [2/8] 0, 128
    %894 = vxpose.xlu0.c.b16.cont [3/8] 0, 128
    %895 = vxpose.xlu0.c.b16.cont [4/8] 0, 128
    %896 = vxpose.xlu0.c.b16.cont [5/8] 0, 128
    %897 = vxpose.xlu0.c.b16.cont [6/8] 0, 128
    %898 = vxpose.xlu0.c.b16.cont [7/8] 0, 128
    %899 = vxpose.xlu0.c.b16.end [8/8] 0, 128
    %v900 = vpop.trf.xlu0
    %v901 = vpop.trf.xlu0
    %v902 = vpop.trf.xlu0
    %v903 = vpop.trf.xlu0
    %v904 = vpop.trf.xlu0
    %v905 = vpop.trf.xlu0
    %v906 = vpop.trf.xlu0
    %v907 = vpop.trf.xlu0
    %908 = vxpose.xlu0.c.b16.start [1/8] %v777, 128
    %909 = vxpose.xlu0.c.b16.cont [2/8] 0, 128
    %910 = vxpose.xlu0.c.b16.cont [3/8] 0, 128
    %911 = vxpose.xlu0.c.b16.cont [4/8] 0, 128
    %912 = vxpose.xlu0.c.b16.cont [5/8] 0, 128
    %913 = vxpose.xlu0.c.b16.cont [6/8] 0, 128
    %914 = vxpose.xlu0.c.b16.cont [7/8] 0, 128
    %915 = vxpose.xlu0.c.b16.end [8/8] 0, 128
    %v916 = vpop.trf.xlu0
    %v917 = vpop.trf.xlu0
    %v918 = vpop.trf.xlu0
    %v919 = vpop.trf.xlu0
    %v920 = vpop.trf.xlu0
    %v921 = vpop.trf.xlu0
    %v922 = vpop.trf.xlu0
    %v923 = vpop.trf.xlu0
    %924 = vxpose.xlu0.c.b16.start [1/8] %v778, 128
    %925 = vxpose.xlu0.c.b16.cont [2/8] 0, 128
    %926 = vxpose.xlu0.c.b16.cont [3/8] 0, 128
    %927 = vxpose.xlu0.c.b16.cont [4/8] 0, 128
    %928 = vxpose.xlu0.c.b16.cont [5/8] 0, 128
    %929 = vxpose.xlu0.c.b16.cont [6/8] 0, 128
    %930 = vxpose.xlu0.c.b16.cont [7/8] 0, 128
    %931 = vxpose.xlu0.c.b16.end [8/8] 0, 128
    %v932 = vpop.trf.xlu0
    %v933 = vpop.trf.xlu0
    %v934 = vpop.trf.xlu0
    %v935 = vpop.trf.xlu0
    %v936 = vpop.trf.xlu0
    %v937 = vpop.trf.xlu0
    %v938 = vpop.trf.xlu0
    %v939 = vpop.trf.xlu0
    %940 = vxpose.xlu0.c.b16.start [1/8] %v779, 128
    %941 = vxpose.xlu0.c.b16.cont [2/8] 0, 128
    %942 = vxpose.xlu0.c.b16.cont [3/8] 0, 128
    %943 = vxpose.xlu0.c.b16.cont [4/8] 0, 128
    %944 = vxpose.xlu0.c.b16.cont [5/8] 0, 128
    %945 = vxpose.xlu0.c.b16.cont [6/8] 0, 128
    %946 = vxpose.xlu0.c.b16.cont [7/8] 0, 128
    %947 = vxpose.xlu0.c.b16.end [8/8] 0, 128
    %v948 = vpop.trf.xlu0
    %v949 = vpop.trf.xlu0
    %v950 = vpop.trf.xlu0
    %v951 = vpop.trf.xlu0
    %v952 = vpop.trf.xlu0
    %v953 = vpop.trf.xlu0
    %v954 = vpop.trf.xlu0
    %v955 = vpop.trf.xlu0
    %vm956 = vcmask 64512
    %v958 = vsel %vm956, %v836, 0
    %v961 = vsel %vm956, %v837, 0
    %v964 = vsel %vm956, %v838, 0
    %v967 = vsel %vm956, %v839, 0
    %vm969 = vcmask 1043456
    %v971 = vsel %vm969, %v800, 0
    %973 = vmatpush.bf16.msra.mxu0 0
    %974 = vmatpush.bf16.msra.mxu0 0
    %975 = vmatpush.bf16.msra.mxu0 0
    %976 = vmatpush.bf16.msra.mxu0 0
    %977 = vmatpush.bf16.msra.mxu0 0
    %978 = vmatpush.bf16.msra.mxu0 0
    %979 = vmatpush.bf16.msra.mxu0 0
    %980 = vmatpush.bf16.msra.mxu0 %v971
    %981 = vmatmul.bf16.gmra.mxu0 %v958
    %v982 = vpop.f32.mrf.mxu0
    %v983 = vadd.f32 0.0, %v982
    %v984 = vpop.f32.mrf.mxu0
    %v985 = vadd.f32 0.0, %v984
    %986 = vmatmul.bf16.gmra.mxu0 %v961
    %v987 = vpop.f32.mrf.mxu0
    %v988 = vadd.f32 0.0, %v987
    %v989 = vpop.f32.mrf.mxu0
    %v990 = vadd.f32 0.0, %v989
    %991 = vmatmul.bf16.gmra.mxu0 %v964
    %v992 = vpop.f32.mrf.mxu0
    %v993 = vadd.f32 0.0, %v992
    %v994 = vpop.f32.mrf.mxu0
    %v995 = vadd.f32 0.0, %v994
    %996 = vmatmul.bf16.gmra.mxu0 %v967
    %v997 = vpop.f32.mrf.mxu0
    %v998 = vadd.f32 0.0, %v997
    %v999 = vpop.f32.mrf.mxu0
    %v1000 = vadd.f32 0.0, %v999
    %1001 = vdwg.mxu0
    %v1003 = vsel %vm956, %v852, 0
    %v1006 = vsel %vm956, %v853, 0
    %v1009 = vsel %vm956, %v854, 0
    %v1012 = vsel %vm956, %v855, 0
    %v1015 = vsel %vm969, %v801, 0
    %1017 = vmatpush.bf16.msra.mxu0 0
    %1018 = vmatpush.bf16.msra.mxu0 0
    %1019 = vmatpush.bf16.msra.mxu0 0
    %1020 = vmatpush.bf16.msra.mxu0 0
    %1021 = vmatpush.bf16.msra.mxu0 0
    %1022 = vmatpush.bf16.msra.mxu0 0
    %1023 = vmatpush.bf16.msra.mxu0 0
    %1024 = vmatpush.bf16.msra.mxu0 %v1015
    %1025 = vmatmul.bf16.gmra.mxu0 %v1003
    %v1026 = vpop.f32.mrf.mxu0
    %v1027 = vadd.f32 0.0, %v1026
    %v1028 = vpop.f32.mrf.mxu0
    %v1029 = vadd.f32 0.0, %v1028
    %1030 = vmatmul.bf16.gmra.mxu0 %v1006
    %v1031 = vpop.f32.mrf.mxu0
    %v1032 = vadd.f32 0.0, %v1031
    %v1033 = vpop.f32.mrf.mxu0
    %v1034 = vadd.f32 0.0, %v1033
    %1035 = vmatmul.bf16.gmra.mxu0 %v1009
    %v1036 = vpop.f32.mrf.mxu0
    %v1037 = vadd.f32 0.0, %v1036
    %v1038 = vpop.f32.mrf.mxu0
    %v1039 = vadd.f32 0.0, %v1038
    %1040 = vmatmul.bf16.gmra.mxu0 %v1012
    %v1041 = vpop.f32.mrf.mxu0
    %v1042 = vadd.f32 0.0, %v1041
    %v1043 = vpop.f32.mrf.mxu0
    %v1044 = vadd.f32 0.0, %v1043
    %1045 = vdwg.mxu0
    %v1047 = vsel %vm956, %v868, 0
    %v1050 = vsel %vm956, %v869, 0
    %v1053 = vsel %vm956, %v870, 0
    %v1056 = vsel %vm956, %v871, 0
    %v1059 = vsel %vm969, %v802, 0
    %1061 = vmatpush.bf16.msra.mxu0 0
    %1062 = vmatpush.bf16.msra.mxu0 0
    %1063 = vmatpush.bf16.msra.mxu0 0
    %1064 = vmatpush.bf16.msra.mxu0 0
    %1065 = vmatpush.bf16.msra.mxu0 0
    %1066 = vmatpush.bf16.msra.mxu0 0
    %1067 = vmatpush.bf16.msra.mxu0 0
    %1068 = vmatpush.bf16.msra.mxu0 %v1059
    %1069 = vmatmul.bf16.gmra.mxu0 %v1047
    %v1070 = vpop.f32.mrf.mxu0
    %v1071 = vadd.f32 0.0, %v1070
    %v1072 = vpop.f32.mrf.mxu0
    %v1073 = vadd.f32 0.0, %v1072
    %1074 = vmatmul.bf16.gmra.mxu0 %v1050
    %v1075 = vpop.f32.mrf.mxu0
    %v1076 = vadd.f32 0.0, %v1075
    %v1077 = vpop.f32.mrf.mxu0
    %v1078 = vadd.f32 0.0, %v1077
    %1079 = vmatmul.bf16.gmra.mxu0 %v1053
    %v1080 = vpop.f32.mrf.mxu0
    %v1081 = vadd.f32 0.0, %v1080
    %v1082 = vpop.f32.mrf.mxu0
    %v1083 = vadd.f32 0.0, %v1082
    %1084 = vmatmul.bf16.gmra.mxu0 %v1056
    %v1085 = vpop.f32.mrf.mxu0
    %v1086 = vadd.f32 0.0, %v1085
    %v1087 = vpop.f32.mrf.mxu0
    %v1088 = vadd.f32 0.0, %v1087
    %1089 = vdwg.mxu0
    %v1091 = vsel %vm956, %v884, 0
    %v1094 = vsel %vm956, %v885, 0
    %v1097 = vsel %vm956, %v886, 0
    %v1100 = vsel %vm956, %v887, 0
    %v1103 = vsel %vm969, %v803, 0
    %1105 = vmatpush.bf16.msra.mxu0 0
    %1106 = vmatpush.bf16.msra.mxu0 0
    %1107 = vmatpush.bf16.msra.mxu0 0
    %1108 = vmatpush.bf16.msra.mxu0 0
    %1109 = vmatpush.bf16.msra.mxu0 0
    %1110 = vmatpush.bf16.msra.mxu0 0
    %1111 = vmatpush.bf16.msra.mxu0 0
    %1112 = vmatpush.bf16.msra.mxu0 %v1103
    %1113 = vmatmul.bf16.gmra.mxu0 %v1091
    %v1114 = vpop.f32.mrf.mxu0
    %v1115 = vadd.f32 0.0, %v1114
    %v1116 = vpop.f32.mrf.mxu0
    %v1117 = vadd.f32 0.0, %v1116
    %1118 = vmatmul.bf16.gmra.mxu0 %v1094
    %v1119 = vpop.f32.mrf.mxu0
    %v1120 = vadd.f32 0.0, %v1119
    %v1121 = vpop.f32.mrf.mxu0
    %v1122 = vadd.f32 0.0, %v1121
    %1123 = vmatmul.bf16.gmra.mxu0 %v1097
    %v1124 = vpop.f32.mrf.mxu0
    %v1125 = vadd.f32 0.0, %v1124
    %v1126 = vpop.f32.mrf.mxu0
    %v1127 = vadd.f32 0.0, %v1126
    %1128 = vmatmul.bf16.gmra.mxu0 %v1100
    %v1129 = vpop.f32.mrf.mxu0
    %v1130 = vadd.f32 0.0, %v1129
    %v1131 = vpop.f32.mrf.mxu0
    %v1132 = vadd.f32 0.0, %v1131
    %1133 = vdwg.mxu0
    %v1135 = vsel %vm956, %v900, 0
    %v1138 = vsel %vm956, %v901, 0
    %v1141 = vsel %vm956, %v902, 0
    %v1144 = vsel %vm956, %v903, 0
    %v1147 = vsel %vm969, %v804, 0
    %1149 = vmatpush.bf16.msra.mxu0 0
    %1150 = vmatpush.bf16.msra.mxu0 0
    %1151 = vmatpush.bf16.msra.mxu0 0
    %1152 = vmatpush.bf16.msra.mxu0 0
    %1153 = vmatpush.bf16.msra.mxu0 0
    %1154 = vmatpush.bf16.msra.mxu0 0
    %1155 = vmatpush.bf16.msra.mxu0 0
    %1156 = vmatpush.bf16.msra.mxu0 %v1147
    %1157 = vmatmul.bf16.gmra.mxu0 %v1135
    %v1158 = vpop.f32.mrf.mxu0
    %v1159 = vadd.f32 0.0, %v1158
    %v1160 = vpop.f32.mrf.mxu0
    %v1161 = vadd.f32 0.0, %v1160
    %1162 = vmatmul.bf16.gmra.mxu0 %v1138
    %v1163 = vpop.f32.mrf.mxu0
    %v1164 = vadd.f32 0.0, %v1163
    %v1165 = vpop.f32.mrf.mxu0
    %v1166 = vadd.f32 0.0, %v1165
    %1167 = vmatmul.bf16.gmra.mxu0 %v1141
    %v1168 = vpop.f32.mrf.mxu0
    %v1169 = vadd.f32 0.0, %v1168
    %v1170 = vpop.f32.mrf.mxu0
    %v1171 = vadd.f32 0.0, %v1170
    %1172 = vmatmul.bf16.gmra.mxu0 %v1144
    %v1173 = vpop.f32.mrf.mxu0
    %v1174 = vadd.f32 0.0, %v1173
    %v1175 = vpop.f32.mrf.mxu0
    %v1176 = vadd.f32 0.0, %v1175
    %1177 = vdwg.mxu0
    %v1179 = vsel %vm956, %v916, 0
    %v1182 = vsel %vm956, %v917, 0
    %v1185 = vsel %vm956, %v918, 0
    %v1188 = vsel %vm956, %v919, 0
    %v1191 = vsel %vm969, %v805, 0
    %1193 = vmatpush.bf16.msra.mxu0 0
    %1194 = vmatpush.bf16.msra.mxu0 0
    %1195 = vmatpush.bf16.msra.mxu0 0
    %1196 = vmatpush.bf16.msra.mxu0 0
    %1197 = vmatpush.bf16.msra.mxu0 0
    %1198 = vmatpush.bf16.msra.mxu0 0
    %1199 = vmatpush.bf16.msra.mxu0 0
    %1200 = vmatpush.bf16.msra.mxu0 %v1191
    %1201 = vmatmul.bf16.gmra.mxu0 %v1179
    %v1202 = vpop.f32.mrf.mxu0
    %v1203 = vadd.f32 0.0, %v1202
    %v1204 = vpop.f32.mrf.mxu0
    %v1205 = vadd.f32 0.0, %v1204
    %1206 = vmatmul.bf16.gmra.mxu0 %v1182
    %v1207 = vpop.f32.mrf.mxu0
    %v1208 = vadd.f32 0.0, %v1207
    %v1209 = vpop.f32.mrf.mxu0
    %v1210 = vadd.f32 0.0, %v1209
    %1211 = vmatmul.bf16.gmra.mxu0 %v1185
    %v1212 = vpop.f32.mrf.mxu0
    %v1213 = vadd.f32 0.0, %v1212
    %v1214 = vpop.f32.mrf.mxu0
    %v1215 = vadd.f32 0.0, %v1214
    %1216 = vmatmul.bf16.gmra.mxu0 %v1188
    %v1217 = vpop.f32.mrf.mxu0
    %v1218 = vadd.f32 0.0, %v1217
    %v1219 = vpop.f32.mrf.mxu0
    %v1220 = vadd.f32 0.0, %v1219
    %1221 = vdwg.mxu0
    %v1223 = vsel %vm956, %v932, 0
    %v1226 = vsel %vm956, %v933, 0
    %v1229 = vsel %vm956, %v934, 0
    %v1232 = vsel %vm956, %v935, 0
    %v1235 = vsel %vm969, %v806, 0
    %1237 = vmatpush.bf16.msra.mxu0 0
    %1238 = vmatpush.bf16.msra.mxu0 0
    %1239 = vmatpush.bf16.msra.mxu0 0
    %1240 = vmatpush.bf16.msra.mxu0 0
    %1241 = vmatpush.bf16.msra.mxu0 0
    %1242 = vmatpush.bf16.msra.mxu0 0
    %1243 = vmatpush.bf16.msra.mxu0 0
    %1244 = vmatpush.bf16.msra.mxu0 %v1235
    %1245 = vmatmul.bf16.gmra.mxu0 %v1223
    %v1246 = vpop.f32.mrf.mxu0
    %v1247 = vadd.f32 0.0, %v1246
    %v1248 = vpop.f32.mrf.mxu0
    %v1249 = vadd.f32 0.0, %v1248
    %1250 = vmatmul.bf16.gmra.mxu0 %v1226
    %v1251 = vpop.f32.mrf.mxu0
    %v1252 = vadd.f32 0.0, %v1251
    %v1253 = vpop.f32.mrf.mxu0
    %v1254 = vadd.f32 0.0, %v1253
    %1255 = vmatmul.bf16.gmra.mxu0 %v1229
    %v1256 = vpop.f32.mrf.mxu0
    %v1257 = vadd.f32 0.0, %v1256
    %v1258 = vpop.f32.mrf.mxu0
    %v1259 = vadd.f32 0.0, %v1258
    %1260 = vmatmul.bf16.gmra.mxu0 %v1232
    %v1261 = vpop.f32.mrf.mxu0
    %v1262 = vadd.f32 0.0, %v1261
    %v1263 = vpop.f32.mrf.mxu0
    %v1264 = vadd.f32 0.0, %v1263
    %1265 = vdwg.mxu0
    %v1267 = vsel %vm956, %v948, 0
    %v1270 = vsel %vm956, %v949, 0
    %v1273 = vsel %vm956, %v950, 0
    %v1276 = vsel %vm956, %v951, 0
    %v1279 = vsel %vm969, %v807, 0
    %1281 = vmatpush.bf16.msra.mxu0 0
    %1282 = vmatpush.bf16.msra.mxu0 0
    %1283 = vmatpush.bf16.msra.mxu0 0
    %1284 = vmatpush.bf16.msra.mxu0 0
    %1285 = vmatpush.bf16.msra.mxu0 0
    %1286 = vmatpush.bf16.msra.mxu0 0
    %1287 = vmatpush.bf16.msra.mxu0 0
    %1288 = vmatpush.bf16.msra.mxu0 %v1279
    %1289 = vmatmul.bf16.gmra.mxu0 %v1267
    %v1290 = vpop.f32.mrf.mxu0
    %v1291 = vadd.f32 0.0, %v1290
    %v1292 = vpop.f32.mrf.mxu0
    %v1293 = vadd.f32 0.0, %v1292
    %1294 = vmatmul.bf16.gmra.mxu0 %v1270
    %v1295 = vpop.f32.mrf.mxu0
    %v1296 = vadd.f32 0.0, %v1295
    %v1297 = vpop.f32.mrf.mxu0
    %v1298 = vadd.f32 0.0, %v1297
    %1299 = vmatmul.bf16.gmra.mxu0 %v1273
    %v1300 = vpop.f32.mrf.mxu0
    %v1301 = vadd.f32 0.0, %v1300
    %v1302 = vpop.f32.mrf.mxu0
    %v1303 = vadd.f32 0.0, %v1302
    %1304 = vmatmul.bf16.gmra.mxu0 %v1276
    %v1305 = vpop.f32.mrf.mxu0
    %v1306 = vadd.f32 0.0, %v1305
    %v1307 = vpop.f32.mrf.mxu0
    %v1308 = vadd.f32 0.0, %v1307
    %1309 = vdwg.mxu0
    %vm1310 = vcmask 523264
    %v1311 = vsel %vm1310, %v983, -inf
    %1312 = vmax.xlane.f32.xlu0 %v1311
    %v1313 = vpop.xlane.xlu0 %1312
    %v1314 = vsel %vm1310, %v985, -inf
    %1315 = vmax.xlane.f32.xlu0 %v1314
    %v1316 = vpop.xlane.xlu0 %1315
    %v1317 = vsel %vm1310, %v988, -inf
    %1318 = vmax.xlane.f32.xlu0 %v1317
    %v1319 = vpop.xlane.xlu0 %1318
    %v1320 = vsel %vm1310, %v990, -inf
    %1321 = vmax.xlane.f32.xlu0 %v1320
    %v1322 = vpop.xlane.xlu0 %1321
    %v1323 = vsel %vm1310, %v993, -inf
    %1324 = vmax.xlane.f32.xlu0 %v1323
    %v1325 = vpop.xlane.xlu0 %1324
    %v1326 = vsel %vm1310, %v995, -inf
    %1327 = vmax.xlane.f32.xlu0 %v1326
    %v1328 = vpop.xlane.xlu0 %1327
    %v1329 = vsel %vm1310, %v998, -inf
    %1330 = vmax.xlane.f32.xlu0 %v1329
    %v1331 = vpop.xlane.xlu0 %1330
    %v1332 = vsel %vm1310, %v1000, -inf
    %1333 = vmax.xlane.f32.xlu0 %v1332
    %v1334 = vpop.xlane.xlu0 %1333
    %v1335 = vsel %vm1310, %v1027, -inf
    %1336 = vmax.xlane.f32.xlu0 %v1335
    %v1337 = vpop.xlane.xlu0 %1336
    %v1338 = vsel %vm1310, %v1029, -inf
    %1339 = vmax.xlane.f32.xlu0 %v1338
    %v1340 = vpop.xlane.xlu0 %1339
    %v1341 = vsel %vm1310, %v1032, -inf
    %1342 = vmax.xlane.f32.xlu0 %v1341
    %v1343 = vpop.xlane.xlu0 %1342
    %v1344 = vsel %vm1310, %v1034, -inf
    %1345 = vmax.xlane.f32.xlu0 %v1344
    %v1346 = vpop.xlane.xlu0 %1345
    %v1347 = vsel %vm1310, %v1037, -inf
    %1348 = vmax.xlane.f32.xlu0 %v1347
    %v1349 = vpop.xlane.xlu0 %1348
    %v1350 = vsel %vm1310, %v1039, -inf
    %1351 = vmax.xlane.f32.xlu0 %v1350
    %v1352 = vpop.xlane.xlu0 %1351
    %v1353 = vsel %vm1310, %v1042, -inf
    %1354 = vmax.xlane.f32.xlu0 %v1353
    %v1355 = vpop.xlane.xlu0 %1354
    %v1356 = vsel %vm1310, %v1044, -inf
    %1357 = vmax.xlane.f32.xlu0 %v1356
    %v1358 = vpop.xlane.xlu0 %1357
    %v1359 = vsel %vm1310, %v1071, -inf
    %1360 = vmax.xlane.f32.xlu0 %v1359
    %v1361 = vpop.xlane.xlu0 %1360
    %v1362 = vsel %vm1310, %v1073, -inf
    %1363 = vmax.xlane.f32.xlu0 %v1362
    %v1364 = vpop.xlane.xlu0 %1363
    %v1365 = vsel %vm1310, %v1076, -inf
    %1366 = vmax.xlane.f32.xlu0 %v1365
    %v1367 = vpop.xlane.xlu0 %1366
    %v1368 = vsel %vm1310, %v1078, -inf
    %1369 = vmax.xlane.f32.xlu0 %v1368
    %v1370 = vpop.xlane.xlu0 %1369
    %v1371 = vsel %vm1310, %v1081, -inf
    %1372 = vmax.xlane.f32.xlu0 %v1371
    %v1373 = vpop.xlane.xlu0 %1372
    %v1374 = vsel %vm1310, %v1083, -inf
    %1375 = vmax.xlane.f32.xlu0 %v1374
    %v1376 = vpop.xlane.xlu0 %1375
    %v1377 = vsel %vm1310, %v1086, -inf
    %1378 = vmax.xlane.f32.xlu0 %v1377
    %v1379 = vpop.xlane.xlu0 %1378
    %v1380 = vsel %vm1310, %v1088, -inf
    %1381 = vmax.xlane.f32.xlu0 %v1380
    %v1382 = vpop.xlane.xlu0 %1381
    %v1383 = vsel %vm1310, %v1115, -inf
    %1384 = vmax.xlane.f32.xlu0 %v1383
    %v1385 = vpop.xlane.xlu0 %1384
    %v1386 = vsel %vm1310, %v1117, -inf
    %1387 = vmax.xlane.f32.xlu0 %v1386
    %v1388 = vpop.xlane.xlu0 %1387
    %v1389 = vsel %vm1310, %v1120, -inf
    %1390 = vmax.xlane.f32.xlu0 %v1389
    %v1391 = vpop.xlane.xlu0 %1390
    %v1392 = vsel %vm1310, %v1122, -inf
    %1393 = vmax.xlane.f32.xlu0 %v1392
    %v1394 = vpop.xlane.xlu0 %1393
    %v1395 = vsel %vm1310, %v1125, -inf
    %1396 = vmax.xlane.f32.xlu0 %v1395
    %v1397 = vpop.xlane.xlu0 %1396
    %v1398 = vsel %vm1310, %v1127, -inf
    %1399 = vmax.xlane.f32.xlu0 %v1398
    %v1400 = vpop.xlane.xlu0 %1399
    %v1401 = vsel %vm1310, %v1130, -inf
    %1402 = vmax.xlane.f32.xlu0 %v1401
    %v1403 = vpop.xlane.xlu0 %1402
    %v1404 = vsel %vm1310, %v1132, -inf
    %1405 = vmax.xlane.f32.xlu0 %v1404
    %v1406 = vpop.xlane.xlu0 %1405
    %v1407 = vsel %vm1310, %v1159, -inf
    %1408 = vmax.xlane.f32.xlu0 %v1407
    %v1409 = vpop.xlane.xlu0 %1408
    %v1410 = vsel %vm1310, %v1161, -inf
    %1411 = vmax.xlane.f32.xlu0 %v1410
    %v1412 = vpop.xlane.xlu0 %1411
    %v1413 = vsel %vm1310, %v1164, -inf
    %1414 = vmax.xlane.f32.xlu0 %v1413
    %v1415 = vpop.xlane.xlu0 %1414
    %v1416 = vsel %vm1310, %v1166, -inf
    %1417 = vmax.xlane.f32.xlu0 %v1416
    %v1418 = vpop.xlane.xlu0 %1417
    %v1419 = vsel %vm1310, %v1169, -inf
    %1420 = vmax.xlane.f32.xlu0 %v1419
    %v1421 = vpop.xlane.xlu0 %1420
    %v1422 = vsel %vm1310, %v1171, -inf
    %1423 = vmax.xlane.f32.xlu0 %v1422
    %v1424 = vpop.xlane.xlu0 %1423
    %v1425 = vsel %vm1310, %v1174, -inf
    %1426 = vmax.xlane.f32.xlu0 %v1425
    %v1427 = vpop.xlane.xlu0 %1426
    %v1428 = vsel %vm1310, %v1176, -inf
    %1429 = vmax.xlane.f32.xlu0 %v1428
    %v1430 = vpop.xlane.xlu0 %1429
    %v1431 = vsel %vm1310, %v1203, -inf
    %1432 = vmax.xlane.f32.xlu0 %v1431
    %v1433 = vpop.xlane.xlu0 %1432
    %v1434 = vsel %vm1310, %v1205, -inf
    %1435 = vmax.xlane.f32.xlu0 %v1434
    %v1436 = vpop.xlane.xlu0 %1435
    %v1437 = vsel %vm1310, %v1208, -inf
    %1438 = vmax.xlane.f32.xlu0 %v1437
    %v1439 = vpop.xlane.xlu0 %1438
    %v1440 = vsel %vm1310, %v1210, -inf
    %1441 = vmax.xlane.f32.xlu0 %v1440
    %v1442 = vpop.xlane.xlu0 %1441
    %v1443 = vsel %vm1310, %v1213, -inf
    %1444 = vmax.xlane.f32.xlu0 %v1443
    %v1445 = vpop.xlane.xlu0 %1444
    %v1446 = vsel %vm1310, %v1215, -inf
    %1447 = vmax.xlane.f32.xlu0 %v1446
    %v1448 = vpop.xlane.xlu0 %1447
    %v1449 = vsel %vm1310, %v1218, -inf
    %1450 = vmax.xlane.f32.xlu0 %v1449
    %v1451 = vpop.xlane.xlu0 %1450
    %v1452 = vsel %vm1310, %v1220, -inf
    %1453 = vmax.xlane.f32.xlu0 %v1452
    %v1454 = vpop.xlane.xlu0 %1453
    %v1455 = vsel %vm1310, %v1247, -inf
    %1456 = vmax.xlane.f32.xlu0 %v1455
    %v1457 = vpop.xlane.xlu0 %1456
    %v1458 = vsel %vm1310, %v1249, -inf
    %1459 = vmax.xlane.f32.xlu0 %v1458
    %v1460 = vpop.xlane.xlu0 %1459
    %v1461 = vsel %vm1310, %v1252, -inf
    %1462 = vmax.xlane.f32.xlu0 %v1461
    %v1463 = vpop.xlane.xlu0 %1462
    %v1464 = vsel %vm1310, %v1254, -inf
    %1465 = vmax.xlane.f32.xlu0 %v1464
    %v1466 = vpop.xlane.xlu0 %1465
    %v1467 = vsel %vm1310, %v1257, -inf
    %1468 = vmax.xlane.f32.xlu0 %v1467
    %v1469 = vpop.xlane.xlu0 %1468
    %v1470 = vsel %vm1310, %v1259, -inf
    %1471 = vmax.xlane.f32.xlu0 %v1470
    %v1472 = vpop.xlane.xlu0 %1471
    %v1473 = vsel %vm1310, %v1262, -inf
    %1474 = vmax.xlane.f32.xlu0 %v1473
    %v1475 = vpop.xlane.xlu0 %1474
    %v1476 = vsel %vm1310, %v1264, -inf
    %1477 = vmax.xlane.f32.xlu0 %v1476
    %v1478 = vpop.xlane.xlu0 %1477
    %v1479 = vsel %vm1310, %v1291, -inf
    %1480 = vmax.xlane.f32.xlu0 %v1479
    %v1481 = vpop.xlane.xlu0 %1480
    %v1482 = vsel %vm1310, %v1293, -inf
    %1483 = vmax.xlane.f32.xlu0 %v1482
    %v1484 = vpop.xlane.xlu0 %1483
    %v1485 = vsel %vm1310, %v1296, -inf
    %1486 = vmax.xlane.f32.xlu0 %v1485
    %v1487 = vpop.xlane.xlu0 %1486
    %v1488 = vsel %vm1310, %v1298, -inf
    %1489 = vmax.xlane.f32.xlu0 %v1488
    %v1490 = vpop.xlane.xlu0 %1489
    %v1491 = vsel %vm1310, %v1301, -inf
    %1492 = vmax.xlane.f32.xlu0 %v1491
    %v1493 = vpop.xlane.xlu0 %1492
    %v1494 = vsel %vm1310, %v1303, -inf
    %1495 = vmax.xlane.f32.xlu0 %v1494
    %v1496 = vpop.xlane.xlu0 %1495
    %v1497 = vsel %vm1310, %v1306, -inf
    %1498 = vmax.xlane.f32.xlu0 %v1497
    %v1499 = vpop.xlane.xlu0 %1498
    %v1500 = vsel %vm1310, %v1308, -inf
    %1501 = vmax.xlane.f32.xlu0 %v1500
    %v1502 = vpop.xlane.xlu0 %1501
    %v1503 = vsub.f32 %v983, %v1313
    %v1504 = vsub.f32 %v985, %v1316
    %v1505 = vsub.f32 %v988, %v1319
    %v1506 = vsub.f32 %v990, %v1322
    %v1507 = vsub.f32 %v993, %v1325
    %v1508 = vsub.f32 %v995, %v1328
    %v1509 = vsub.f32 %v998, %v1331
    %v1510 = vsub.f32 %v1000, %v1334
    %v1511 = vsub.f32 %v1027, %v1337
    %v1512 = vsub.f32 %v1029, %v1340
    %v1513 = vsub.f32 %v1032, %v1343
    %v1514 = vsub.f32 %v1034, %v1346
    %v1515 = vsub.f32 %v1037, %v1349
    %v1516 = vsub.f32 %v1039, %v1352
    %v1517 = vsub.f32 %v1042, %v1355
    %v1518 = vsub.f32 %v1044, %v1358
    %v1519 = vsub.f32 %v1071, %v1361
    %v1520 = vsub.f32 %v1073, %v1364
    %v1521 = vsub.f32 %v1076, %v1367
    %v1522 = vsub.f32 %v1078, %v1370
    %v1523 = vsub.f32 %v1081, %v1373
    %v1524 = vsub.f32 %v1083, %v1376
    %v1525 = vsub.f32 %v1086, %v1379
    %v1526 = vsub.f32 %v1088, %v1382
    %v1527 = vsub.f32 %v1115, %v1385
    %v1528 = vsub.f32 %v1117, %v1388
    %v1529 = vsub.f32 %v1120, %v1391
    %v1530 = vsub.f32 %v1122, %v1394
    %v1531 = vsub.f32 %v1125, %v1397
    %v1532 = vsub.f32 %v1127, %v1400
    %v1533 = vsub.f32 %v1130, %v1403
    %v1534 = vsub.f32 %v1132, %v1406
    %v1535 = vsub.f32 %v1159, %v1409
    %v1536 = vsub.f32 %v1161, %v1412
    %v1537 = vsub.f32 %v1164, %v1415
    %v1538 = vsub.f32 %v1166, %v1418
    %v1539 = vsub.f32 %v1169, %v1421
    %v1540 = vsub.f32 %v1171, %v1424
    %v1541 = vsub.f32 %v1174, %v1427
    %v1542 = vsub.f32 %v1176, %v1430
    %v1543 = vsub.f32 %v1203, %v1433
    %v1544 = vsub.f32 %v1205, %v1436
    %v1545 = vsub.f32 %v1208, %v1439
    %v1546 = vsub.f32 %v1210, %v1442
    %v1547 = vsub.f32 %v1213, %v1445
    %v1548 = vsub.f32 %v1215, %v1448
    %v1549 = vsub.f32 %v1218, %v1451
    %v1550 = vsub.f32 %v1220, %v1454
    %v1551 = vsub.f32 %v1247, %v1457
    %v1552 = vsub.f32 %v1249, %v1460
    %v1553 = vsub.f32 %v1252, %v1463
    %v1554 = vsub.f32 %v1254, %v1466
    %v1555 = vsub.f32 %v1257, %v1469
    %v1556 = vsub.f32 %v1259, %v1472
    %v1557 = vsub.f32 %v1262, %v1475
    %v1558 = vsub.f32 %v1264, %v1478
    %v1559 = vsub.f32 %v1291, %v1481
    %v1560 = vsub.f32 %v1293, %v1484
    %v1561 = vsub.f32 %v1296, %v1487
    %v1562 = vsub.f32 %v1298, %v1490
    %v1563 = vsub.f32 %v1301, %v1493
    %v1564 = vsub.f32 %v1303, %v1496
    %v1565 = vsub.f32 %v1306, %v1499
    %v1566 = vsub.f32 %v1308, %v1502
    %v1567 = vmul.f32 %v1503, 1.442695
    %v1568 = vpow.pop %v1567
    %v1569 = vmul.f32 %v1504, 1.442695
    %v1570 = vpow.pop %v1569
    %v1571 = vmul.f32 %v1505, 1.442695
    %v1572 = vpow.pop %v1571
    %v1573 = vmul.f32 %v1506, 1.442695
    %v1574 = vpow.pop %v1573
    %v1575 = vmul.f32 %v1507, 1.442695
    %v1576 = vpow.pop %v1575
    %v1577 = vmul.f32 %v1508, 1.442695
    %v1578 = vpow.pop %v1577
    %v1579 = vmul.f32 %v1509, 1.442695
    %v1580 = vpow.pop %v1579
    %v1581 = vmul.f32 %v1510, 1.442695
    %v1582 = vpow.pop %v1581
    %v1583 = vmul.f32 %v1511, 1.442695
    %v1584 = vpow.pop %v1583
    %v1585 = vmul.f32 %v1512, 1.442695
    %v1586 = vpow.pop %v1585
    %v1587 = vmul.f32 %v1513, 1.442695
    %v1588 = vpow.pop %v1587
    %v1589 = vmul.f32 %v1514, 1.442695
    %v1590 = vpow.pop %v1589
    %v1591 = vmul.f32 %v1515, 1.442695
    %v1592 = vpow.pop %v1591
    %v1593 = vmul.f32 %v1516, 1.442695
    %v1594 = vpow.pop %v1593
    %v1595 = vmul.f32 %v1517, 1.442695
    %v1596 = vpow.pop %v1595
    %v1597 = vmul.f32 %v1518, 1.442695
    %v1598 = vpow.pop %v1597
    %v1599 = vmul.f32 %v1519, 1.442695
    %v1600 = vpow.pop %v1599
    %v1601 = vmul.f32 %v1520, 1.442695
    %v1602 = vpow.pop %v1601
    %v1603 = vmul.f32 %v1521, 1.442695
    %v1604 = vpow.pop %v1603
    %v1605 = vmul.f32 %v1522, 1.442695
    %v1606 = vpow.pop %v1605
    %v1607 = vmul.f32 %v1523, 1.442695
    %v1608 = vpow.pop %v1607
    %v1609 = vmul.f32 %v1524, 1.442695
    %v1610 = vpow.pop %v1609
    %v1611 = vmul.f32 %v1525, 1.442695
    %v1612 = vpow.pop %v1611
    %v1613 = vmul.f32 %v1526, 1.442695
    %v1614 = vpow.pop %v1613
    %v1615 = vmul.f32 %v1527, 1.442695
    %v1616 = vpow.pop %v1615
    %v1617 = vmul.f32 %v1528, 1.442695
    %v1618 = vpow.pop %v1617
    %v1619 = vmul.f32 %v1529, 1.442695
    %v1620 = vpow.pop %v1619
    %v1621 = vmul.f32 %v1530, 1.442695
    %v1622 = vpow.pop %v1621
    %v1623 = vmul.f32 %v1531, 1.442695
    %v1624 = vpow.pop %v1623
    %v1625 = vmul.f32 %v1532, 1.442695
    %v1626 = vpow.pop %v1625
    %v1627 = vmul.f32 %v1533, 1.442695
    %v1628 = vpow.pop %v1627
    %v1629 = vmul.f32 %v1534, 1.442695
    %v1630 = vpow.pop %v1629
    %v1631 = vmul.f32 %v1535, 1.442695
    %v1632 = vpow.pop %v1631
    %v1633 = vmul.f32 %v1536, 1.442695
    %v1634 = vpow.pop %v1633
    %v1635 = vmul.f32 %v1537, 1.442695
    %v1636 = vpow.pop %v1635
    %v1637 = vmul.f32 %v1538, 1.442695
    %v1638 = vpow.pop %v1637
    %v1639 = vmul.f32 %v1539, 1.442695
    %v1640 = vpow.pop %v1639
    %v1641 = vmul.f32 %v1540, 1.442695
    %v1642 = vpow.pop %v1641
    %v1643 = vmul.f32 %v1541, 1.442695
    %v1644 = vpow.pop %v1643
    %v1645 = vmul.f32 %v1542, 1.442695
    %v1646 = vpow.pop %v1645
    %v1647 = vmul.f32 %v1543, 1.442695
    %v1648 = vpow.pop %v1647
    %v1649 = vmul.f32 %v1544, 1.442695
    %v1650 = vpow.pop %v1649
    %v1651 = vmul.f32 %v1545, 1.442695
    %v1652 = vpow.pop %v1651
    %v1653 = vmul.f32 %v1546, 1.442695
    %v1654 = vpow.pop %v1653
    %v1655 = vmul.f32 %v1547, 1.442695
    %v1656 = vpow.pop %v1655
    %v1657 = vmul.f32 %v1548, 1.442695
    %v1658 = vpow.pop %v1657
    %v1659 = vmul.f32 %v1549, 1.442695
    %v1660 = vpow.pop %v1659
    %v1661 = vmul.f32 %v1550, 1.442695
    %v1662 = vpow.pop %v1661
    %v1663 = vmul.f32 %v1551, 1.442695
    %v1664 = vpow.pop %v1663
    %v1665 = vmul.f32 %v1552, 1.442695
    %v1666 = vpow.pop %v1665
    %v1667 = vmul.f32 %v1553, 1.442695
    %v1668 = vpow.pop %v1667
    %v1669 = vmul.f32 %v1554, 1.442695
    %v1670 = vpow.pop %v1669
    %v1671 = vmul.f32 %v1555, 1.442695
    %v1672 = vpow.pop %v1671
    %v1673 = vmul.f32 %v1556, 1.442695
    %v1674 = vpow.pop %v1673
    %v1675 = vmul.f32 %v1557, 1.442695
    %v1676 = vpow.pop %v1675
    %v1677 = vmul.f32 %v1558, 1.442695
    %v1678 = vpow.pop %v1677
    %v1679 = vmul.f32 %v1559, 1.442695
    %v1680 = vpow.pop %v1679
    %v1681 = vmul.f32 %v1560, 1.442695
    %v1682 = vpow.pop %v1681
    %v1683 = vmul.f32 %v1561, 1.442695
    %v1684 = vpow.pop %v1683
    %v1685 = vmul.f32 %v1562, 1.442695
    %v1686 = vpow.pop %v1685
    %v1687 = vmul.f32 %v1563, 1.442695
    %v1688 = vpow.pop %v1687
    %v1689 = vmul.f32 %v1564, 1.442695
    %v1690 = vpow.pop %v1689
    %v1691 = vmul.f32 %v1565, 1.442695
    %v1692 = vpow.pop %v1691
    %v1693 = vmul.f32 %v1566, 1.442695
    %v1694 = vpow.pop %v1693
    %v1695 = vsel %vm1310, %v1568, 0.0
    %1696 = vadd.xlane.f32.xlu0 %v1695
    %v1697 = vpop.xlane.xlu0 %1696
    %v1698 = vsel %vm1310, %v1570, 0.0
    %1699 = vadd.xlane.f32.xlu0 %v1698
    %v1700 = vpop.xlane.xlu0 %1699
    %v1701 = vsel %vm1310, %v1572, 0.0
    %1702 = vadd.xlane.f32.xlu0 %v1701
    %v1703 = vpop.xlane.xlu0 %1702
    %v1704 = vsel %vm1310, %v1574, 0.0
    %1705 = vadd.xlane.f32.xlu0 %v1704
    %v1706 = vpop.xlane.xlu0 %1705
    %v1707 = vsel %vm1310, %v1576, 0.0
    %1708 = vadd.xlane.f32.xlu0 %v1707
    %v1709 = vpop.xlane.xlu0 %1708
    %v1710 = vsel %vm1310, %v1578, 0.0
    %1711 = vadd.xlane.f32.xlu0 %v1710
    %v1712 = vpop.xlane.xlu0 %1711
    %v1713 = vsel %vm1310, %v1580, 0.0
    %1714 = vadd.xlane.f32.xlu0 %v1713
    %v1715 = vpop.xlane.xlu0 %1714
    %v1716 = vsel %vm1310, %v1582, 0.0
    %1717 = vadd.xlane.f32.xlu0 %v1716
    %v1718 = vpop.xlane.xlu0 %1717
    %v1719 = vsel %vm1310, %v1584, 0.0
    %1720 = vadd.xlane.f32.xlu0 %v1719
    %v1721 = vpop.xlane.xlu0 %1720
    %v1722 = vsel %vm1310, %v1586, 0.0
    %1723 = vadd.xlane.f32.xlu0 %v1722
    %v1724 = vpop.xlane.xlu0 %1723
    %v1725 = vsel %vm1310, %v1588, 0.0
    %1726 = vadd.xlane.f32.xlu0 %v1725
    %v1727 = vpop.xlane.xlu0 %1726
    %v1728 = vsel %vm1310, %v1590, 0.0
    %1729 = vadd.xlane.f32.xlu0 %v1728
    %v1730 = vpop.xlane.xlu0 %1729
    %v1731 = vsel %vm1310, %v1592, 0.0
    %1732 = vadd.xlane.f32.xlu0 %v1731
    %v1733 = vpop.xlane.xlu0 %1732
    %v1734 = vsel %vm1310, %v1594, 0.0
    %1735 = vadd.xlane.f32.xlu0 %v1734
    %v1736 = vpop.xlane.xlu0 %1735
    %v1737 = vsel %vm1310, %v1596, 0.0
    %1738 = vadd.xlane.f32.xlu0 %v1737
    %v1739 = vpop.xlane.xlu0 %1738
    %v1740 = vsel %vm1310, %v1598, 0.0
    %1741 = vadd.xlane.f32.xlu0 %v1740
    %v1742 = vpop.xlane.xlu0 %1741
    %v1743 = vsel %vm1310, %v1600, 0.0
    %1744 = vadd.xlane.f32.xlu0 %v1743
    %v1745 = vpop.xlane.xlu0 %1744
    %v1746 = vsel %vm1310, %v1602, 0.0
    %1747 = vadd.xlane.f32.xlu0 %v1746
    %v1748 = vpop.xlane.xlu0 %1747
    %v1749 = vsel %vm1310, %v1604, 0.0
    %1750 = vadd.xlane.f32.xlu0 %v1749
    %v1751 = vpop.xlane.xlu0 %1750
    %v1752 = vsel %vm1310, %v1606, 0.0
    %1753 = vadd.xlane.f32.xlu0 %v1752
    %v1754 = vpop.xlane.xlu0 %1753
    %v1755 = vsel %vm1310, %v1608, 0.0
    %1756 = vadd.xlane.f32.xlu0 %v1755
    %v1757 = vpop.xlane.xlu0 %1756
    %v1758 = vsel %vm1310, %v1610, 0.0
    %1759 = vadd.xlane.f32.xlu0 %v1758
    %v1760 = vpop.xlane.xlu0 %1759
    %v1761 = vsel %vm1310, %v1612, 0.0
    %1762 = vadd.xlane.f32.xlu0 %v1761
    %v1763 = vpop.xlane.xlu0 %1762
    %v1764 = vsel %vm1310, %v1614, 0.0
    %1765 = vadd.xlane.f32.xlu0 %v1764
    %v1766 = vpop.xlane.xlu0 %1765
    %v1767 = vsel %vm1310, %v1616, 0.0
    %1768 = vadd.xlane.f32.xlu0 %v1767
    %v1769 = vpop.xlane.xlu0 %1768
    %v1770 = vsel %vm1310, %v1618, 0.0
    %1771 = vadd.xlane.f32.xlu0 %v1770
    %v1772 = vpop.xlane.xlu0 %1771
    %v1773 = vsel %vm1310, %v1620, 0.0
    %1774 = vadd.xlane.f32.xlu0 %v1773
    %v1775 = vpop.xlane.xlu0 %1774
    %v1776 = vsel %vm1310, %v1622, 0.0
    %1777 = vadd.xlane.f32.xlu0 %v1776
    %v1778 = vpop.xlane.xlu0 %1777
    %v1779 = vsel %vm1310, %v1624, 0.0
    %1780 = vadd.xlane.f32.xlu0 %v1779
    %v1781 = vpop.xlane.xlu0 %1780
    %v1782 = vsel %vm1310, %v1626, 0.0
    %1783 = vadd.xlane.f32.xlu0 %v1782
    %v1784 = vpop.xlane.xlu0 %1783
    %v1785 = vsel %vm1310, %v1628, 0.0
    %1786 = vadd.xlane.f32.xlu0 %v1785
    %v1787 = vpop.xlane.xlu0 %1786
    %v1788 = vsel %vm1310, %v1630, 0.0
    %1789 = vadd.xlane.f32.xlu0 %v1788
    %v1790 = vpop.xlane.xlu0 %1789
    %v1791 = vsel %vm1310, %v1632, 0.0
    %1792 = vadd.xlane.f32.xlu0 %v1791
    %v1793 = vpop.xlane.xlu0 %1792
    %v1794 = vsel %vm1310, %v1634, 0.0
    %1795 = vadd.xlane.f32.xlu0 %v1794
    %v1796 = vpop.xlane.xlu0 %1795
    %v1797 = vsel %vm1310, %v1636, 0.0
    %1798 = vadd.xlane.f32.xlu0 %v1797
    %v1799 = vpop.xlane.xlu0 %1798
    %v1800 = vsel %vm1310, %v1638, 0.0
    %1801 = vadd.xlane.f32.xlu0 %v1800
    %v1802 = vpop.xlane.xlu0 %1801
    %v1803 = vsel %vm1310, %v1640, 0.0
    %1804 = vadd.xlane.f32.xlu0 %v1803
    %v1805 = vpop.xlane.xlu0 %1804
    %v1806 = vsel %vm1310, %v1642, 0.0
    %1807 = vadd.xlane.f32.xlu0 %v1806
    %v1808 = vpop.xlane.xlu0 %1807
    %v1809 = vsel %vm1310, %v1644, 0.0
    %1810 = vadd.xlane.f32.xlu0 %v1809
    %v1811 = vpop.xlane.xlu0 %1810
    %v1812 = vsel %vm1310, %v1646, 0.0
    %1813 = vadd.xlane.f32.xlu0 %v1812
    %v1814 = vpop.xlane.xlu0 %1813
    %v1815 = vsel %vm1310, %v1648, 0.0
    %1816 = vadd.xlane.f32.xlu0 %v1815
    %v1817 = vpop.xlane.xlu0 %1816
    %v1818 = vsel %vm1310, %v1650, 0.0
    %1819 = vadd.xlane.f32.xlu0 %v1818
    %v1820 = vpop.xlane.xlu0 %1819
    %v1821 = vsel %vm1310, %v1652, 0.0
    %1822 = vadd.xlane.f32.xlu0 %v1821
    %v1823 = vpop.xlane.xlu0 %1822
    %v1824 = vsel %vm1310, %v1654, 0.0
    %1825 = vadd.xlane.f32.xlu0 %v1824
    %v1826 = vpop.xlane.xlu0 %1825
    %v1827 = vsel %vm1310, %v1656, 0.0
    %1828 = vadd.xlane.f32.xlu0 %v1827
    %v1829 = vpop.xlane.xlu0 %1828
    %v1830 = vsel %vm1310, %v1658, 0.0
    %1831 = vadd.xlane.f32.xlu0 %v1830
    %v1832 = vpop.xlane.xlu0 %1831
    %v1833 = vsel %vm1310, %v1660, 0.0
    %1834 = vadd.xlane.f32.xlu0 %v1833
    %v1835 = vpop.xlane.xlu0 %1834
    %v1836 = vsel %vm1310, %v1662, 0.0
    %1837 = vadd.xlane.f32.xlu0 %v1836
    %v1838 = vpop.xlane.xlu0 %1837
    %v1839 = vsel %vm1310, %v1664, 0.0
    %1840 = vadd.xlane.f32.xlu0 %v1839
    %v1841 = vpop.xlane.xlu0 %1840
    %v1842 = vsel %vm1310, %v1666, 0.0
    %1843 = vadd.xlane.f32.xlu0 %v1842
    %v1844 = vpop.xlane.xlu0 %1843
    %v1845 = vsel %vm1310, %v1668, 0.0
    %1846 = vadd.xlane.f32.xlu0 %v1845
    %v1847 = vpop.xlane.xlu0 %1846
    %v1848 = vsel %vm1310, %v1670, 0.0
    %1849 = vadd.xlane.f32.xlu0 %v1848
    %v1850 = vpop.xlane.xlu0 %1849
    %v1851 = vsel %vm1310, %v1672, 0.0
    %1852 = vadd.xlane.f32.xlu0 %v1851
    %v1853 = vpop.xlane.xlu0 %1852
    %v1854 = vsel %vm1310, %v1674, 0.0
    %1855 = vadd.xlane.f32.xlu0 %v1854
    %v1856 = vpop.xlane.xlu0 %1855
    %v1857 = vsel %vm1310, %v1676, 0.0
    %1858 = vadd.xlane.f32.xlu0 %v1857
    %v1859 = vpop.xlane.xlu0 %1858
    %v1860 = vsel %vm1310, %v1678, 0.0
    %1861 = vadd.xlane.f32.xlu0 %v1860
    %v1862 = vpop.xlane.xlu0 %1861
    %v1863 = vsel %vm1310, %v1680, 0.0
    %1864 = vadd.xlane.f32.xlu0 %v1863
    %v1865 = vpop.xlane.xlu0 %1864
    %v1866 = vsel %vm1310, %v1682, 0.0
    %1867 = vadd.xlane.f32.xlu0 %v1866
    %v1868 = vpop.xlane.xlu0 %1867
    %v1869 = vsel %vm1310, %v1684, 0.0
    %1870 = vadd.xlane.f32.xlu0 %v1869
    %v1871 = vpop.xlane.xlu0 %1870
    %v1872 = vsel %vm1310, %v1686, 0.0
    %1873 = vadd.xlane.f32.xlu0 %v1872
    %v1874 = vpop.xlane.xlu0 %1873
    %v1875 = vsel %vm1310, %v1688, 0.0
    %1876 = vadd.xlane.f32.xlu0 %v1875
    %v1877 = vpop.xlane.xlu0 %1876
    %v1878 = vsel %vm1310, %v1690, 0.0
    %1879 = vadd.xlane.f32.xlu0 %v1878
    %v1880 = vpop.xlane.xlu0 %1879
    %v1881 = vsel %vm1310, %v1692, 0.0
    %1882 = vadd.xlane.f32.xlu0 %v1881
    %v1883 = vpop.xlane.xlu0 %1882
    %v1884 = vsel %vm1310, %v1694, 0.0
    %1885 = vadd.xlane.f32.xlu0 %v1884
    %v1886 = vpop.xlane.xlu0 %1885
    %v1887 = vrcp.pop %v1697
    %v1888 = vrcp.pop %v1700
    %v1889 = vrcp.pop %v1703
    %v1890 = vrcp.pop %v1706
    %v1891 = vrcp.pop %v1709
    %v1892 = vrcp.pop %v1712
    %v1893 = vrcp.pop %v1715
    %v1894 = vrcp.pop %v1718
    %v1895 = vrcp.pop %v1721
    %v1896 = vrcp.pop %v1724
    %v1897 = vrcp.pop %v1727
    %v1898 = vrcp.pop %v1730
    %v1899 = vrcp.pop %v1733
    %v1900 = vrcp.pop %v1736
    %v1901 = vrcp.pop %v1739
    %v1902 = vrcp.pop %v1742
    %v1903 = vrcp.pop %v1745
    %v1904 = vrcp.pop %v1748
    %v1905 = vrcp.pop %v1751
    %v1906 = vrcp.pop %v1754
    %v1907 = vrcp.pop %v1757
    %v1908 = vrcp.pop %v1760
    %v1909 = vrcp.pop %v1763
    %v1910 = vrcp.pop %v1766
    %v1911 = vrcp.pop %v1769
    %v1912 = vrcp.pop %v1772
    %v1913 = vrcp.pop %v1775
    %v1914 = vrcp.pop %v1778
    %v1915 = vrcp.pop %v1781
    %v1916 = vrcp.pop %v1784
    %v1917 = vrcp.pop %v1787
    %v1918 = vrcp.pop %v1790
    %v1919 = vrcp.pop %v1793
    %v1920 = vrcp.pop %v1796
    %v1921 = vrcp.pop %v1799
    %v1922 = vrcp.pop %v1802
    %v1923 = vrcp.pop %v1805
    %v1924 = vrcp.pop %v1808
    %v1925 = vrcp.pop %v1811
    %v1926 = vrcp.pop %v1814
    %v1927 = vrcp.pop %v1817
    %v1928 = vrcp.pop %v1820
    %v1929 = vrcp.pop %v1823
    %v1930 = vrcp.pop %v1826
    %v1931 = vrcp.pop %v1829
    %v1932 = vrcp.pop %v1832
    %v1933 = vrcp.pop %v1835
    %v1934 = vrcp.pop %v1838
    %v1935 = vrcp.pop %v1841
    %v1936 = vrcp.pop %v1844
    %v1937 = vrcp.pop %v1847
    %v1938 = vrcp.pop %v1850
    %v1939 = vrcp.pop %v1853
    %v1940 = vrcp.pop %v1856
    %v1941 = vrcp.pop %v1859
    %v1942 = vrcp.pop %v1862
    %v1943 = vrcp.pop %v1865
    %v1944 = vrcp.pop %v1868
    %v1945 = vrcp.pop %v1871
    %v1946 = vrcp.pop %v1874
    %v1947 = vrcp.pop %v1877
    %v1948 = vrcp.pop %v1880
    %v1949 = vrcp.pop %v1883
    %v1950 = vrcp.pop %v1886
    %v1951 = vmul.f32 %v1568, %v1887
    %v1952 = vmul.f32 %v1570, %v1888
    %v1953 = vmul.f32 %v1572, %v1889
    %v1954 = vmul.f32 %v1574, %v1890
    %v1955 = vmul.f32 %v1576, %v1891
    %v1956 = vmul.f32 %v1578, %v1892
    %v1957 = vmul.f32 %v1580, %v1893
    %v1958 = vmul.f32 %v1582, %v1894
    %v1959 = vmul.f32 %v1584, %v1895
    %v1960 = vmul.f32 %v1586, %v1896
    %v1961 = vmul.f32 %v1588, %v1897
    %v1962 = vmul.f32 %v1590, %v1898
    %v1963 = vmul.f32 %v1592, %v1899
    %v1964 = vmul.f32 %v1594, %v1900
    %v1965 = vmul.f32 %v1596, %v1901
    %v1966 = vmul.f32 %v1598, %v1902
    %v1967 = vmul.f32 %v1600, %v1903
    %v1968 = vmul.f32 %v1602, %v1904
    %v1969 = vmul.f32 %v1604, %v1905
    %v1970 = vmul.f32 %v1606, %v1906
    %v1971 = vmul.f32 %v1608, %v1907
    %v1972 = vmul.f32 %v1610, %v1908
    %v1973 = vmul.f32 %v1612, %v1909
    %v1974 = vmul.f32 %v1614, %v1910
    %v1975 = vmul.f32 %v1616, %v1911
    %v1976 = vmul.f32 %v1618, %v1912
    %v1977 = vmul.f32 %v1620, %v1913
    %v1978 = vmul.f32 %v1622, %v1914
    %v1979 = vmul.f32 %v1624, %v1915
    %v1980 = vmul.f32 %v1626, %v1916
    %v1981 = vmul.f32 %v1628, %v1917
    %v1982 = vmul.f32 %v1630, %v1918
    %v1983 = vmul.f32 %v1632, %v1919
    %v1984 = vmul.f32 %v1634, %v1920
    %v1985 = vmul.f32 %v1636, %v1921
    %v1986 = vmul.f32 %v1638, %v1922
    %v1987 = vmul.f32 %v1640, %v1923
    %v1988 = vmul.f32 %v1642, %v1924
    %v1989 = vmul.f32 %v1644, %v1925
    %v1990 = vmul.f32 %v1646, %v1926
    %v1991 = vmul.f32 %v1648, %v1927
    %v1992 = vmul.f32 %v1650, %v1928
    %v1993 = vmul.f32 %v1652, %v1929
    %v1994 = vmul.f32 %v1654, %v1930
    %v1995 = vmul.f32 %v1656, %v1931
    %v1996 = vmul.f32 %v1658, %v1932
    %v1997 = vmul.f32 %v1660, %v1933
    %v1998 = vmul.f32 %v1662, %v1934
    %v1999 = vmul.f32 %v1664, %v1935
    %v2000 = vmul.f32 %v1666, %v1936
    %v2001 = vmul.f32 %v1668, %v1937
    %v2002 = vmul.f32 %v1670, %v1938
    %v2003 = vmul.f32 %v1672, %v1939
    %v2004 = vmul.f32 %v1674, %v1940
    %v2005 = vmul.f32 %v1676, %v1941
    %v2006 = vmul.f32 %v1678, %v1942
    %v2007 = vmul.f32 %v1680, %v1943
    %v2008 = vmul.f32 %v1682, %v1944
    %v2009 = vmul.f32 %v1684, %v1945
    %v2010 = vmul.f32 %v1686, %v1946
    %v2011 = vmul.f32 %v1688, %v1947
    %v2012 = vmul.f32 %v1690, %v1948
    %v2013 = vmul.f32 %v1692, %v1949
    %v2014 = vmul.f32 %v1694, %v1950
    %v2015 = vpack.c.bf16 %v1951, %v1951
    %v2016 = vpack.c.bf16 %v1952, %v1952
    %v2017 = vpack.c.bf16 %v1953, %v1953
    %v2018 = vpack.c.bf16 %v1954, %v1954
    %v2019 = vpack.c.bf16 %v1955, %v1955
    %v2020 = vpack.c.bf16 %v1956, %v1956
    %v2021 = vpack.c.bf16 %v1957, %v1957
    %v2022 = vpack.c.bf16 %v1958, %v1958
    %v2023 = vpack.c.bf16 %v1959, %v1959
    %v2024 = vpack.c.bf16 %v1960, %v1960
    %v2025 = vpack.c.bf16 %v1961, %v1961
    %v2026 = vpack.c.bf16 %v1962, %v1962
    %v2027 = vpack.c.bf16 %v1963, %v1963
    %v2028 = vpack.c.bf16 %v1964, %v1964
    %v2029 = vpack.c.bf16 %v1965, %v1965
    %v2030 = vpack.c.bf16 %v1966, %v1966
    %v2031 = vpack.c.bf16 %v1967, %v1967
    %v2032 = vpack.c.bf16 %v1968, %v1968
    %v2033 = vpack.c.bf16 %v1969, %v1969
    %v2034 = vpack.c.bf16 %v1970, %v1970
    %v2035 = vpack.c.bf16 %v1971, %v1971
    %v2036 = vpack.c.bf16 %v1972, %v1972
    %v2037 = vpack.c.bf16 %v1973, %v1973
    %v2038 = vpack.c.bf16 %v1974, %v1974
    %v2039 = vpack.c.bf16 %v1975, %v1975
    %v2040 = vpack.c.bf16 %v1976, %v1976
    %v2041 = vpack.c.bf16 %v1977, %v1977
    %v2042 = vpack.c.bf16 %v1978, %v1978
    %v2043 = vpack.c.bf16 %v1979, %v1979
    %v2044 = vpack.c.bf16 %v1980, %v1980
    %v2045 = vpack.c.bf16 %v1981, %v1981
    %v2046 = vpack.c.bf16 %v1982, %v1982
    %v2047 = vpack.c.bf16 %v1983, %v1983
    %v2048 = vpack.c.bf16 %v1984, %v1984
    %v2049 = vpack.c.bf16 %v1985, %v1985
    %v2050 = vpack.c.bf16 %v1986, %v1986
    %v2051 = vpack.c.bf16 %v1987, %v1987
    %v2052 = vpack.c.bf16 %v1988, %v1988
    %v2053 = vpack.c.bf16 %v1989, %v1989
    %v2054 = vpack.c.bf16 %v1990, %v1990
    %v2055 = vpack.c.bf16 %v1991, %v1991
    %v2056 = vpack.c.bf16 %v1992, %v1992
    %v2057 = vpack.c.bf16 %v1993, %v1993
    %v2058 = vpack.c.bf16 %v1994, %v1994
    %v2059 = vpack.c.bf16 %v1995, %v1995
    %v2060 = vpack.c.bf16 %v1996, %v1996
    %v2061 = vpack.c.bf16 %v1997, %v1997
    %v2062 = vpack.c.bf16 %v1998, %v1998
    %v2063 = vpack.c.bf16 %v1999, %v1999
    %v2064 = vpack.c.bf16 %v2000, %v2000
    %v2065 = vpack.c.bf16 %v2001, %v2001
    %v2066 = vpack.c.bf16 %v2002, %v2002
    %v2067 = vpack.c.bf16 %v2003, %v2003
    %v2068 = vpack.c.bf16 %v2004, %v2004
    %v2069 = vpack.c.bf16 %v2005, %v2005
    %v2070 = vpack.c.bf16 %v2006, %v2006
    %v2071 = vpack.c.bf16 %v2007, %v2007
    %v2072 = vpack.c.bf16 %v2008, %v2008
    %v2073 = vpack.c.bf16 %v2009, %v2009
    %v2074 = vpack.c.bf16 %v2010, %v2010
    %v2075 = vpack.c.bf16 %v2011, %v2011
    %v2076 = vpack.c.bf16 %v2012, %v2012
    %v2077 = vpack.c.bf16 %v2013, %v2013
    %v2078 = vpack.c.bf16 %v2014, %v2014
    %v2087 = vunpack.c.l.b16 %v2015
    %v2088 = vunpack.c.l.b16 %v2016
    %v2089 = vunpack.c.l.b16 %v2017
    %v2090 = vunpack.c.l.b16 %v2018
    %v2091 = vunpack.c.l.b16 %v2019
    %v2092 = vunpack.c.l.b16 %v2020
    %v2093 = vunpack.c.l.b16 %v2021
    %v2094 = vunpack.c.l.b16 %v2022
    %v2095 = vpack.c.b16 %v2088, %v2087
    %v2096 = vpack.c.b16 %v2090, %v2089
    %v2097 = vpack.c.b16 %v2092, %v2091
    %v2098 = vpack.c.b16 %v2094, %v2093
    %v2100 = vsel %vm1310, %v2095, 0
    %v2103 = vsel %vm1310, %v2096, 0
    %v2106 = vsel %vm1310, %v2097, 0
    %v2109 = vsel %vm1310, %v2098, 0
    %v2112 = vsel %vm1310, %v820, 0
    %2114 = vmatpush.bf16.xpose.msra.mxu0 0
    %2115 = vmatpush.bf16.xpose.msra.mxu0 0
    %2116 = vmatpush.bf16.xpose.msra.mxu0 0
    %2117 = vmatpush.bf16.xpose.msra.mxu0 0
    %2118 = vmatpush.bf16.xpose.msra.mxu0 0
    %2119 = vmatpush.bf16.xpose.msra.mxu0 0
    %2120 = vmatpush.bf16.xpose.msra.mxu0 0
    %2121 = vmatpush.bf16.xpose.msra.mxu0 %v2112
    %2122 = vmatmul.bf16.gmra.mxu0 %v2100
    %v2123 = vpop.f32.mrf.mxu0
    %v2124 = vadd.f32 0.0, %v2123
    %v2125 = vpop.f32.mrf.mxu0
    %v2126 = vadd.f32 0.0, %v2125
    %2127 = vmatmul.bf16.gmra.mxu0 %v2103
    %v2128 = vpop.f32.mrf.mxu0
    %v2129 = vadd.f32 0.0, %v2128
    %v2130 = vpop.f32.mrf.mxu0
    %v2131 = vadd.f32 0.0, %v2130
    %2132 = vmatmul.bf16.gmra.mxu0 %v2106
    %v2133 = vpop.f32.mrf.mxu0
    %v2134 = vadd.f32 0.0, %v2133
    %v2135 = vpop.f32.mrf.mxu0
    %v2136 = vadd.f32 0.0, %v2135
    %2137 = vmatmul.bf16.gmra.mxu0 %v2109
    %v2138 = vpop.f32.mrf.mxu0
    %v2139 = vadd.f32 0.0, %v2138
    %v2140 = vpop.f32.mrf.mxu0
    %v2141 = vadd.f32 0.0, %v2140
    %2142 = vdwg.mxu0
    %v2151 = vunpack.c.l.b16 %v2023
    %v2152 = vunpack.c.l.b16 %v2024
    %v2153 = vunpack.c.l.b16 %v2025
    %v2154 = vunpack.c.l.b16 %v2026
    %v2155 = vunpack.c.l.b16 %v2027
    %v2156 = vunpack.c.l.b16 %v2028
    %v2157 = vunpack.c.l.b16 %v2029
    %v2158 = vunpack.c.l.b16 %v2030
    %v2159 = vpack.c.b16 %v2152, %v2151
    %v2160 = vpack.c.b16 %v2154, %v2153
    %v2161 = vpack.c.b16 %v2156, %v2155
    %v2162 = vpack.c.b16 %v2158, %v2157
    %v2164 = vsel %vm1310, %v2159, 0
    %v2167 = vsel %vm1310, %v2160, 0
    %v2170 = vsel %vm1310, %v2161, 0
    %v2173 = vsel %vm1310, %v2162, 0
    %v2176 = vsel %vm1310, %v821, 0
    %2178 = vmatpush.bf16.xpose.msra.mxu0 0
    %2179 = vmatpush.bf16.xpose.msra.mxu0 0
    %2180 = vmatpush.bf16.xpose.msra.mxu0 0
    %2181 = vmatpush.bf16.xpose.msra.mxu0 0
    %2182 = vmatpush.bf16.xpose.msra.mxu0 0
    %2183 = vmatpush.bf16.xpose.msra.mxu0 0
    %2184 = vmatpush.bf16.xpose.msra.mxu0 0
    %2185 = vmatpush.bf16.xpose.msra.mxu0 %v2176
    %2186 = vmatmul.bf16.gmra.mxu0 %v2164
    %v2187 = vpop.f32.mrf.mxu0
    %v2188 = vadd.f32 0.0, %v2187
    %v2189 = vpop.f32.mrf.mxu0
    %v2190 = vadd.f32 0.0, %v2189
    %2191 = vmatmul.bf16.gmra.mxu0 %v2167
    %v2192 = vpop.f32.mrf.mxu0
    %v2193 = vadd.f32 0.0, %v2192
    %v2194 = vpop.f32.mrf.mxu0
    %v2195 = vadd.f32 0.0, %v2194
    %2196 = vmatmul.bf16.gmra.mxu0 %v2170
    %v2197 = vpop.f32.mrf.mxu0
    %v2198 = vadd.f32 0.0, %v2197
    %v2199 = vpop.f32.mrf.mxu0
    %v2200 = vadd.f32 0.0, %v2199
    %2201 = vmatmul.bf16.gmra.mxu0 %v2173
    %v2202 = vpop.f32.mrf.mxu0
    %v2203 = vadd.f32 0.0, %v2202
    %v2204 = vpop.f32.mrf.mxu0
    %v2205 = vadd.f32 0.0, %v2204
    %2206 = vdwg.mxu0
    %v2215 = vunpack.c.l.b16 %v2031
    %v2216 = vunpack.c.l.b16 %v2032
    %v2217 = vunpack.c.l.b16 %v2033
    %v2218 = vunpack.c.l.b16 %v2034
    %v2219 = vunpack.c.l.b16 %v2035
    %v2220 = vunpack.c.l.b16 %v2036
    %v2221 = vunpack.c.l.b16 %v2037
    %v2222 = vunpack.c.l.b16 %v2038
    %v2223 = vpack.c.b16 %v2216, %v2215
    %v2224 = vpack.c.b16 %v2218, %v2217
    %v2225 = vpack.c.b16 %v2220, %v2219
    %v2226 = vpack.c.b16 %v2222, %v2221
    %v2228 = vsel %vm1310, %v2223, 0
    %v2231 = vsel %vm1310, %v2224, 0
    %v2234 = vsel %vm1310, %v2225, 0
    %v2237 = vsel %vm1310, %v2226, 0
    %v2240 = vsel %vm1310, %v822, 0
    %2242 = vmatpush.bf16.xpose.msra.mxu0 0
    %2243 = vmatpush.bf16.xpose.msra.mxu0 0
    %2244 = vmatpush.bf16.xpose.msra.mxu0 0
    %2245 = vmatpush.bf16.xpose.msra.mxu0 0
    %2246 = vmatpush.bf16.xpose.msra.mxu0 0
    %2247 = vmatpush.bf16.xpose.msra.mxu0 0
    %2248 = vmatpush.bf16.xpose.msra.mxu0 0
    %2249 = vmatpush.bf16.xpose.msra.mxu0 %v2240
    %2250 = vmatmul.bf16.gmra.mxu0 %v2228
    %v2251 = vpop.f32.mrf.mxu0
    %v2252 = vadd.f32 0.0, %v2251
    %v2253 = vpop.f32.mrf.mxu0
    %v2254 = vadd.f32 0.0, %v2253
    %2255 = vmatmul.bf16.gmra.mxu0 %v2231
    %v2256 = vpop.f32.mrf.mxu0
    %v2257 = vadd.f32 0.0, %v2256
    %v2258 = vpop.f32.mrf.mxu0
    %v2259 = vadd.f32 0.0, %v2258
    %2260 = vmatmul.bf16.gmra.mxu0 %v2234
    %v2261 = vpop.f32.mrf.mxu0
    %v2262 = vadd.f32 0.0, %v2261
    %v2263 = vpop.f32.mrf.mxu0
    %v2264 = vadd.f32 0.0, %v2263
    %2265 = vmatmul.bf16.gmra.mxu0 %v2237
    %v2266 = vpop.f32.mrf.mxu0
    %v2267 = vadd.f32 0.0, %v2266
    %v2268 = vpop.f32.mrf.mxu0
    %v2269 = vadd.f32 0.0, %v2268
    %2270 = vdwg.mxu0
    %v2279 = vunpack.c.l.b16 %v2039
    %v2280 = vunpack.c.l.b16 %v2040
    %v2281 = vunpack.c.l.b16 %v2041
    %v2282 = vunpack.c.l.b16 %v2042
    %v2283 = vunpack.c.l.b16 %v2043
    %v2284 = vunpack.c.l.b16 %v2044
    %v2285 = vunpack.c.l.b16 %v2045
    %v2286 = vunpack.c.l.b16 %v2046
    %v2287 = vpack.c.b16 %v2280, %v2279
    %v2288 = vpack.c.b16 %v2282, %v2281
    %v2289 = vpack.c.b16 %v2284, %v2283
    %v2290 = vpack.c.b16 %v2286, %v2285
    %v2292 = vsel %vm1310, %v2287, 0
    %v2295 = vsel %vm1310, %v2288, 0
    %v2298 = vsel %vm1310, %v2289, 0
    %v2301 = vsel %vm1310, %v2290, 0
    %v2304 = vsel %vm1310, %v823, 0
    %2306 = vmatpush.bf16.xpose.msra.mxu0 0
    %2307 = vmatpush.bf16.xpose.msra.mxu0 0
    %2308 = vmatpush.bf16.xpose.msra.mxu0 0
    %2309 = vmatpush.bf16.xpose.msra.mxu0 0
    %2310 = vmatpush.bf16.xpose.msra.mxu0 0
    %2311 = vmatpush.bf16.xpose.msra.mxu0 0
    %2312 = vmatpush.bf16.xpose.msra.mxu0 0
    %2313 = vmatpush.bf16.xpose.msra.mxu0 %v2304
    %2314 = vmatmul.bf16.gmra.mxu0 %v2292
    %v2315 = vpop.f32.mrf.mxu0
    %v2316 = vadd.f32 0.0, %v2315
    %v2317 = vpop.f32.mrf.mxu0
    %v2318 = vadd.f32 0.0, %v2317
    %2319 = vmatmul.bf16.gmra.mxu0 %v2295
    %v2320 = vpop.f32.mrf.mxu0
    %v2321 = vadd.f32 0.0, %v2320
    %v2322 = vpop.f32.mrf.mxu0
    %v2323 = vadd.f32 0.0, %v2322
    %2324 = vmatmul.bf16.gmra.mxu0 %v2298
    %v2325 = vpop.f32.mrf.mxu0
    %v2326 = vadd.f32 0.0, %v2325
    %v2327 = vpop.f32.mrf.mxu0
    %v2328 = vadd.f32 0.0, %v2327
    %2329 = vmatmul.bf16.gmra.mxu0 %v2301
    %v2330 = vpop.f32.mrf.mxu0
    %v2331 = vadd.f32 0.0, %v2330
    %v2332 = vpop.f32.mrf.mxu0
    %v2333 = vadd.f32 0.0, %v2332
    %2334 = vdwg.mxu0
    %v2343 = vunpack.c.l.b16 %v2047
    %v2344 = vunpack.c.l.b16 %v2048
    %v2345 = vunpack.c.l.b16 %v2049
    %v2346 = vunpack.c.l.b16 %v2050
    %v2347 = vunpack.c.l.b16 %v2051
    %v2348 = vunpack.c.l.b16 %v2052
    %v2349 = vunpack.c.l.b16 %v2053
    %v2350 = vunpack.c.l.b16 %v2054
    %v2351 = vpack.c.b16 %v2344, %v2343
    %v2352 = vpack.c.b16 %v2346, %v2345
    %v2353 = vpack.c.b16 %v2348, %v2347
    %v2354 = vpack.c.b16 %v2350, %v2349
    %v2356 = vsel %vm1310, %v2351, 0
    %v2359 = vsel %vm1310, %v2352, 0
    %v2362 = vsel %vm1310, %v2353, 0
    %v2365 = vsel %vm1310, %v2354, 0
    %v2368 = vsel %vm1310, %v824, 0
    %2370 = vmatpush.bf16.xpose.msra.mxu0 0
    %2371 = vmatpush.bf16.xpose.msra.mxu0 0
    %2372 = vmatpush.bf16.xpose.msra.mxu0 0
    %2373 = vmatpush.bf16.xpose.msra.mxu0 0
    %2374 = vmatpush.bf16.xpose.msra.mxu0 0
    %2375 = vmatpush.bf16.xpose.msra.mxu0 0
    %2376 = vmatpush.bf16.xpose.msra.mxu0 0
    %2377 = vmatpush.bf16.xpose.msra.mxu0 %v2368
    %2378 = vmatmul.bf16.gmra.mxu0 %v2356
    %v2379 = vpop.f32.mrf.mxu0
    %v2380 = vadd.f32 0.0, %v2379
    %v2381 = vpop.f32.mrf.mxu0
    %v2382 = vadd.f32 0.0, %v2381
    %2383 = vmatmul.bf16.gmra.mxu0 %v2359
    %v2384 = vpop.f32.mrf.mxu0
    %v2385 = vadd.f32 0.0, %v2384
    %v2386 = vpop.f32.mrf.mxu0
    %v2387 = vadd.f32 0.0, %v2386
    %2388 = vmatmul.bf16.gmra.mxu0 %v2362
    %v2389 = vpop.f32.mrf.mxu0
    %v2390 = vadd.f32 0.0, %v2389
    %v2391 = vpop.f32.mrf.mxu0
    %v2392 = vadd.f32 0.0, %v2391
    %2393 = vmatmul.bf16.gmra.mxu0 %v2365
    %v2394 = vpop.f32.mrf.mxu0
    %v2395 = vadd.f32 0.0, %v2394
    %v2396 = vpop.f32.mrf.mxu0
    %v2397 = vadd.f32 0.0, %v2396
    %2398 = vdwg.mxu0
    %v2407 = vunpack.c.l.b16 %v2055
    %v2408 = vunpack.c.l.b16 %v2056
    %v2409 = vunpack.c.l.b16 %v2057
    %v2410 = vunpack.c.l.b16 %v2058
    %v2411 = vunpack.c.l.b16 %v2059
    %v2412 = vunpack.c.l.b16 %v2060
    %v2413 = vunpack.c.l.b16 %v2061
    %v2414 = vunpack.c.l.b16 %v2062
    %v2415 = vpack.c.b16 %v2408, %v2407
    %v2416 = vpack.c.b16 %v2410, %v2409
    %v2417 = vpack.c.b16 %v2412, %v2411
    %v2418 = vpack.c.b16 %v2414, %v2413
    %v2420 = vsel %vm1310, %v2415, 0
    %v2423 = vsel %vm1310, %v2416, 0
    %v2426 = vsel %vm1310, %v2417, 0
    %v2429 = vsel %vm1310, %v2418, 0
    %v2432 = vsel %vm1310, %v825, 0
    %2434 = vmatpush.bf16.xpose.msra.mxu0 0
    %2435 = vmatpush.bf16.xpose.msra.mxu0 0
    %2436 = vmatpush.bf16.xpose.msra.mxu0 0
    %2437 = vmatpush.bf16.xpose.msra.mxu0 0
    %2438 = vmatpush.bf16.xpose.msra.mxu0 0
    %2439 = vmatpush.bf16.xpose.msra.mxu0 0
    %2440 = vmatpush.bf16.xpose.msra.mxu0 0
    %2441 = vmatpush.bf16.xpose.msra.mxu0 %v2432
    %2442 = vmatmul.bf16.gmra.mxu0 %v2420
    %v2443 = vpop.f32.mrf.mxu0
    %v2444 = vadd.f32 0.0, %v2443
    %v2445 = vpop.f32.mrf.mxu0
    %v2446 = vadd.f32 0.0, %v2445
    %2447 = vmatmul.bf16.gmra.mxu0 %v2423
    %v2448 = vpop.f32.mrf.mxu0
    %v2449 = vadd.f32 0.0, %v2448
    %v2450 = vpop.f32.mrf.mxu0
    %v2451 = vadd.f32 0.0, %v2450
    %2452 = vmatmul.bf16.gmra.mxu0 %v2426
    %v2453 = vpop.f32.mrf.mxu0
    %v2454 = vadd.f32 0.0, %v2453
    %v2455 = vpop.f32.mrf.mxu0
    %v2456 = vadd.f32 0.0, %v2455
    %2457 = vmatmul.bf16.gmra.mxu0 %v2429
    %v2458 = vpop.f32.mrf.mxu0
    %v2459 = vadd.f32 0.0, %v2458
    %v2460 = vpop.f32.mrf.mxu0
    %v2461 = vadd.f32 0.0, %v2460
    %2462 = vdwg.mxu0
    %v2471 = vunpack.c.l.b16 %v2063
    %v2472 = vunpack.c.l.b16 %v2064
    %v2473 = vunpack.c.l.b16 %v2065
    %v2474 = vunpack.c.l.b16 %v2066
    %v2475 = vunpack.c.l.b16 %v2067
    %v2476 = vunpack.c.l.b16 %v2068
    %v2477 = vunpack.c.l.b16 %v2069
    %v2478 = vunpack.c.l.b16 %v2070
    %v2479 = vpack.c.b16 %v2472, %v2471
    %v2480 = vpack.c.b16 %v2474, %v2473
    %v2481 = vpack.c.b16 %v2476, %v2475
    %v2482 = vpack.c.b16 %v2478, %v2477
    %v2484 = vsel %vm1310, %v2479, 0
    %v2487 = vsel %vm1310, %v2480, 0
    %v2490 = vsel %vm1310, %v2481, 0
    %v2493 = vsel %vm1310, %v2482, 0
    %v2496 = vsel %vm1310, %v826, 0
    %2498 = vmatpush.bf16.xpose.msra.mxu0 0
    %2499 = vmatpush.bf16.xpose.msra.mxu0 0
    %2500 = vmatpush.bf16.xpose.msra.mxu0 0
    %2501 = vmatpush.bf16.xpose.msra.mxu0 0
    %2502 = vmatpush.bf16.xpose.msra.mxu0 0
    %2503 = vmatpush.bf16.xpose.msra.mxu0 0
    %2504 = vmatpush.bf16.xpose.msra.mxu0 0
    %2505 = vmatpush.bf16.xpose.msra.mxu0 %v2496
    %2506 = vmatmul.bf16.gmra.mxu0 %v2484
    %v2507 = vpop.f32.mrf.mxu0
    %v2508 = vadd.f32 0.0, %v2507
    %v2509 = vpop.f32.mrf.mxu0
    %v2510 = vadd.f32 0.0, %v2509
    %2511 = vmatmul.bf16.gmra.mxu0 %v2487
    %v2512 = vpop.f32.mrf.mxu0
    %v2513 = vadd.f32 0.0, %v2512
    %v2514 = vpop.f32.mrf.mxu0
    %v2515 = vadd.f32 0.0, %v2514
    %2516 = vmatmul.bf16.gmra.mxu0 %v2490
    %v2517 = vpop.f32.mrf.mxu0
    %v2518 = vadd.f32 0.0, %v2517
    %v2519 = vpop.f32.mrf.mxu0
    %v2520 = vadd.f32 0.0, %v2519
    %2521 = vmatmul.bf16.gmra.mxu0 %v2493
    %v2522 = vpop.f32.mrf.mxu0
    %v2523 = vadd.f32 0.0, %v2522
    %v2524 = vpop.f32.mrf.mxu0
    %v2525 = vadd.f32 0.0, %v2524
    %2526 = vdwg.mxu0
    %v2535 = vunpack.c.l.b16 %v2071
    %v2536 = vunpack.c.l.b16 %v2072
    %v2537 = vunpack.c.l.b16 %v2073
    %v2538 = vunpack.c.l.b16 %v2074
    %v2539 = vunpack.c.l.b16 %v2075
    %v2540 = vunpack.c.l.b16 %v2076
    %v2541 = vunpack.c.l.b16 %v2077
    %v2542 = vunpack.c.l.b16 %v2078
    %v2543 = vpack.c.b16 %v2536, %v2535
    %v2544 = vpack.c.b16 %v2538, %v2537
    %v2545 = vpack.c.b16 %v2540, %v2539
    %v2546 = vpack.c.b16 %v2542, %v2541
    %v2548 = vsel %vm1310, %v2543, 0
    %v2551 = vsel %vm1310, %v2544, 0
    %v2554 = vsel %vm1310, %v2545, 0
    %v2557 = vsel %vm1310, %v2546, 0
    %v2560 = vsel %vm1310, %v827, 0
    %2562 = vmatpush.bf16.xpose.msra.mxu0 0
    %2563 = vmatpush.bf16.xpose.msra.mxu0 0
    %2564 = vmatpush.bf16.xpose.msra.mxu0 0
    %2565 = vmatpush.bf16.xpose.msra.mxu0 0
    %2566 = vmatpush.bf16.xpose.msra.mxu0 0
    %2567 = vmatpush.bf16.xpose.msra.mxu0 0
    %2568 = vmatpush.bf16.xpose.msra.mxu0 0
    %2569 = vmatpush.bf16.xpose.msra.mxu0 %v2560
    %2570 = vmatmul.bf16.gmra.mxu0 %v2548
    %v2571 = vpop.f32.mrf.mxu0
    %v2572 = vadd.f32 0.0, %v2571
    %v2573 = vpop.f32.mrf.mxu0
    %v2574 = vadd.f32 0.0, %v2573
    %2575 = vmatmul.bf16.gmra.mxu0 %v2551
    %v2576 = vpop.f32.mrf.mxu0
    %v2577 = vadd.f32 0.0, %v2576
    %v2578 = vpop.f32.mrf.mxu0
    %v2579 = vadd.f32 0.0, %v2578
    %2580 = vmatmul.bf16.gmra.mxu0 %v2554
    %v2581 = vpop.f32.mrf.mxu0
    %v2582 = vadd.f32 0.0, %v2581
    %v2583 = vpop.f32.mrf.mxu0
    %v2584 = vadd.f32 0.0, %v2583
    %2585 = vmatmul.bf16.gmra.mxu0 %v2557
    %v2586 = vpop.f32.mrf.mxu0
    %v2587 = vadd.f32 0.0, %v2586
    %v2588 = vpop.f32.mrf.mxu0
    %v2589 = vadd.f32 0.0, %v2588
    %2590 = vdwg.mxu0
    %v2591 = vpack.c.bf16 %v2126, %v2124
    %v2592 = vpack.c.bf16 %v2131, %v2129
    %v2593 = vpack.c.bf16 %v2136, %v2134
    %v2594 = vpack.c.bf16 %v2141, %v2139
    %v2595 = vpack.c.bf16 %v2190, %v2188
    %v2596 = vpack.c.bf16 %v2195, %v2193
    %v2597 = vpack.c.bf16 %v2200, %v2198
    %v2598 = vpack.c.bf16 %v2205, %v2203
    %v2599 = vpack.c.bf16 %v2254, %v2252
    %v2600 = vpack.c.bf16 %v2259, %v2257
    %v2601 = vpack.c.bf16 %v2264, %v2262
    %v2602 = vpack.c.bf16 %v2269, %v2267
    %v2603 = vpack.c.bf16 %v2318, %v2316
    %v2604 = vpack.c.bf16 %v2323, %v2321
    %v2605 = vpack.c.bf16 %v2328, %v2326
    %v2606 = vpack.c.bf16 %v2333, %v2331
    %v2607 = vpack.c.bf16 %v2382, %v2380
    %v2608 = vpack.c.bf16 %v2387, %v2385
    %v2609 = vpack.c.bf16 %v2392, %v2390
    %v2610 = vpack.c.bf16 %v2397, %v2395
    %v2611 = vpack.c.bf16 %v2446, %v2444
    %v2612 = vpack.c.bf16 %v2451, %v2449
    %v2613 = vpack.c.bf16 %v2456, %v2454
    %v2614 = vpack.c.bf16 %v2461, %v2459
    %v2615 = vpack.c.bf16 %v2510, %v2508
    %v2616 = vpack.c.bf16 %v2515, %v2513
    %v2617 = vpack.c.bf16 %v2520, %v2518
    %v2618 = vpack.c.bf16 %v2525, %v2523
    %v2619 = vpack.c.bf16 %v2574, %v2572
    %v2620 = vpack.c.bf16 %v2579, %v2577
    %v2621 = vpack.c.bf16 %v2584, %v2582
    %v2622 = vpack.c.bf16 %v2589, %v2587
    %2623 = vxpose.xlu0.c.b16.start [1/8] %v2591, 128
    %2624 = vxpose.xlu0.c.b16.cont [2/8] %v2592, 128
    %2625 = vxpose.xlu0.c.b16.cont [3/8] %v2593, 128
    %2626 = vxpose.xlu0.c.b16.cont [4/8] %v2594, 128
    %2627 = vxpose.xlu0.c.b16.cont [5/8] 0, 128
    %2628 = vxpose.xlu0.c.b16.cont [6/8] 0, 128
    %2629 = vxpose.xlu0.c.b16.cont [7/8] 0, 128
    %2630 = vxpose.xlu0.c.b16.end [8/8] 0, 128
    %v2631 = vpop.trf.xlu0
    %v2632 = vpop.trf.xlu0
    %v2633 = vpop.trf.xlu0
    %v2634 = vpop.trf.xlu0
    %v2635 = vpop.trf.xlu0
    %v2636 = vpop.trf.xlu0
    %v2637 = vpop.trf.xlu0
    %v2638 = vpop.trf.xlu0
    %2639 = vxpose.xlu0.c.b16.start [1/8] %v2595, 128
    %2640 = vxpose.xlu0.c.b16.cont [2/8] %v2596, 128
    %2641 = vxpose.xlu0.c.b16.cont [3/8] %v2597, 128
    %2642 = vxpose.xlu0.c.b16.cont [4/8] %v2598, 128
    %2643 = vxpose.xlu0.c.b16.cont [5/8] 0, 128
    %2644 = vxpose.xlu0.c.b16.cont [6/8] 0, 128
    %2645 = vxpose.xlu0.c.b16.cont [7/8] 0, 128
    %2646 = vxpose.xlu0.c.b16.end [8/8] 0, 128
    %v2647 = vpop.trf.xlu0
    %v2648 = vpop.trf.xlu0
    %v2649 = vpop.trf.xlu0
    %v2650 = vpop.trf.xlu0
    %v2651 = vpop.trf.xlu0
    %v2652 = vpop.trf.xlu0
    %v2653 = vpop.trf.xlu0
    %v2654 = vpop.trf.xlu0
    %2655 = vxpose.xlu0.c.b16.start [1/8] %v2599, 128
    %2656 = vxpose.xlu0.c.b16.cont [2/8] %v2600, 128
    %2657 = vxpose.xlu0.c.b16.cont [3/8] %v2601, 128
    %2658 = vxpose.xlu0.c.b16.cont [4/8] %v2602, 128
    %2659 = vxpose.xlu0.c.b16.cont [5/8] 0, 128
    %2660 = vxpose.xlu0.c.b16.cont [6/8] 0, 128
    %2661 = vxpose.xlu0.c.b16.cont [7/8] 0, 128
    %2662 = vxpose.xlu0.c.b16.end [8/8] 0, 128
    %v2663 = vpop.trf.xlu0
    %v2664 = vpop.trf.xlu0
    %v2665 = vpop.trf.xlu0
    %v2666 = vpop.trf.xlu0
    %v2667 = vpop.trf.xlu0
    %v2668 = vpop.trf.xlu0
    %v2669 = vpop.trf.xlu0
    %v2670 = vpop.trf.xlu0
    %2671 = vxpose.xlu0.c.b16.start [1/8] %v2603, 128
    %2672 = vxpose.xlu0.c.b16.cont [2/8] %v2604, 128
    %2673 = vxpose.xlu0.c.b16.cont [3/8] %v2605, 128
    %2674 = vxpose.xlu0.c.b16.cont [4/8] %v2606, 128
    %2675 = vxpose.xlu0.c.b16.cont [5/8] 0, 128
    %2676 = vxpose.xlu0.c.b16.cont [6/8] 0, 128
    %2677 = vxpose.xlu0.c.b16.cont [7/8] 0, 128
    %2678 = vxpose.xlu0.c.b16.end [8/8] 0, 128
    %v2679 = vpop.trf.xlu0
    %v2680 = vpop.trf.xlu0
    %v2681 = vpop.trf.xlu0
    %v2682 = vpop.trf.xlu0
    %v2683 = vpop.trf.xlu0
    %v2684 = vpop.trf.xlu0
    %v2685 = vpop.trf.xlu0
    %v2686 = vpop.trf.xlu0
    %2687 = vxpose.xlu0.c.b16.start [1/8] %v2607, 128
    %2688 = vxpose.xlu0.c.b16.cont [2/8] %v2608, 128
    %2689 = vxpose.xlu0.c.b16.cont [3/8] %v2609, 128
    %2690 = vxpose.xlu0.c.b16.cont [4/8] %v2610, 128
    %2691 = vxpose.xlu0.c.b16.cont [5/8] 0, 128
    %2692 = vxpose.xlu0.c.b16.cont [6/8] 0, 128
    %2693 = vxpose.xlu0.c.b16.cont [7/8] 0, 128
    %2694 = vxpose.xlu0.c.b16.end [8/8] 0, 128
    %v2695 = vpop.trf.xlu0
    %v2696 = vpop.trf.xlu0
    %v2697 = vpop.trf.xlu0
    %v2698 = vpop.trf.xlu0
    %v2699 = vpop.trf.xlu0
    %v2700 = vpop.trf.xlu0
    %v2701 = vpop.trf.xlu0
    %v2702 = vpop.trf.xlu0
    %2703 = vxpose.xlu0.c.b16.start [1/8] %v2611, 128
    %2704 = vxpose.xlu0.c.b16.cont [2/8] %v2612, 128
    %2705 = vxpose.xlu0.c.b16.cont [3/8] %v2613, 128
    %2706 = vxpose.xlu0.c.b16.cont [4/8] %v2614, 128
    %2707 = vxpose.xlu0.c.b16.cont [5/8] 0, 128
    %2708 = vxpose.xlu0.c.b16.cont [6/8] 0, 128
    %2709 = vxpose.xlu0.c.b16.cont [7/8] 0, 128
    %2710 = vxpose.xlu0.c.b16.end [8/8] 0, 128
    %v2711 = vpop.trf.xlu0
    %v2712 = vpop.trf.xlu0
    %v2713 = vpop.trf.xlu0
    %v2714 = vpop.trf.xlu0
    %v2715 = vpop.trf.xlu0
    %v2716 = vpop.trf.xlu0
    %v2717 = vpop.trf.xlu0
    %v2718 = vpop.trf.xlu0
    %2719 = vxpose.xlu0.c.b16.start [1/8] %v2615, 128
    %2720 = vxpose.xlu0.c.b16.cont [2/8] %v2616, 128
    %2721 = vxpose.xlu0.c.b16.cont [3/8] %v2617, 128
    %2722 = vxpose.xlu0.c.b16.cont [4/8] %v2618, 128
    %2723 = vxpose.xlu0.c.b16.cont [5/8] 0, 128
    %2724 = vxpose.xlu0.c.b16.cont [6/8] 0, 128
    %2725 = vxpose.xlu0.c.b16.cont [7/8] 0, 128
    %2726 = vxpose.xlu0.c.b16.end [8/8] 0, 128
    %v2727 = vpop.trf.xlu0
    %v2728 = vpop.trf.xlu0
    %v2729 = vpop.trf.xlu0
    %v2730 = vpop.trf.xlu0
    %v2731 = vpop.trf.xlu0
    %v2732 = vpop.trf.xlu0
    %v2733 = vpop.trf.xlu0
    %v2734 = vpop.trf.xlu0
    %2735 = vxpose.xlu0.c.b16.start [1/8] %v2619, 128
    %2736 = vxpose.xlu0.c.b16.cont [2/8] %v2620, 128
    %2737 = vxpose.xlu0.c.b16.cont [3/8] %v2621, 128
    %2738 = vxpose.xlu0.c.b16.cont [4/8] %v2622, 128
    %2739 = vxpose.xlu0.c.b16.cont [5/8] 0, 128
    %2740 = vxpose.xlu0.c.b16.cont [6/8] 0, 128
    %2741 = vxpose.xlu0.c.b16.cont [7/8] 0, 128
    %2742 = vxpose.xlu0.c.b16.end [8/8] 0, 128
    %v2743 = vpop.trf.xlu0
    %v2744 = vpop.trf.xlu0
    %v2745 = vpop.trf.xlu0
    %v2746 = vpop.trf.xlu0
    %v2747 = vpop.trf.xlu0
    %v2748 = vpop.trf.xlu0
    %v2749 = vpop.trf.xlu0
    %v2750 = vpop.trf.xlu0
    %v2759 = vunpack.c.l.b16 %v2631
    %v2760 = vunpack.c.l.b16 %v2647
    %v2761 = vunpack.c.l.b16 %v2663
    %v2762 = vunpack.c.l.b16 %v2679
    %v2763 = vunpack.c.l.b16 %v2695
    %v2764 = vunpack.c.l.b16 %v2711
    %v2765 = vunpack.c.l.b16 %v2727
    %v2766 = vunpack.c.l.b16 %v2743
    %v2767 = vpack.c.b16 %v2760, %v2759
    %v2768 = vpack.c.b16 %v2762, %v2761
    %v2769 = vpack.c.b16 %v2764, %v2763
    %v2770 = vpack.c.b16 %v2766, %v2765
    %2775 = vxpose.xlu0.c.b16.start [1/8] %v2767, 128
    %2776 = vxpose.xlu0.c.b16.cont [2/8] %v2768, 128
    %2777 = vxpose.xlu0.c.b16.cont [3/8] 0, 128
    %2778 = vxpose.xlu0.c.b16.cont [4/8] 0, 128
    %2779 = vxpose.xlu0.c.b16.cont [5/8] 0, 128
    %2780 = vxpose.xlu0.c.b16.cont [6/8] 0, 128
    %2781 = vxpose.xlu0.c.b16.cont [7/8] 0, 128
    %2782 = vxpose.xlu0.c.b16.end [8/8] 0, 128
    %v2783 = vpop.trf.xlu0
    %v2784 = vpop.trf.xlu0
    %v2785 = vpop.trf.xlu0
    %v2786 = vpop.trf.xlu0
    %v2787 = vpop.trf.xlu0
    %v2788 = vpop.trf.xlu0
    %v2789 = vpop.trf.xlu0
    %v2790 = vpop.trf.xlu0
    %2791 = vxpose.xlu0.c.b16.start [1/8] %v2769, 128
    %2792 = vxpose.xlu0.c.b16.cont [2/8] %v2770, 128
    %2793 = vxpose.xlu0.c.b16.cont [3/8] 0, 128
    %2794 = vxpose.xlu0.c.b16.cont [4/8] 0, 128
    %2795 = vxpose.xlu0.c.b16.cont [5/8] 0, 128
    %2796 = vxpose.xlu0.c.b16.cont [6/8] 0, 128
    %2797 = vxpose.xlu0.c.b16.cont [7/8] 0, 128
    %2798 = vxpose.xlu0.c.b16.end [8/8] 0, 128
    %v2799 = vpop.trf.xlu0
    %v2800 = vpop.trf.xlu0
    %v2801 = vpop.trf.xlu0
    %v2802 = vpop.trf.xlu0
    %v2803 = vpop.trf.xlu0
    %v2804 = vpop.trf.xlu0
    %v2805 = vpop.trf.xlu0
    %v2806 = vpop.trf.xlu0
    %v2807 = vld [vmem:[#allocation5] sm:$0xf]
    %v2808 = vld [vmem:[#allocation5 + $0x4] sm:$0xf]
    %v2809 = vld [vmem:[#allocation5 + $0x8] sm:$0xf]
    %v2810 = vld [vmem:[#allocation5 + $0xc] sm:$0xf]
    %v2811 = vld [vmem:[%s6] sm:$0x1]
    %v2813 = vperm.slane %v2811, 0
    %v2819 = vunpack.c.l.b16 %v2807
    %v2820 = vunpack.c.l.b16 %v2808
    %v2821 = vunpack.c.l.b16 %v2809
    %v2822 = vunpack.c.l.b16 %v2810
    %v2823 = vpack.c.b16 %v2820, %v2819
    %v2824 = vpack.c.b16 %v2822, %v2821
    %v2828 = vsel %vm165, %v2783, 0
    %v2831 = vsel %vm165, %v2784, 0
    %v2834 = vsel %vm165, %v2785, 0
    %v2837 = vsel %vm165, %v2786, 0
    %v2840 = vsel %vm165, %v2799, 0
    %v2843 = vsel %vm165, %v2800, 0
    %v2846 = vsel %vm165, %v2801, 0
    %v2849 = vsel %vm165, %v2802, 0
    %2851 = vmatpush.bf16.msra.mxu0 0
    %2852 = vmatpush.bf16.msra.mxu0 0
    %2853 = vmatpush.bf16.msra.mxu0 0
    %2854 = vmatpush.bf16.msra.mxu0 0
    %2855 = vmatpush.bf16.msra.mxu0 0
    %2856 = vmatpush.bf16.msra.mxu0 0
    %2857 = vmatpush.bf16.msra.mxu0 %v2824
    %2858 = vmatpush.bf16.msra.mxu0 %v2823
    %2859 = vmatmul.bf16.gmra.mxu0 %v2828
    %v2860 = vpop.f32.mrf.mxu0
    %v2861 = vadd.f32 %v2813, %v2860
    %v2862 = vpop.f32.mrf.mxu0
    %v2863 = vadd.f32 %v2813, %v2862
    %2864 = vmatmul.bf16.gmra.mxu0 %v2831
    %v2865 = vpop.f32.mrf.mxu0
    %v2866 = vadd.f32 %v2813, %v2865
    %v2867 = vpop.f32.mrf.mxu0
    %v2868 = vadd.f32 %v2813, %v2867
    %2869 = vmatmul.bf16.gmra.mxu0 %v2834
    %v2870 = vpop.f32.mrf.mxu0
    %v2871 = vadd.f32 %v2813, %v2870
    %v2872 = vpop.f32.mrf.mxu0
    %v2873 = vadd.f32 %v2813, %v2872
    %2874 = vmatmul.bf16.gmra.mxu0 %v2837
    %v2875 = vpop.f32.mrf.mxu0
    %v2876 = vadd.f32 %v2813, %v2875
    %v2877 = vpop.f32.mrf.mxu0
    %v2878 = vadd.f32 %v2813, %v2877
    %2879 = vmatmul.bf16.gmra.mxu0 %v2840
    %v2880 = vpop.f32.mrf.mxu0
    %v2881 = vadd.f32 %v2813, %v2880
    %v2882 = vpop.f32.mrf.mxu0
    %v2883 = vadd.f32 %v2813, %v2882
    %2884 = vmatmul.bf16.gmra.mxu0 %v2843
    %v2885 = vpop.f32.mrf.mxu0
    %v2886 = vadd.f32 %v2813, %v2885
    %v2887 = vpop.f32.mrf.mxu0
    %v2888 = vadd.f32 %v2813, %v2887
    %2889 = vmatmul.bf16.gmra.mxu0 %v2846
    %v2890 = vpop.f32.mrf.mxu0
    %v2891 = vadd.f32 %v2813, %v2890
    %v2892 = vpop.f32.mrf.mxu0
    %v2893 = vadd.f32 %v2813, %v2892
    %2894 = vmatmul.bf16.gmra.mxu0 %v2849
    %v2895 = vpop.f32.mrf.mxu0
    %v2896 = vadd.f32 %v2813, %v2895
    %v2897 = vpop.f32.mrf.mxu0
    %v2898 = vadd.f32 %v2813, %v2897
    %2899 = vdwg.mxu0
    %v2900 = vadd.f32 %v115, %v2861
    %v2901 = vadd.f32 %v116, %v2863
    %v2902 = vadd.f32 %v117, %v2866
    %v2903 = vadd.f32 %v118, %v2868
    %v2904 = vadd.f32 %v119, %v2871
    %v2905 = vadd.f32 %v120, %v2873
    %v2906 = vadd.f32 %v121, %v2876
    %v2907 = vadd.f32 %v122, %v2878
    %v2908 = vadd.f32 %v147, %v2881
    %v2909 = vadd.f32 %v148, %v2883
    %v2910 = vadd.f32 %v149, %v2886
    %v2911 = vadd.f32 %v150, %v2888
    %v2912 = vadd.f32 %v151, %v2891
    %v2913 = vadd.f32 %v152, %v2893
    %v2914 = vadd.f32 %v153, %v2896
    %v2915 = vadd.f32 %v154, %v2898
    %v2916 = vld [vmem:[%s7] sm:$0x1]
    %v2917 = vld [vmem:[%s8] sm:$0x1]
    %v2918 = vsel %vm165, %v2900, 0.0
    %2919 = vadd.xlane.f32.xlu0 %v2918
    %v2920 = vpop.xlane.xlu0 %2919
    %v2921 = vsel %vm165, %v2901, 0.0
    %2922 = vadd.xlane.f32.xlu0 %v2921
    %v2923 = vpop.xlane.xlu0 %2922
    %v2924 = vsel %vm165, %v2902, 0.0
    %2925 = vadd.xlane.f32.xlu0 %v2924
    %v2926 = vpop.xlane.xlu0 %2925
    %v2927 = vsel %vm165, %v2903, 0.0
    %2928 = vadd.xlane.f32.xlu0 %v2927
    %v2929 = vpop.xlane.xlu0 %2928
    %v2930 = vsel %vm165, %v2904, 0.0
    %2931 = vadd.xlane.f32.xlu0 %v2930
    %v2932 = vpop.xlane.xlu0 %2931
    %v2933 = vsel %vm165, %v2905, 0.0
    %2934 = vadd.xlane.f32.xlu0 %v2933
    %v2935 = vpop.xlane.xlu0 %2934
    %v2936 = vsel %vm165, %v2906, 0.0
    %2937 = vadd.xlane.f32.xlu0 %v2936
    %v2938 = vpop.xlane.xlu0 %2937
    %v2939 = vsel %vm165, %v2907, 0.0
    %2940 = vadd.xlane.f32.xlu0 %v2939
    %v2941 = vpop.xlane.xlu0 %2940
    %v2942 = vsel %vm165, %v2908, 0.0
    %2943 = vadd.xlane.f32.xlu0 %v2942
    %v2944 = vpop.xlane.xlu0 %2943
    %v2945 = vsel %vm165, %v2909, 0.0
    %2946 = vadd.xlane.f32.xlu0 %v2945
    %v2947 = vpop.xlane.xlu0 %2946
    %v2948 = vsel %vm165, %v2910, 0.0
    %2949 = vadd.xlane.f32.xlu0 %v2948
    %v2950 = vpop.xlane.xlu0 %2949
    %v2951 = vsel %vm165, %v2911, 0.0
    %2952 = vadd.xlane.f32.xlu0 %v2951
    %v2953 = vpop.xlane.xlu0 %2952
    %v2954 = vsel %vm165, %v2912, 0.0
    %2955 = vadd.xlane.f32.xlu0 %v2954
    %v2956 = vpop.xlane.xlu0 %2955
    %v2957 = vsel %vm165, %v2913, 0.0
    %2958 = vadd.xlane.f32.xlu0 %v2957
    %v2959 = vpop.xlane.xlu0 %2958
    %v2960 = vsel %vm165, %v2914, 0.0
    %2961 = vadd.xlane.f32.xlu0 %v2960
    %v2962 = vpop.xlane.xlu0 %2961
    %v2963 = vsel %vm165, %v2915, 0.0
    %2964 = vadd.xlane.f32.xlu0 %v2963
    %v2965 = vpop.xlane.xlu0 %2964
    %v2966 = vmul.f32 %v2920, %v220
    %v2967 = vmul.f32 %v2923, %v220
    %v2968 = vmul.f32 %v2926, %v220
    %v2969 = vmul.f32 %v2929, %v220
    %v2970 = vmul.f32 %v2932, %v220
    %v2971 = vmul.f32 %v2935, %v220
    %v2972 = vmul.f32 %v2938, %v220
    %v2973 = vmul.f32 %v2941, %v220
    %v2974 = vmul.f32 %v2944, %v220
    %v2975 = vmul.f32 %v2947, %v220
    %v2976 = vmul.f32 %v2950, %v220
    %v2977 = vmul.f32 %v2953, %v220
    %v2978 = vmul.f32 %v2956, %v220
    %v2979 = vmul.f32 %v2959, %v220
    %v2980 = vmul.f32 %v2962, %v220
    %v2981 = vmul.f32 %v2965, %v220
    %v2982 = vsub.f32 %v2900, %v2966
    %v2983 = vsub.f32 %v2901, %v2967
    %v2984 = vsub.f32 %v2902, %v2968
    %v2985 = vsub.f32 %v2903, %v2969
    %v2986 = vsub.f32 %v2904, %v2970
    %v2987 = vsub.f32 %v2905, %v2971
    %v2988 = vsub.f32 %v2906, %v2972
    %v2989 = vsub.f32 %v2907, %v2973
    %v2990 = vsub.f32 %v2908, %v2974
    %v2991 = vsub.f32 %v2909, %v2975
    %v2992 = vsub.f32 %v2910, %v2976
    %v2993 = vsub.f32 %v2911, %v2977
    %v2994 = vsub.f32 %v2912, %v2978
    %v2995 = vsub.f32 %v2913, %v2979
    %v2996 = vsub.f32 %v2914, %v2980
    %v2997 = vsub.f32 %v2915, %v2981
    %v2998 = vmul.f32 %v2982, %v2982
    %v2999 = vmul.f32 %v2983, %v2983
    %v3000 = vmul.f32 %v2984, %v2984
    %v3001 = vmul.f32 %v2985, %v2985
    %v3002 = vmul.f32 %v2986, %v2986
    %v3003 = vmul.f32 %v2987, %v2987
    %v3004 = vmul.f32 %v2988, %v2988
    %v3005 = vmul.f32 %v2989, %v2989
    %v3006 = vmul.f32 %v2990, %v2990
    %v3007 = vmul.f32 %v2991, %v2991
    %v3008 = vmul.f32 %v2992, %v2992
    %v3009 = vmul.f32 %v2993, %v2993
    %v3010 = vmul.f32 %v2994, %v2994
    %v3011 = vmul.f32 %v2995, %v2995
    %v3012 = vmul.f32 %v2996, %v2996
    %v3013 = vmul.f32 %v2997, %v2997
    %v3014 = vsel %vm165, %v2998, 0.0
    %3015 = vadd.xlane.f32.xlu0 %v3014
    %v3016 = vpop.xlane.xlu0 %3015
    %v3017 = vsel %vm165, %v2999, 0.0
    %3018 = vadd.xlane.f32.xlu0 %v3017
    %v3019 = vpop.xlane.xlu0 %3018
    %v3020 = vsel %vm165, %v3000, 0.0
    %3021 = vadd.xlane.f32.xlu0 %v3020
    %v3022 = vpop.xlane.xlu0 %3021
    %v3023 = vsel %vm165, %v3001, 0.0
    %3024 = vadd.xlane.f32.xlu0 %v3023
    %v3025 = vpop.xlane.xlu0 %3024
    %v3026 = vsel %vm165, %v3002, 0.0
    %3027 = vadd.xlane.f32.xlu0 %v3026
    %v3028 = vpop.xlane.xlu0 %3027
    %v3029 = vsel %vm165, %v3003, 0.0
    %3030 = vadd.xlane.f32.xlu0 %v3029
    %v3031 = vpop.xlane.xlu0 %3030
    %v3032 = vsel %vm165, %v3004, 0.0
    %3033 = vadd.xlane.f32.xlu0 %v3032
    %v3034 = vpop.xlane.xlu0 %3033
    %v3035 = vsel %vm165, %v3005, 0.0
    %3036 = vadd.xlane.f32.xlu0 %v3035
    %v3037 = vpop.xlane.xlu0 %3036
    %v3038 = vsel %vm165, %v3006, 0.0
    %3039 = vadd.xlane.f32.xlu0 %v3038
    %v3040 = vpop.xlane.xlu0 %3039
    %v3041 = vsel %vm165, %v3007, 0.0
    %3042 = vadd.xlane.f32.xlu0 %v3041
    %v3043 = vpop.xlane.xlu0 %3042
    %v3044 = vsel %vm165, %v3008, 0.0
    %3045 = vadd.xlane.f32.xlu0 %v3044
    %v3046 = vpop.xlane.xlu0 %3045
    %v3047 = vsel %vm165, %v3009, 0.0
    %3048 = vadd.xlane.f32.xlu0 %v3047
    %v3049 = vpop.xlane.xlu0 %3048
    %v3050 = vsel %vm165, %v3010, 0.0
    %3051 = vadd.xlane.f32.xlu0 %v3050
    %v3052 = vpop.xlane.xlu0 %3051
    %v3053 = vsel %vm165, %v3011, 0.0
    %3054 = vadd.xlane.f32.xlu0 %v3053
    %v3055 = vpop.xlane.xlu0 %3054
    %v3056 = vsel %vm165, %v3012, 0.0
    %3057 = vadd.xlane.f32.xlu0 %v3056
    %v3058 = vpop.xlane.xlu0 %3057
    %v3059 = vsel %vm165, %v3013, 0.0
    %3060 = vadd.xlane.f32.xlu0 %v3059
    %v3061 = vpop.xlane.xlu0 %3060
    %v3062 = vmul.f32 %v3016, %v220
    %v3063 = vmul.f32 %v3019, %v220
    %v3064 = vmul.f32 %v3022, %v220
    %v3065 = vmul.f32 %v3025, %v220
    %v3066 = vmul.f32 %v3028, %v220
    %v3067 = vmul.f32 %v3031, %v220
    %v3068 = vmul.f32 %v3034, %v220
    %v3069 = vmul.f32 %v3037, %v220
    %v3070 = vmul.f32 %v3040, %v220
    %v3071 = vmul.f32 %v3043, %v220
    %v3072 = vmul.f32 %v3046, %v220
    %v3073 = vmul.f32 %v3049, %v220
    %v3074 = vmul.f32 %v3052, %v220
    %v3075 = vmul.f32 %v3055, %v220
    %v3076 = vmul.f32 %v3058, %v220
    %v3077 = vmul.f32 %v3061, %v220
    %v3078 = vadd.f32 %v3062, 1e-05
    %v3079 = vadd.f32 %v3063, 1e-05
    %v3080 = vadd.f32 %v3064, 1e-05
    %v3081 = vadd.f32 %v3065, 1e-05
    %v3082 = vadd.f32 %v3066, 1e-05
    %v3083 = vadd.f32 %v3067, 1e-05
    %v3084 = vadd.f32 %v3068, 1e-05
    %v3085 = vadd.f32 %v3069, 1e-05
    %v3086 = vadd.f32 %v3070, 1e-05
    %v3087 = vadd.f32 %v3071, 1e-05
    %v3088 = vadd.f32 %v3072, 1e-05
    %v3089 = vadd.f32 %v3073, 1e-05
    %v3090 = vadd.f32 %v3074, 1e-05
    %v3091 = vadd.f32 %v3075, 1e-05
    %v3092 = vadd.f32 %v3076, 1e-05
    %v3093 = vadd.f32 %v3077, 1e-05
    %v3094 = vrsqrt.pop %v3078
    %v3095 = vmul.f32 %v3094, %v3078
    %v3096 = vmul.f32 %v3095, %v3094
    %v3097 = vmul.f32 0.5, %v3096
    %v3098 = vsub.f32 1.5, %v3097
    %v3099 = vmul.f32 %v3094, %v3098
    %vm3100 = vweird.f32 %v3078
    %vm3101 = vweird.f32 %v3094
    %vm3102 = vmor %vm3100, %vm3101
    %v3103 = vsel %vm3102, %v3094, %v3099
    %v3104 = vrsqrt.pop %v3079
    %v3105 = vmul.f32 %v3104, %v3079
    %v3106 = vmul.f32 %v3105, %v3104
    %v3107 = vmul.f32 0.5, %v3106
    %v3108 = vsub.f32 1.5, %v3107
    %v3109 = vmul.f32 %v3104, %v3108
    %vm3110 = vweird.f32 %v3079
    %vm3111 = vweird.f32 %v3104
    %vm3112 = vmor %vm3110, %vm3111
    %v3113 = vsel %vm3112, %v3104, %v3109
    %v3114 = vrsqrt.pop %v3080
    %v3115 = vmul.f32 %v3114, %v3080
    %v3116 = vmul.f32 %v3115, %v3114
    %v3117 = vmul.f32 0.5, %v3116
    %v3118 = vsub.f32 1.5, %v3117
    %v3119 = vmul.f32 %v3114, %v3118
    %vm3120 = vweird.f32 %v3080
    %vm3121 = vweird.f32 %v3114
    %vm3122 = vmor %vm3120, %vm3121
    %v3123 = vsel %vm3122, %v3114, %v3119
    %v3124 = vrsqrt.pop %v3081
    %v3125 = vmul.f32 %v3124, %v3081
    %v3126 = vmul.f32 %v3125, %v3124
    %v3127 = vmul.f32 0.5, %v3126
    %v3128 = vsub.f32 1.5, %v3127
    %v3129 = vmul.f32 %v3124, %v3128
    %vm3130 = vweird.f32 %v3081
    %vm3131 = vweird.f32 %v3124
    %vm3132 = vmor %vm3130, %vm3131
    %v3133 = vsel %vm3132, %v3124, %v3129
    %v3134 = vrsqrt.pop %v3082
    %v3135 = vmul.f32 %v3134, %v3082
    %v3136 = vmul.f32 %v3135, %v3134
    %v3137 = vmul.f32 0.5, %v3136
    %v3138 = vsub.f32 1.5, %v3137
    %v3139 = vmul.f32 %v3134, %v3138
    %vm3140 = vweird.f32 %v3082
    %vm3141 = vweird.f32 %v3134
    %vm3142 = vmor %vm3140, %vm3141
    %v3143 = vsel %vm3142, %v3134, %v3139
    %v3144 = vrsqrt.pop %v3083
    %v3145 = vmul.f32 %v3144, %v3083
    %v3146 = vmul.f32 %v3145, %v3144
    %v3147 = vmul.f32 0.5, %v3146
    %v3148 = vsub.f32 1.5, %v3147
    %v3149 = vmul.f32 %v3144, %v3148
    %vm3150 = vweird.f32 %v3083
    %vm3151 = vweird.f32 %v3144
    %vm3152 = vmor %vm3150, %vm3151
    %v3153 = vsel %vm3152, %v3144, %v3149
    %v3154 = vrsqrt.pop %v3084
    %v3155 = vmul.f32 %v3154, %v3084
    %v3156 = vmul.f32 %v3155, %v3154
    %v3157 = vmul.f32 0.5, %v3156
    %v3158 = vsub.f32 1.5, %v3157
    %v3159 = vmul.f32 %v3154, %v3158
    %vm3160 = vweird.f32 %v3084
    %vm3161 = vweird.f32 %v3154
    %vm3162 = vmor %vm3160, %vm3161
    %v3163 = vsel %vm3162, %v3154, %v3159
    %v3164 = vrsqrt.pop %v3085
    %v3165 = vmul.f32 %v3164, %v3085
    %v3166 = vmul.f32 %v3165, %v3164
    %v3167 = vmul.f32 0.5, %v3166
    %v3168 = vsub.f32 1.5, %v3167
    %v3169 = vmul.f32 %v3164, %v3168
    %vm3170 = vweird.f32 %v3085
    %vm3171 = vweird.f32 %v3164
    %vm3172 = vmor %vm3170, %vm3171
    %v3173 = vsel %vm3172, %v3164, %v3169
    %v3174 = vrsqrt.pop %v3086
    %v3175 = vmul.f32 %v3174, %v3086
    %v3176 = vmul.f32 %v3175, %v3174
    %v3177 = vmul.f32 0.5, %v3176
    %v3178 = vsub.f32 1.5, %v3177
    %v3179 = vmul.f32 %v3174, %v3178
    %vm3180 = vweird.f32 %v3086
    %vm3181 = vweird.f32 %v3174
    %vm3182 = vmor %vm3180, %vm3181
    %v3183 = vsel %vm3182, %v3174, %v3179
    %v3184 = vrsqrt.pop %v3087
    %v3185 = vmul.f32 %v3184, %v3087
    %v3186 = vmul.f32 %v3185, %v3184
    %v3187 = vmul.f32 0.5, %v3186
    %v3188 = vsub.f32 1.5, %v3187
    %v3189 = vmul.f32 %v3184, %v3188
    %vm3190 = vweird.f32 %v3087
    %vm3191 = vweird.f32 %v3184
    %vm3192 = vmor %vm3190, %vm3191
    %v3193 = vsel %vm3192, %v3184, %v3189
    %v3194 = vrsqrt.pop %v3088
    %v3195 = vmul.f32 %v3194, %v3088
    %v3196 = vmul.f32 %v3195, %v3194
    %v3197 = vmul.f32 0.5, %v3196
    %v3198 = vsub.f32 1.5, %v3197
    %v3199 = vmul.f32 %v3194, %v3198
    %vm3200 = vweird.f32 %v3088
    %vm3201 = vweird.f32 %v3194
    %vm3202 = vmor %vm3200, %vm3201
    %v3203 = vsel %vm3202, %v3194, %v3199
    %v3204 = vrsqrt.pop %v3089
    %v3205 = vmul.f32 %v3204, %v3089
    %v3206 = vmul.f32 %v3205, %v3204
    %v3207 = vmul.f32 0.5, %v3206
    %v3208 = vsub.f32 1.5, %v3207
    %v3209 = vmul.f32 %v3204, %v3208
    %vm3210 = vweird.f32 %v3089
    %vm3211 = vweird.f32 %v3204
    %vm3212 = vmor %vm3210, %vm3211
    %v3213 = vsel %vm3212, %v3204, %v3209
    %v3214 = vrsqrt.pop %v3090
    %v3215 = vmul.f32 %v3214, %v3090
    %v3216 = vmul.f32 %v3215, %v3214
    %v3217 = vmul.f32 0.5, %v3216
    %v3218 = vsub.f32 1.5, %v3217
    %v3219 = vmul.f32 %v3214, %v3218
    %vm3220 = vweird.f32 %v3090
    %vm3221 = vweird.f32 %v3214
    %vm3222 = vmor %vm3220, %vm3221
    %v3223 = vsel %vm3222, %v3214, %v3219
    %v3224 = vrsqrt.pop %v3091
    %v3225 = vmul.f32 %v3224, %v3091
    %v3226 = vmul.f32 %v3225, %v3224
    %v3227 = vmul.f32 0.5, %v3226
    %v3228 = vsub.f32 1.5, %v3227
    %v3229 = vmul.f32 %v3224, %v3228
    %vm3230 = vweird.f32 %v3091
    %vm3231 = vweird.f32 %v3224
    %vm3232 = vmor %vm3230, %vm3231
    %v3233 = vsel %vm3232, %v3224, %v3229
    %v3234 = vrsqrt.pop %v3092
    %v3235 = vmul.f32 %v3234, %v3092
    %v3236 = vmul.f32 %v3235, %v3234
    %v3237 = vmul.f32 0.5, %v3236
    %v3238 = vsub.f32 1.5, %v3237
    %v3239 = vmul.f32 %v3234, %v3238
    %vm3240 = vweird.f32 %v3092
    %vm3241 = vweird.f32 %v3234
    %vm3242 = vmor %vm3240, %vm3241
    %v3243 = vsel %vm3242, %v3234, %v3239
    %v3244 = vrsqrt.pop %v3093
    %v3245 = vmul.f32 %v3244, %v3093
    %v3246 = vmul.f32 %v3245, %v3244
    %v3247 = vmul.f32 0.5, %v3246
    %v3248 = vsub.f32 1.5, %v3247
    %v3249 = vmul.f32 %v3244, %v3248
    %vm3250 = vweird.f32 %v3093
    %vm3251 = vweird.f32 %v3244
    %vm3252 = vmor %vm3250, %vm3251
    %v3253 = vsel %vm3252, %v3244, %v3249
    %v3254 = vmul.f32 %v2982, %v3103
    %v3255 = vmul.f32 %v2983, %v3113
    %v3256 = vmul.f32 %v2984, %v3123
    %v3257 = vmul.f32 %v2985, %v3133
    %v3258 = vmul.f32 %v2986, %v3143
    %v3259 = vmul.f32 %v2987, %v3153
    %v3260 = vmul.f32 %v2988, %v3163
    %v3261 = vmul.f32 %v2989, %v3173
    %v3262 = vmul.f32 %v2990, %v3183
    %v3263 = vmul.f32 %v2991, %v3193
    %v3264 = vmul.f32 %v2992, %v3203
    %v3265 = vmul.f32 %v2993, %v3213
    %v3266 = vmul.f32 %v2994, %v3223
    %v3267 = vmul.f32 %v2995, %v3233
    %v3268 = vmul.f32 %v2996, %v3243
    %v3269 = vmul.f32 %v2997, %v3253
    %v3271 = vperm.slane %v2916, 0
    %v3273 = vmul.f32 %v3254, %v3271
    %v3274 = vmul.f32 %v3255, %v3271
    %v3275 = vmul.f32 %v3256, %v3271
    %v3276 = vmul.f32 %v3257, %v3271
    %v3277 = vmul.f32 %v3258, %v3271
    %v3278 = vmul.f32 %v3259, %v3271
    %v3279 = vmul.f32 %v3260, %v3271
    %v3280 = vmul.f32 %v3261, %v3271
    %v3281 = vmul.f32 %v3262, %v3271
    %v3282 = vmul.f32 %v3263, %v3271
    %v3283 = vmul.f32 %v3264, %v3271
    %v3284 = vmul.f32 %v3265, %v3271
    %v3285 = vmul.f32 %v3266, %v3271
    %v3286 = vmul.f32 %v3267, %v3271
    %v3287 = vmul.f32 %v3268, %v3271
    %v3288 = vmul.f32 %v3269, %v3271
    %v3290 = vperm.slane %v2917, 0
    %v3292 = vadd.f32 %v3273, %v3290
    %v3293 = vadd.f32 %v3274, %v3290
    %v3294 = vadd.f32 %v3275, %v3290
    %v3295 = vadd.f32 %v3276, %v3290
    %v3296 = vadd.f32 %v3277, %v3290
    %v3297 = vadd.f32 %v3278, %v3290
    %v3298 = vadd.f32 %v3279, %v3290
    %v3299 = vadd.f32 %v3280, %v3290
    %v3300 = vadd.f32 %v3281, %v3290
    %v3301 = vadd.f32 %v3282, %v3290
    %v3302 = vadd.f32 %v3283, %v3290
    %v3303 = vadd.f32 %v3284, %v3290
    %v3304 = vadd.f32 %v3285, %v3290
    %v3305 = vadd.f32 %v3286, %v3290
    %v3306 = vadd.f32 %v3287, %v3290
    %v3307 = vadd.f32 %v3288, %v3290
    %v3308 = vpack.c.bf16 %v3293, %v3292
    %v3309 = vpack.c.bf16 %v3295, %v3294
    %v3310 = vpack.c.bf16 %v3297, %v3296
    %v3311 = vpack.c.bf16 %v3299, %v3298
    %v3312 = vpack.c.bf16 %v3301, %v3300
    %v3313 = vpack.c.bf16 %v3303, %v3302
    %v3314 = vpack.c.bf16 %v3305, %v3304
    %v3315 = vpack.c.bf16 %v3307, %v3306
    %v3316 = vld [vmem:[#allocation7] sm:$0xf]
    %v3317 = vld [vmem:[#allocation7 + $0x4] sm:$0xf]
    %v3318 = vld [vmem:[#allocation7 + $0x8] sm:$0xf]
    %v3319 = vld [vmem:[#allocation7 + $0xc] sm:$0xf]
    %v3320 = vld [vmem:[%s10] sm:$0x1]
    %v3322 = vperm.slane %v3320, 0
    %v3328 = vunpack.c.l.b16 %v3316
    %v3329 = vunpack.c.l.b16 %v3317
    %v3330 = vunpack.c.l.b16 %v3318
    %v3331 = vunpack.c.l.b16 %v3319
    %v3332 = vpack.c.b16 %v3329, %v3328
    %v3333 = vpack.c.b16 %v3331, %v3330
    %v3337 = vsel %vm165, %v3308, 0
    %v3340 = vsel %vm165, %v3309, 0
    %v3343 = vsel %vm165, %v3310, 0
    %v3346 = vsel %vm165, %v3311, 0
    %v3349 = vsel %vm165, %v3312, 0
    %v3352 = vsel %vm165, %v3313, 0
    %v3355 = vsel %vm165, %v3314, 0
    %v3358 = vsel %vm165, %v3315, 0
    %3360 = vmatpush.bf16.msra.mxu0 0
    %3361 = vmatpush.bf16.msra.mxu0 0
    %3362 = vmatpush.bf16.msra.mxu0 0
    %3363 = vmatpush.bf16.msra.mxu0 0
    %3364 = vmatpush.bf16.msra.mxu0 0
    %3365 = vmatpush.bf16.msra.mxu0 0
    %3366 = vmatpush.bf16.msra.mxu0 %v3333
    %3367 = vmatpush.bf16.msra.mxu0 %v3332
    %3368 = vmatmul.bf16.gmra.mxu0 %v3337
    %v3369 = vpop.f32.mrf.mxu0
    %v3370 = vadd.f32 %v3322, %v3369
    %v3371 = vpop.f32.mrf.mxu0
    %v3372 = vadd.f32 %v3322, %v3371
    %3373 = vmatmul.bf16.gmra.mxu0 %v3340
    %v3374 = vpop.f32.mrf.mxu0
    %v3375 = vadd.f32 %v3322, %v3374
    %v3376 = vpop.f32.mrf.mxu0
    %v3377 = vadd.f32 %v3322, %v3376
    %3378 = vmatmul.bf16.gmra.mxu0 %v3343
    %v3379 = vpop.f32.mrf.mxu0
    %v3380 = vadd.f32 %v3322, %v3379
    %v3381 = vpop.f32.mrf.mxu0
    %v3382 = vadd.f32 %v3322, %v3381
    %3383 = vmatmul.bf16.gmra.mxu0 %v3346
    %v3384 = vpop.f32.mrf.mxu0
    %v3385 = vadd.f32 %v3322, %v3384
    %v3386 = vpop.f32.mrf.mxu0
    %v3387 = vadd.f32 %v3322, %v3386
    %3388 = vmatmul.bf16.gmra.mxu0 %v3349
    %v3389 = vpop.f32.mrf.mxu0
    %v3390 = vadd.f32 %v3322, %v3389
    %v3391 = vpop.f32.mrf.mxu0
    %v3392 = vadd.f32 %v3322, %v3391
    %3393 = vmatmul.bf16.gmra.mxu0 %v3352
    %v3394 = vpop.f32.mrf.mxu0
    %v3395 = vadd.f32 %v3322, %v3394
    %v3396 = vpop.f32.mrf.mxu0
    %v3397 = vadd.f32 %v3322, %v3396
    %3398 = vmatmul.bf16.gmra.mxu0 %v3355
    %v3399 = vpop.f32.mrf.mxu0
    %v3400 = vadd.f32 %v3322, %v3399
    %v3401 = vpop.f32.mrf.mxu0
    %v3402 = vadd.f32 %v3322, %v3401
    %3403 = vmatmul.bf16.gmra.mxu0 %v3358
    %v3404 = vpop.f32.mrf.mxu0
    %v3405 = vadd.f32 %v3322, %v3404
    %v3406 = vpop.f32.mrf.mxu0
    %v3407 = vadd.f32 %v3322, %v3406
    %3408 = vdwg.mxu0
    %v3409 = vmul.f32 %v3370, 0.5
    %v3410 = vmul.f32 %v3372, 0.5
    %v3411 = vmul.f32 %v3375, 0.5
    %v3412 = vmul.f32 %v3377, 0.5
    %v3413 = vmul.f32 %v3380, 0.5
    %v3414 = vmul.f32 %v3382, 0.5
    %v3415 = vmul.f32 %v3385, 0.5
    %v3416 = vmul.f32 %v3387, 0.5
    %v3417 = vmul.f32 %v3390, 0.5
    %v3418 = vmul.f32 %v3392, 0.5
    %v3419 = vmul.f32 %v3395, 0.5
    %v3420 = vmul.f32 %v3397, 0.5
    %v3421 = vmul.f32 %v3400, 0.5
    %v3422 = vmul.f32 %v3402, 0.5
    %v3423 = vmul.f32 %v3405, 0.5
    %v3424 = vmul.f32 %v3407, 0.5
    %v3425 = vmul.f32 %v3370, 0.70710677
    %v3426 = vmul.f32 %v3372, 0.70710677
    %v3427 = vmul.f32 %v3375, 0.70710677
    %v3428 = vmul.f32 %v3377, 0.70710677
    %v3429 = vmul.f32 %v3380, 0.70710677
    %v3430 = vmul.f32 %v3382, 0.70710677
    %v3431 = vmul.f32 %v3385, 0.70710677
    %v3432 = vmul.f32 %v3387, 0.70710677
    %v3433 = vmul.f32 %v3390, 0.70710677
    %v3434 = vmul.f32 %v3392, 0.70710677
    %v3435 = vmul.f32 %v3395, 0.70710677
    %v3436 = vmul.f32 %v3397, 0.70710677
    %v3437 = vmul.f32 %v3400, 0.70710677
    %v3438 = vmul.f32 %v3402, 0.70710677
    %v3439 = vmul.f32 %v3405, 0.70710677
    %v3440 = vmul.f32 %v3407, 0.70710677
    %v3441 = vand.u32 2147483647, %v3425
    %v3442 = vand.u32 2147483647, %v3426
    %v3443 = vand.u32 2147483647, %v3427
    %v3444 = vand.u32 2147483647, %v3428
    %v3445 = vand.u32 2147483647, %v3429
    %v3446 = vand.u32 2147483647, %v3430
    %v3447 = vand.u32 2147483647, %v3431
    %v3448 = vand.u32 2147483647, %v3432
    %v3449 = vand.u32 2147483647, %v3433
    %v3450 = vand.u32 2147483647, %v3434
    %v3451 = vand.u32 2147483647, %v3435
    %v3452 = vand.u32 2147483647, %v3436
    %v3453 = vand.u32 2147483647, %v3437
    %v3454 = vand.u32 2147483647, %v3438
    %v3455 = vand.u32 2147483647, %v3439
    %v3456 = vand.u32 2147483647, %v3440
    %v3457 = vmul.f32 %v3441, 0.3275911
    %v3458 = vmul.f32 %v3442, 0.3275911
    %v3459 = vmul.f32 %v3443, 0.3275911
    %v3460 = vmul.f32 %v3444, 0.3275911
    %v3461 = vmul.f32 %v3445, 0.3275911
    %v3462 = vmul.f32 %v3446, 0.3275911
    %v3463 = vmul.f32 %v3447, 0.3275911
    %v3464 = vmul.f32 %v3448, 0.3275911
    %v3465 = vmul.f32 %v3449, 0.3275911
    %v3466 = vmul.f32 %v3450, 0.3275911
    %v3467 = vmul.f32 %v3451, 0.3275911
    %v3468 = vmul.f32 %v3452, 0.3275911
    %v3469 = vmul.f32 %v3453, 0.3275911
    %v3470 = vmul.f32 %v3454, 0.3275911
    %v3471 = vmul.f32 %v3455, 0.3275911
    %v3472 = vmul.f32 %v3456, 0.3275911
    %v3473 = vadd.f32 %v3457, 1.0
    %v3474 = vadd.f32 %v3458, 1.0
    %v3475 = vadd.f32 %v3459, 1.0
    %v3476 = vadd.f32 %v3460, 1.0
    %v3477 = vadd.f32 %v3461, 1.0
    %v3478 = vadd.f32 %v3462, 1.0
    %v3479 = vadd.f32 %v3463, 1.0
    %v3480 = vadd.f32 %v3464, 1.0
    %v3481 = vadd.f32 %v3465, 1.0
    %v3482 = vadd.f32 %v3466, 1.0
    %v3483 = vadd.f32 %v3467, 1.0
    %v3484 = vadd.f32 %v3468, 1.0
    %v3485 = vadd.f32 %v3469, 1.0
    %v3486 = vadd.f32 %v3470, 1.0
    %v3487 = vadd.f32 %v3471, 1.0
    %v3488 = vadd.f32 %v3472, 1.0
    %v3489 = vrcp.pop %v3473
    %v3490 = vmul.f32 %v3473, %v3489
    %v3491 = vsub.f32 1.0, %v3490
    %v3492 = vmul.f32 %v3489, %v3491
    %v3493 = vadd.f32 %v3489, %v3492
    %vm3494 = vweird.f32 %v3473
    %vm3495 = vweird.f32 %v3489
    %vm3496 = vmor %vm3494, %vm3495
    %v3497 = vsel %vm3496, %v3489, %v3493
    %v3498 = vand.u32 2147483647, %v3473
    %vm3499 = vcmp.eq.f32.partialorder %v3498, 8.507059e+37
    %v3500 = vand.u32 %v3473, 2147483648
    %v3501 = vor.u32 1.1754944e-38, %v3500
    %v3502 = vsel %vm3499, %v3501, %v3497
    %v3503 = vmul.f32 1.0, %v3502
    %v3504 = vrcp.pop %v3474
    %v3505 = vmul.f32 %v3474, %v3504
    %v3506 = vsub.f32 1.0, %v3505
    %v3507 = vmul.f32 %v3504, %v3506
    %v3508 = vadd.f32 %v3504, %v3507
    %vm3509 = vweird.f32 %v3474
    %vm3510 = vweird.f32 %v3504
    %vm3511 = vmor %vm3509, %vm3510
    %v3512 = vsel %vm3511, %v3504, %v3508
    %v3513 = vand.u32 2147483647, %v3474
    %vm3514 = vcmp.eq.f32.partialorder %v3513, 8.507059e+37
    %v3515 = vand.u32 %v3474, 2147483648
    %v3516 = vor.u32 1.1754944e-38, %v3515
    %v3517 = vsel %vm3514, %v3516, %v3512
    %v3518 = vmul.f32 1.0, %v3517
    %v3519 = vrcp.pop %v3475
    %v3520 = vmul.f32 %v3475, %v3519
    %v3521 = vsub.f32 1.0, %v3520
    %v3522 = vmul.f32 %v3519, %v3521
    %v3523 = vadd.f32 %v3519, %v3522
    %vm3524 = vweird.f32 %v3475
    %vm3525 = vweird.f32 %v3519
    %vm3526 = vmor %vm3524, %vm3525
    %v3527 = vsel %vm3526, %v3519, %v3523
    %v3528 = vand.u32 2147483647, %v3475
    %vm3529 = vcmp.eq.f32.partialorder %v3528, 8.507059e+37
    %v3530 = vand.u32 %v3475, 2147483648
    %v3531 = vor.u32 1.1754944e-38, %v3530
    %v3532 = vsel %vm3529, %v3531, %v3527
    %v3533 = vmul.f32 1.0, %v3532
    %v3534 = vrcp.pop %v3476
    %v3535 = vmul.f32 %v3476, %v3534
    %v3536 = vsub.f32 1.0, %v3535
    %v3537 = vmul.f32 %v3534, %v3536
    %v3538 = vadd.f32 %v3534, %v3537
    %vm3539 = vweird.f32 %v3476
    %vm3540 = vweird.f32 %v3534
    %vm3541 = vmor %vm3539, %vm3540
    %v3542 = vsel %vm3541, %v3534, %v3538
    %v3543 = vand.u32 2147483647, %v3476
    %vm3544 = vcmp.eq.f32.partialorder %v3543, 8.507059e+37
    %v3545 = vand.u32 %v3476, 2147483648
    %v3546 = vor.u32 1.1754944e-38, %v3545
    %v3547 = vsel %vm3544, %v3546, %v3542
    %v3548 = vmul.f32 1.0, %v3547
    %v3549 = vrcp.pop %v3477
    %v3550 = vmul.f32 %v3477, %v3549
    %v3551 = vsub.f32 1.0, %v3550
    %v3552 = vmul.f32 %v3549, %v3551
    %v3553 = vadd.f32 %v3549, %v3552
    %vm3554 = vweird.f32 %v3477
    %vm3555 = vweird.f32 %v3549
    %vm3556 = vmor %vm3554, %vm3555
    %v3557 = vsel %vm3556, %v3549, %v3553
    %v3558 = vand.u32 2147483647, %v3477
    %vm3559 = vcmp.eq.f32.partialorder %v3558, 8.507059e+37
    %v3560 = vand.u32 %v3477, 2147483648
    %v3561 = vor.u32 1.1754944e-38, %v3560
    %v3562 = vsel %vm3559, %v3561, %v3557
    %v3563 = vmul.f32 1.0, %v3562
    %v3564 = vrcp.pop %v3478
    %v3565 = vmul.f32 %v3478, %v3564
    %v3566 = vsub.f32 1.0, %v3565
    %v3567 = vmul.f32 %v3564, %v3566
    %v3568 = vadd.f32 %v3564, %v3567
    %vm3569 = vweird.f32 %v3478
    %vm3570 = vweird.f32 %v3564
    %vm3571 = vmor %vm3569, %vm3570
    %v3572 = vsel %vm3571, %v3564, %v3568
    %v3573 = vand.u32 2147483647, %v3478
    %vm3574 = vcmp.eq.f32.partialorder %v3573, 8.507059e+37
    %v3575 = vand.u32 %v3478, 2147483648
    %v3576 = vor.u32 1.1754944e-38, %v3575
    %v3577 = vsel %vm3574, %v3576, %v3572
    %v3578 = vmul.f32 1.0, %v3577
    %v3579 = vrcp.pop %v3479
    %v3580 = vmul.f32 %v3479, %v3579
    %v3581 = vsub.f32 1.0, %v3580
    %v3582 = vmul.f32 %v3579, %v3581
    %v3583 = vadd.f32 %v3579, %v3582
    %vm3584 = vweird.f32 %v3479
    %vm3585 = vweird.f32 %v3579
    %vm3586 = vmor %vm3584, %vm3585
    %v3587 = vsel %vm3586, %v3579, %v3583
    %v3588 = vand.u32 2147483647, %v3479
    %vm3589 = vcmp.eq.f32.partialorder %v3588, 8.507059e+37
    %v3590 = vand.u32 %v3479, 2147483648
    %v3591 = vor.u32 1.1754944e-38, %v3590
    %v3592 = vsel %vm3589, %v3591, %v3587
    %v3593 = vmul.f32 1.0, %v3592
    %v3594 = vrcp.pop %v3480
    %v3595 = vmul.f32 %v3480, %v3594
    %v3596 = vsub.f32 1.0, %v3595
    %v3597 = vmul.f32 %v3594, %v3596
    %v3598 = vadd.f32 %v3594, %v3597
    %vm3599 = vweird.f32 %v3480
    %vm3600 = vweird.f32 %v3594
    %vm3601 = vmor %vm3599, %vm3600
    %v3602 = vsel %vm3601, %v3594, %v3598
    %v3603 = vand.u32 2147483647, %v3480
    %vm3604 = vcmp.eq.f32.partialorder %v3603, 8.507059e+37
    %v3605 = vand.u32 %v3480, 2147483648
    %v3606 = vor.u32 1.1754944e-38, %v3605
    %v3607 = vsel %vm3604, %v3606, %v3602
    %v3608 = vmul.f32 1.0, %v3607
    %v3609 = vrcp.pop %v3481
    %v3610 = vmul.f32 %v3481, %v3609
    %v3611 = vsub.f32 1.0, %v3610
    %v3612 = vmul.f32 %v3609, %v3611
    %v3613 = vadd.f32 %v3609, %v3612
    %vm3614 = vweird.f32 %v3481
    %vm3615 = vweird.f32 %v3609
    %vm3616 = vmor %vm3614, %vm3615
    %v3617 = vsel %vm3616, %v3609, %v3613
    %v3618 = vand.u32 2147483647, %v3481
    %vm3619 = vcmp.eq.f32.partialorder %v3618, 8.507059e+37
    %v3620 = vand.u32 %v3481, 2147483648
    %v3621 = vor.u32 1.1754944e-38, %v3620
    %v3622 = vsel %vm3619, %v3621, %v3617
    %v3623 = vmul.f32 1.0, %v3622
    %v3624 = vrcp.pop %v3482
    %v3625 = vmul.f32 %v3482, %v3624
    %v3626 = vsub.f32 1.0, %v3625
    %v3627 = vmul.f32 %v3624, %v3626
    %v3628 = vadd.f32 %v3624, %v3627
    %vm3629 = vweird.f32 %v3482
    %vm3630 = vweird.f32 %v3624
    %vm3631 = vmor %vm3629, %vm3630
    %v3632 = vsel %vm3631, %v3624, %v3628
    %v3633 = vand.u32 2147483647, %v3482
    %vm3634 = vcmp.eq.f32.partialorder %v3633, 8.507059e+37
    %v3635 = vand.u32 %v3482, 2147483648
    %v3636 = vor.u32 1.1754944e-38, %v3635
    %v3637 = vsel %vm3634, %v3636, %v3632
    %v3638 = vmul.f32 1.0, %v3637
    %v3639 = vrcp.pop %v3483
    %v3640 = vmul.f32 %v3483, %v3639
    %v3641 = vsub.f32 1.0, %v3640
    %v3642 = vmul.f32 %v3639, %v3641
    %v3643 = vadd.f32 %v3639, %v3642
    %vm3644 = vweird.f32 %v3483
    %vm3645 = vweird.f32 %v3639
    %vm3646 = vmor %vm3644, %vm3645
    %v3647 = vsel %vm3646, %v3639, %v3643
    %v3648 = vand.u32 2147483647, %v3483
    %vm3649 = vcmp.eq.f32.partialorder %v3648, 8.507059e+37
    %v3650 = vand.u32 %v3483, 2147483648
    %v3651 = vor.u32 1.1754944e-38, %v3650
    %v3652 = vsel %vm3649, %v3651, %v3647
    %v3653 = vmul.f32 1.0, %v3652
    %v3654 = vrcp.pop %v3484
    %v3655 = vmul.f32 %v3484, %v3654
    %v3656 = vsub.f32 1.0, %v3655
    %v3657 = vmul.f32 %v3654, %v3656
    %v3658 = vadd.f32 %v3654, %v3657
    %vm3659 = vweird.f32 %v3484
    %vm3660 = vweird.f32 %v3654
    %vm3661 = vmor %vm3659, %vm3660
    %v3662 = vsel %vm3661, %v3654, %v3658
    %v3663 = vand.u32 2147483647, %v3484
    %vm3664 = vcmp.eq.f32.partialorder %v3663, 8.507059e+37
    %v3665 = vand.u32 %v3484, 2147483648
    %v3666 = vor.u32 1.1754944e-38, %v3665
    %v3667 = vsel %vm3664, %v3666, %v3662
    %v3668 = vmul.f32 1.0, %v3667
    %v3669 = vrcp.pop %v3485
    %v3670 = vmul.f32 %v3485, %v3669
    %v3671 = vsub.f32 1.0, %v3670
    %v3672 = vmul.f32 %v3669, %v3671
    %v3673 = vadd.f32 %v3669, %v3672
    %vm3674 = vweird.f32 %v3485
    %vm3675 = vweird.f32 %v3669
    %vm3676 = vmor %vm3674, %vm3675
    %v3677 = vsel %vm3676, %v3669, %v3673
    %v3678 = vand.u32 2147483647, %v3485
    %vm3679 = vcmp.eq.f32.partialorder %v3678, 8.507059e+37
    %v3680 = vand.u32 %v3485, 2147483648
    %v3681 = vor.u32 1.1754944e-38, %v3680
    %v3682 = vsel %vm3679, %v3681, %v3677
    %v3683 = vmul.f32 1.0, %v3682
    %v3684 = vrcp.pop %v3486
    %v3685 = vmul.f32 %v3486, %v3684
    %v3686 = vsub.f32 1.0, %v3685
    %v3687 = vmul.f32 %v3684, %v3686
    %v3688 = vadd.f32 %v3684, %v3687
    %vm3689 = vweird.f32 %v3486
    %vm3690 = vweird.f32 %v3684
    %vm3691 = vmor %vm3689, %vm3690
    %v3692 = vsel %vm3691, %v3684, %v3688
    %v3693 = vand.u32 2147483647, %v3486
    %vm3694 = vcmp.eq.f32.partialorder %v3693, 8.507059e+37
    %v3695 = vand.u32 %v3486, 2147483648
    %v3696 = vor.u32 1.1754944e-38, %v3695
    %v3697 = vsel %vm3694, %v3696, %v3692
    %v3698 = vmul.f32 1.0, %v3697
    %v3699 = vrcp.pop %v3487
    %v3700 = vmul.f32 %v3487, %v3699
    %v3701 = vsub.f32 1.0, %v3700
    %v3702 = vmul.f32 %v3699, %v3701
    %v3703 = vadd.f32 %v3699, %v3702
    %vm3704 = vweird.f32 %v3487
    %vm3705 = vweird.f32 %v3699
    %vm3706 = vmor %vm3704, %vm3705
    %v3707 = vsel %vm3706, %v3699, %v3703
    %v3708 = vand.u32 2147483647, %v3487
    %vm3709 = vcmp.eq.f32.partialorder %v3708, 8.507059e+37
    %v3710 = vand.u32 %v3487, 2147483648
    %v3711 = vor.u32 1.1754944e-38, %v3710
    %v3712 = vsel %vm3709, %v3711, %v3707
    %v3713 = vmul.f32 1.0, %v3712
    %v3714 = vrcp.pop %v3488
    %v3715 = vmul.f32 %v3488, %v3714
    %v3716 = vsub.f32 1.0, %v3715
    %v3717 = vmul.f32 %v3714, %v3716
    %v3718 = vadd.f32 %v3714, %v3717
    %vm3719 = vweird.f32 %v3488
    %vm3720 = vweird.f32 %v3714
    %vm3721 = vmor %vm3719, %vm3720
    %v3722 = vsel %vm3721, %v3714, %v3718
    %v3723 = vand.u32 2147483647, %v3488
    %vm3724 = vcmp.eq.f32.partialorder %v3723, 8.507059e+37
    %v3725 = vand.u32 %v3488, 2147483648
    %v3726 = vor.u32 1.1754944e-38, %v3725
    %v3727 = vsel %vm3724, %v3726, %v3722
    %v3728 = vmul.f32 1.0, %v3727
    %v3729 = vmul.f32 %v3503, 1.0614054
    %v3730 = vmul.f32 %v3518, 1.0614054
    %v3731 = vmul.f32 %v3533, 1.0614054
    %v3732 = vmul.f32 %v3548, 1.0614054
    %v3733 = vmul.f32 %v3563, 1.0614054
    %v3734 = vmul.f32 %v3578, 1.0614054
    %v3735 = vmul.f32 %v3593, 1.0614054
    %v3736 = vmul.f32 %v3608, 1.0614054
    %v3737 = vmul.f32 %v3623, 1.0614054
    %v3738 = vmul.f32 %v3638, 1.0614054
    %v3739 = vmul.f32 %v3653, 1.0614054
    %v3740 = vmul.f32 %v3668, 1.0614054
    %v3741 = vmul.f32 %v3683, 1.0614054
    %v3742 = vmul.f32 %v3698, 1.0614054
    %v3743 = vmul.f32 %v3713, 1.0614054
    %v3744 = vmul.f32 %v3728, 1.0614054
    %v3745 = vadd.f32 %v3729, -1.4531521
    %v3746 = vadd.f32 %v3730, -1.4531521
    %v3747 = vadd.f32 %v3731, -1.4531521
    %v3748 = vadd.f32 %v3732, -1.4531521
    %v3749 = vadd.f32 %v3733, -1.4531521
    %v3750 = vadd.f32 %v3734, -1.4531521
    %v3751 = vadd.f32 %v3735, -1.4531521
    %v3752 = vadd.f32 %v3736, -1.4531521
    %v3753 = vadd.f32 %v3737, -1.4531521
    %v3754 = vadd.f32 %v3738, -1.4531521
    %v3755 = vadd.f32 %v3739, -1.4531521
    %v3756 = vadd.f32 %v3740, -1.4531521
    %v3757 = vadd.f32 %v3741, -1.4531521
    %v3758 = vadd.f32 %v3742, -1.4531521
    %v3759 = vadd.f32 %v3743, -1.4531521
    %v3760 = vadd.f32 %v3744, -1.4531521
    %v3761 = vmul.f32 %v3745, %v3503
    %v3762 = vmul.f32 %v3746, %v3518
    %v3763 = vmul.f32 %v3747, %v3533
    %v3764 = vmul.f32 %v3748, %v3548
    %v3765 = vmul.f32 %v3749, %v3563
    %v3766 = vmul.f32 %v3750, %v3578
    %v3767 = vmul.f32 %v3751, %v3593
    %v3768 = vmul.f32 %v3752, %v3608
    %v3769 = vmul.f32 %v3753, %v3623
    %v3770 = vmul.f32 %v3754, %v3638
    %v3771 = vmul.f32 %v3755, %v3653
    %v3772 = vmul.f32 %v3756, %v3668
    %v3773 = vmul.f32 %v3757, %v3683
    %v3774 = vmul.f32 %v3758, %v3698
    %v3775 = vmul.f32 %v3759, %v3713
    %v3776 = vmul.f32 %v3760, %v3728
    %v3777 = vadd.f32 %v3761, 1.4214138
    %v3778 = vadd.f32 %v3762, 1.4214138
    %v3779 = vadd.f32 %v3763, 1.4214138
    %v3780 = vadd.f32 %v3764, 1.4214138
    %v3781 = vadd.f32 %v3765, 1.4214138
    %v3782 = vadd.f32 %v3766, 1.4214138
    %v3783 = vadd.f32 %v3767, 1.4214138
    %v3784 = vadd.f32 %v3768, 1.4214138
    %v3785 = vadd.f32 %v3769, 1.4214138
    %v3786 = vadd.f32 %v3770, 1.4214138
    %v3787 = vadd.f32 %v3771, 1.4214138
    %v3788 = vadd.f32 %v3772, 1.4214138
    %v3789 = vadd.f32 %v3773, 1.4214138
    %v3790 = vadd.f32 %v3774, 1.4214138
    %v3791 = vadd.f32 %v3775, 1.4214138
    %v3792 = vadd.f32 %v3776, 1.4214138
    %v3793 = vmul.f32 %v3777, %v3503
    %v3794 = vmul.f32 %v3778, %v3518
    %v3795 = vmul.f32 %v3779, %v3533
    %v3796 = vmul.f32 %v3780, %v3548
    %v3797 = vmul.f32 %v3781, %v3563
    %v3798 = vmul.f32 %v3782, %v3578
    %v3799 = vmul.f32 %v3783, %v3593
    %v3800 = vmul.f32 %v3784, %v3608
    %v3801 = vmul.f32 %v3785, %v3623
    %v3802 = vmul.f32 %v3786, %v3638
    %v3803 = vmul.f32 %v3787, %v3653
    %v3804 = vmul.f32 %v3788, %v3668
    %v3805 = vmul.f32 %v3789, %v3683
    %v3806 = vmul.f32 %v3790, %v3698
    %v3807 = vmul.f32 %v3791, %v3713
    %v3808 = vmul.f32 %v3792, %v3728
    %v3809 = vadd.f32 %v3793, -0.28449672
    %v3810 = vadd.f32 %v3794, -0.28449672
    %v3811 = vadd.f32 %v3795, -0.28449672
    %v3812 = vadd.f32 %v3796, -0.28449672
    %v3813 = vadd.f32 %v3797, -0.28449672
    %v3814 = vadd.f32 %v3798, -0.28449672
    %v3815 = vadd.f32 %v3799, -0.28449672
    %v3816 = vadd.f32 %v3800, -0.28449672
    %v3817 = vadd.f32 %v3801, -0.28449672
    %v3818 = vadd.f32 %v3802, -0.28449672
    %v3819 = vadd.f32 %v3803, -0.28449672
    %v3820 = vadd.f32 %v3804, -0.28449672
    %v3821 = vadd.f32 %v3805, -0.28449672
    %v3822 = vadd.f32 %v3806, -0.28449672
    %v3823 = vadd.f32 %v3807, -0.28449672
    %v3824 = vadd.f32 %v3808, -0.28449672
    %v3825 = vmul.f32 %v3809, %v3503
    %v3826 = vmul.f32 %v3810, %v3518
    %v3827 = vmul.f32 %v3811, %v3533
    %v3828 = vmul.f32 %v3812, %v3548
    %v3829 = vmul.f32 %v3813, %v3563
    %v3830 = vmul.f32 %v3814, %v3578
    %v3831 = vmul.f32 %v3815, %v3593
    %v3832 = vmul.f32 %v3816, %v3608
    %v3833 = vmul.f32 %v3817, %v3623
    %v3834 = vmul.f32 %v3818, %v3638
    %v3835 = vmul.f32 %v3819, %v3653
    %v3836 = vmul.f32 %v3820, %v3668
    %v3837 = vmul.f32 %v3821, %v3683
    %v3838 = vmul.f32 %v3822, %v3698
    %v3839 = vmul.f32 %v3823, %v3713
    %v3840 = vmul.f32 %v3824, %v3728
    %v3841 = vadd.f32 %v3825, 0.2548296
    %v3842 = vadd.f32 %v3826, 0.2548296
    %v3843 = vadd.f32 %v3827, 0.2548296
    %v3844 = vadd.f32 %v3828, 0.2548296
    %v3845 = vadd.f32 %v3829, 0.2548296
    %v3846 = vadd.f32 %v3830, 0.2548296
    %v3847 = vadd.f32 %v3831, 0.2548296
    %v3848 = vadd.f32 %v3832, 0.2548296
    %v3849 = vadd.f32 %v3833, 0.2548296
    %v3850 = vadd.f32 %v3834, 0.2548296
    %v3851 = vadd.f32 %v3835, 0.2548296
    %v3852 = vadd.f32 %v3836, 0.2548296
    %v3853 = vadd.f32 %v3837, 0.2548296
    %v3854 = vadd.f32 %v3838, 0.2548296
    %v3855 = vadd.f32 %v3839, 0.2548296
    %v3856 = vadd.f32 %v3840, 0.2548296
    %v3857 = vmul.f32 %v3841, %v3503
    %v3858 = vmul.f32 %v3842, %v3518
    %v3859 = vmul.f32 %v3843, %v3533
    %v3860 = vmul.f32 %v3844, %v3548
    %v3861 = vmul.f32 %v3845, %v3563
    %v3862 = vmul.f32 %v3846, %v3578
    %v3863 = vmul.f32 %v3847, %v3593
    %v3864 = vmul.f32 %v3848, %v3608
    %v3865 = vmul.f32 %v3849, %v3623
    %v3866 = vmul.f32 %v3850, %v3638
    %v3867 = vmul.f32 %v3851, %v3653
    %v3868 = vmul.f32 %v3852, %v3668
    %v3869 = vmul.f32 %v3853, %v3683
    %v3870 = vmul.f32 %v3854, %v3698
    %v3871 = vmul.f32 %v3855, %v3713
    %v3872 = vmul.f32 %v3856, %v3728
    %v3873 = vsub.f32 0.0, %v3441
    %v3874 = vsub.f32 0.0, %v3442
    %v3875 = vsub.f32 0.0, %v3443
    %v3876 = vsub.f32 0.0, %v3444
    %v3877 = vsub.f32 0.0, %v3445
    %v3878 = vsub.f32 0.0, %v3446
    %v3879 = vsub.f32 0.0, %v3447
    %v3880 = vsub.f32 0.0, %v3448
    %v3881 = vsub.f32 0.0, %v3449
    %v3882 = vsub.f32 0.0, %v3450
    %v3883 = vsub.f32 0.0, %v3451
    %v3884 = vsub.f32 0.0, %v3452
    %v3885 = vsub.f32 0.0, %v3453
    %v3886 = vsub.f32 0.0, %v3454
    %v3887 = vsub.f32 0.0, %v3455
    %v3888 = vsub.f32 0.0, %v3456
    %v3889 = vmul.f32 %v3873, %v3441
    %v3890 = vmul.f32 %v3874, %v3442
    %v3891 = vmul.f32 %v3875, %v3443
    %v3892 = vmul.f32 %v3876, %v3444
    %v3893 = vmul.f32 %v3877, %v3445
    %v3894 = vmul.f32 %v3878, %v3446
    %v3895 = vmul.f32 %v3879, %v3447
    %v3896 = vmul.f32 %v3880, %v3448
    %v3897 = vmul.f32 %v3881, %v3449
    %v3898 = vmul.f32 %v3882, %v3450
    %v3899 = vmul.f32 %v3883, %v3451
    %v3900 = vmul.f32 %v3884, %v3452
    %v3901 = vmul.f32 %v3885, %v3453
    %v3902 = vmul.f32 %v3886, %v3454
    %v3903 = vmul.f32 %v3887, %v3455
    %v3904 = vmul.f32 %v3888, %v3456
    %v3905 = vmul.f32 %v3889, 1.442695
    %v3906 = vpow.pop %v3905
    %v3907 = vmul.f32 %v3890, 1.442695
    %v3908 = vpow.pop %v3907
    %v3909 = vmul.f32 %v3891, 1.442695
    %v3910 = vpow.pop %v3909
    %v3911 = vmul.f32 %v3892, 1.442695
    %v3912 = vpow.pop %v3911
    %v3913 = vmul.f32 %v3893, 1.442695
    %v3914 = vpow.pop %v3913
    %v3915 = vmul.f32 %v3894, 1.442695
    %v3916 = vpow.pop %v3915
    %v3917 = vmul.f32 %v3895, 1.442695
    %v3918 = vpow.pop %v3917
    %v3919 = vmul.f32 %v3896, 1.442695
    %v3920 = vpow.pop %v3919
    %v3921 = vmul.f32 %v3897, 1.442695
    %v3922 = vpow.pop %v3921
    %v3923 = vmul.f32 %v3898, 1.442695
    %v3924 = vpow.pop %v3923
    %v3925 = vmul.f32 %v3899, 1.442695
    %v3926 = vpow.pop %v3925
    %v3927 = vmul.f32 %v3900, 1.442695
    %v3928 = vpow.pop %v3927
    %v3929 = vmul.f32 %v3901, 1.442695
    %v3930 = vpow.pop %v3929
    %v3931 = vmul.f32 %v3902, 1.442695
    %v3932 = vpow.pop %v3931
    %v3933 = vmul.f32 %v3903, 1.442695
    %v3934 = vpow.pop %v3933
    %v3935 = vmul.f32 %v3904, 1.442695
    %v3936 = vpow.pop %v3935
    %v3937 = vmul.f32 %v3857, %v3906
    %v3938 = vmul.f32 %v3858, %v3908
    %v3939 = vmul.f32 %v3859, %v3910
    %v3940 = vmul.f32 %v3860, %v3912
    %v3941 = vmul.f32 %v3861, %v3914
    %v3942 = vmul.f32 %v3862, %v3916
    %v3943 = vmul.f32 %v3863, %v3918
    %v3944 = vmul.f32 %v3864, %v3920
    %v3945 = vmul.f32 %v3865, %v3922
    %v3946 = vmul.f32 %v3866, %v3924
    %v3947 = vmul.f32 %v3867, %v3926
    %v3948 = vmul.f32 %v3868, %v3928
    %v3949 = vmul.f32 %v3869, %v3930
    %v3950 = vmul.f32 %v3870, %v3932
    %v3951 = vmul.f32 %v3871, %v3934
    %v3952 = vmul.f32 %v3872, %v3936
    %v3953 = vsub.f32 1.0, %v3937
    %v3954 = vsub.f32 1.0, %v3938
    %v3955 = vsub.f32 1.0, %v3939
    %v3956 = vsub.f32 1.0, %v3940
    %v3957 = vsub.f32 1.0, %v3941
    %v3958 = vsub.f32 1.0, %v3942
    %v3959 = vsub.f32 1.0, %v3943
    %v3960 = vsub.f32 1.0, %v3944
    %v3961 = vsub.f32 1.0, %v3945
    %v3962 = vsub.f32 1.0, %v3946
    %v3963 = vsub.f32 1.0, %v3947
    %v3964 = vsub.f32 1.0, %v3948
    %v3965 = vsub.f32 1.0, %v3949
    %v3966 = vsub.f32 1.0, %v3950
    %v3967 = vsub.f32 1.0, %v3951
    %v3968 = vsub.f32 1.0, %v3952
    %vm3969 = vcmp.lt.f32.partialorder %v3425, 0.0
    %vm3970 = vcmp.lt.f32.partialorder %v3426, 0.0
    %vm3971 = vcmp.lt.f32.partialorder %v3427, 0.0
    %vm3972 = vcmp.lt.f32.partialorder %v3428, 0.0
    %vm3973 = vcmp.lt.f32.partialorder %v3429, 0.0
    %vm3974 = vcmp.lt.f32.partialorder %v3430, 0.0
    %vm3975 = vcmp.lt.f32.partialorder %v3431, 0.0
    %vm3976 = vcmp.lt.f32.partialorder %v3432, 0.0
    %vm3977 = vcmp.lt.f32.partialorder %v3433, 0.0
    %vm3978 = vcmp.lt.f32.partialorder %v3434, 0.0
    %vm3979 = vcmp.lt.f32.partialorder %v3435, 0.0
    %vm3980 = vcmp.lt.f32.partialorder %v3436, 0.0
    %vm3981 = vcmp.lt.f32.partialorder %v3437, 0.0
    %vm3982 = vcmp.lt.f32.partialorder %v3438, 0.0
    %vm3983 = vcmp.lt.f32.partialorder %v3439, 0.0
    %vm3984 = vcmp.lt.f32.partialorder %v3440, 0.0
    %v3985 = vsub.f32 0.0, %v3953
    %v3986 = vsub.f32 0.0, %v3954
    %v3987 = vsub.f32 0.0, %v3955
    %v3988 = vsub.f32 0.0, %v3956
    %v3989 = vsub.f32 0.0, %v3957
    %v3990 = vsub.f32 0.0, %v3958
    %v3991 = vsub.f32 0.0, %v3959
    %v3992 = vsub.f32 0.0, %v3960
    %v3993 = vsub.f32 0.0, %v3961
    %v3994 = vsub.f32 0.0, %v3962
    %v3995 = vsub.f32 0.0, %v3963
    %v3996 = vsub.f32 0.0, %v3964
    %v3997 = vsub.f32 0.0, %v3965
    %v3998 = vsub.f32 0.0, %v3966
    %v3999 = vsub.f32 0.0, %v3967
    %v4000 = vsub.f32 0.0, %v3968
    %v4001 = vsel %vm3969, %v3985, %v3953
    %v4002 = vsel %vm3970, %v3986, %v3954
    %v4003 = vsel %vm3971, %v3987, %v3955
    %v4004 = vsel %vm3972, %v3988, %v3956
    %v4005 = vsel %vm3973, %v3989, %v3957
    %v4006 = vsel %vm3974, %v3990, %v3958
    %v4007 = vsel %vm3975, %v3991, %v3959
    %v4008 = vsel %vm3976, %v3992, %v3960
    %v4009 = vsel %vm3977, %v3993, %v3961
    %v4010 = vsel %vm3978, %v3994, %v3962
    %v4011 = vsel %vm3979, %v3995, %v3963
    %v4012 = vsel %vm3980, %v3996, %v3964
    %v4013 = vsel %vm3981, %v3997, %v3965
    %v4014 = vsel %vm3982, %v3998, %v3966
    %v4015 = vsel %vm3983, %v3999, %v3967
    %v4016 = vsel %vm3984, %v4000, %v3968
    %v4017 = vadd.f32 %v4001, 1.0
    %v4018 = vadd.f32 %v4002, 1.0
    %v4019 = vadd.f32 %v4003, 1.0
    %v4020 = vadd.f32 %v4004, 1.0
    %v4021 = vadd.f32 %v4005, 1.0
    %v4022 = vadd.f32 %v4006, 1.0
    %v4023 = vadd.f32 %v4007, 1.0
    %v4024 = vadd.f32 %v4008, 1.0
    %v4025 = vadd.f32 %v4009, 1.0
    %v4026 = vadd.f32 %v4010, 1.0
    %v4027 = vadd.f32 %v4011, 1.0
    %v4028 = vadd.f32 %v4012, 1.0
    %v4029 = vadd.f32 %v4013, 1.0
    %v4030 = vadd.f32 %v4014, 1.0
    %v4031 = vadd.f32 %v4015, 1.0
    %v4032 = vadd.f32 %v4016, 1.0
    %v4033 = vmul.f32 %v3409, %v4017
    %v4034 = vmul.f32 %v3410, %v4018
    %v4035 = vmul.f32 %v3411, %v4019
    %v4036 = vmul.f32 %v3412, %v4020
    %v4037 = vmul.f32 %v3413, %v4021
    %v4038 = vmul.f32 %v3414, %v4022
    %v4039 = vmul.f32 %v3415, %v4023
    %v4040 = vmul.f32 %v3416, %v4024
    %v4041 = vmul.f32 %v3417, %v4025
    %v4042 = vmul.f32 %v3418, %v4026
    %v4043 = vmul.f32 %v3419, %v4027
    %v4044 = vmul.f32 %v3420, %v4028
    %v4045 = vmul.f32 %v3421, %v4029
    %v4046 = vmul.f32 %v3422, %v4030
    %v4047 = vmul.f32 %v3423, %v4031
    %v4048 = vmul.f32 %v3424, %v4032
    %v4049 = vpack.c.bf16 %v4034, %v4033
    %v4050 = vpack.c.bf16 %v4036, %v4035
    %v4051 = vpack.c.bf16 %v4038, %v4037
    %v4052 = vpack.c.bf16 %v4040, %v4039
    %v4053 = vpack.c.bf16 %v4042, %v4041
    %v4054 = vpack.c.bf16 %v4044, %v4043
    %v4055 = vpack.c.bf16 %v4046, %v4045
    %v4056 = vpack.c.bf16 %v4048, %v4047
    %v4057 = vld [vmem:[%s11] sm:$0xf]
    %v4058 = vld [vmem:[%s11 + $0x4] sm:$0xf]
    %v4059 = vld [vmem:[%s11 + $0x8] sm:$0xf]
    %v4060 = vld [vmem:[%s11 + $0xc] sm:$0xf]
    %v4061 = vld [vmem:[%s11 + $0x10] sm:$0xf]
    %v4062 = vld [vmem:[%s11 + $0x14] sm:$0xf]
    %v4063 = vld [vmem:[%s11 + $0x18] sm:$0xf]
    %v4064 = vld [vmem:[%s11 + $0x1c] sm:$0xf]
    %v4065 = vld [vmem:[%s11 + $0x20] sm:$0xf]
    %v4066 = vld [vmem:[%s11 + $0x24] sm:$0xf]
    %v4067 = vld [vmem:[%s11 + $0x28] sm:$0xf]
    %v4068 = vld [vmem:[%s11 + $0x2c] sm:$0xf]
    %v4069 = vld [vmem:[%s11 + $0x30] sm:$0xf]
    %v4070 = vld [vmem:[%s11 + $0x34] sm:$0xf]
    %v4071 = vld [vmem:[%s11 + $0x38] sm:$0xf]
    %v4072 = vld [vmem:[%s11 + $0x3c] sm:$0xf]
    %v4073 = vld [vmem:[%s12] sm:$0x1]
    %v4075 = vperm.slane %v4073, 0
    %v4093 = vunpack.c.l.b16 %v4057
    %v4094 = vunpack.c.l.b16 %v4058
    %v4095 = vunpack.c.l.b16 %v4059
    %v4096 = vunpack.c.l.b16 %v4060
    %v4097 = vunpack.c.l.b16 %v4061
    %v4098 = vunpack.c.l.b16 %v4062
    %v4099 = vunpack.c.l.b16 %v4063
    %v4100 = vunpack.c.l.b16 %v4064
    %v4101 = vunpack.c.l.b16 %v4065
    %v4102 = vunpack.c.l.b16 %v4066
    %v4103 = vunpack.c.l.b16 %v4067
    %v4104 = vunpack.c.l.b16 %v4068
    %v4105 = vunpack.c.l.b16 %v4069
    %v4106 = vunpack.c.l.b16 %v4070
    %v4107 = vunpack.c.l.b16 %v4071
    %v4108 = vunpack.c.l.b16 %v4072
    %v4109 = vpack.c.b16 %v4094, %v4093
    %v4110 = vpack.c.b16 %v4096, %v4095
    %v4111 = vpack.c.b16 %v4098, %v4097
    %v4112 = vpack.c.b16 %v4100, %v4099
    %v4113 = vpack.c.b16 %v4102, %v4101
    %v4114 = vpack.c.b16 %v4104, %v4103
    %v4115 = vpack.c.b16 %v4106, %v4105
    %v4116 = vpack.c.b16 %v4108, %v4107
    %4125 = vmatpush.bf16.msra.mxu0 %v4116
    %4126 = vmatpush.bf16.msra.mxu0 %v4115
    %4127 = vmatpush.bf16.msra.mxu0 %v4114
    %4128 = vmatpush.bf16.msra.mxu0 %v4113
    %4129 = vmatpush.bf16.msra.mxu0 %v4112
    %4130 = vmatpush.bf16.msra.mxu0 %v4111
    %4131 = vmatpush.bf16.msra.mxu0 %v4110
    %4132 = vmatpush.bf16.msra.mxu0 %v4109
    %4133 = vmatmul.bf16.gmra.mxu0 %v4049
    %v4134 = vpop.f32.mrf.mxu0
    %v4135 = vadd.f32 %v4075, %v4134
    %v4136 = vpop.f32.mrf.mxu0
    %v4137 = vadd.f32 %v4075, %v4136
    %4138 = vmatmul.bf16.gmra.mxu0 %v4050
    %v4139 = vpop.f32.mrf.mxu0
    %v4140 = vadd.f32 %v4075, %v4139
    %v4141 = vpop.f32.mrf.mxu0
    %v4142 = vadd.f32 %v4075, %v4141
    %4143 = vmatmul.bf16.gmra.mxu0 %v4051
    %v4144 = vpop.f32.mrf.mxu0
    %v4145 = vadd.f32 %v4075, %v4144
    %v4146 = vpop.f32.mrf.mxu0
    %v4147 = vadd.f32 %v4075, %v4146
    %4148 = vmatmul.bf16.gmra.mxu0 %v4052
    %v4149 = vpop.f32.mrf.mxu0
    %v4150 = vadd.f32 %v4075, %v4149
    %v4151 = vpop.f32.mrf.mxu0
    %v4152 = vadd.f32 %v4075, %v4151
    %4153 = vmatmul.bf16.gmra.mxu0 %v4053
    %v4154 = vpop.f32.mrf.mxu0
    %v4155 = vadd.f32 %v4075, %v4154
    %v4156 = vpop.f32.mrf.mxu0
    %v4157 = vadd.f32 %v4075, %v4156
    %4158 = vmatmul.bf16.gmra.mxu0 %v4054
    %v4159 = vpop.f32.mrf.mxu0
    %v4160 = vadd.f32 %v4075, %v4159
    %v4161 = vpop.f32.mrf.mxu0
    %v4162 = vadd.f32 %v4075, %v4161
    %4163 = vmatmul.bf16.gmra.mxu0 %v4055
    %v4164 = vpop.f32.mrf.mxu0
    %v4165 = vadd.f32 %v4075, %v4164
    %v4166 = vpop.f32.mrf.mxu0
    %v4167 = vadd.f32 %v4075, %v4166
    %4168 = vmatmul.bf16.gmra.mxu0 %v4056
    %v4169 = vpop.f32.mrf.mxu0
    %v4170 = vadd.f32 %v4075, %v4169
    %v4171 = vpop.f32.mrf.mxu0
    %v4172 = vadd.f32 %v4075, %v4171
    %4173 = vdwg.mxu0
    %v4174 = vadd.f32 %v2900, %v4135
    %v4175 = vadd.f32 %v2901, %v4137
    %v4176 = vadd.f32 %v2902, %v4140
    %v4177 = vadd.f32 %v2903, %v4142
    %v4178 = vadd.f32 %v2904, %v4145
    %v4179 = vadd.f32 %v2905, %v4147
    %v4180 = vadd.f32 %v2906, %v4150
    %v4181 = vadd.f32 %v2907, %v4152
    %v4182 = vadd.f32 %v2908, %v4155
    %v4183 = vadd.f32 %v2909, %v4157
    %v4184 = vadd.f32 %v2910, %v4160
    %v4185 = vadd.f32 %v2911, %v4162
    %v4186 = vadd.f32 %v2912, %v4165
    %v4187 = vadd.f32 %v2913, %v4167
    %v4188 = vadd.f32 %v2914, %v4170
    %v4189 = vadd.f32 %v2915, %v4172
    %4190 = vxpose.xlu0.b32.start [1/16] %v4174, 128
    %4191 = vxpose.xlu0.b32.cont [2/16] %v4175, 128
    %4192 = vxpose.xlu0.b32.cont [3/16] %v4176, 128
    %4193 = vxpose.xlu0.b32.cont [4/16] %v4177, 128
    %4194 = vxpose.xlu0.b32.cont [5/16] %v4178, 128
    %4195 = vxpose.xlu0.b32.cont [6/16] %v4179, 128
    %4196 = vxpose.xlu0.b32.cont [7/16] %v4180, 128
    %4197 = vxpose.xlu0.b32.cont [8/16] %v4181, 128
    %4198 = vxpose.xlu0.b32.cont [9/16] 0.0, 128
    %4199 = vxpose.xlu0.b32.cont [10/16] 0.0, 128
    %4200 = vxpose.xlu0.b32.cont [11/16] 0.0, 128
    %4201 = vxpose.xlu0.b32.cont [12/16] 0.0, 128
    %4202 = vxpose.xlu0.b32.cont [13/16] 0.0, 128
    %4203 = vxpose.xlu0.b32.cont [14/16] 0.0, 128
    %4204 = vxpose.xlu0.b32.cont [15/16] 0.0, 128
    %4205 = vxpose.xlu0.b32.end [16/16] 0.0, 128
    %v4206 = vpop.trf.xlu0
    %v4207 = vpop.trf.xlu0
    %v4208 = vpop.trf.xlu0
    %v4209 = vpop.trf.xlu0
    %v4210 = vpop.trf.xlu0
    %v4211 = vpop.trf.xlu0
    %v4212 = vpop.trf.xlu0
    %v4213 = vpop.trf.xlu0
    %v4214 = vpop.trf.xlu0
    %v4215 = vpop.trf.xlu0
    %v4216 = vpop.trf.xlu0
    %v4217 = vpop.trf.xlu0
    %v4218 = vpop.trf.xlu0
    %v4219 = vpop.trf.xlu0
    %v4220 = vpop.trf.xlu0
    %v4221 = vpop.trf.xlu0
    %4222 = vxpose.xlu0.b32.start [1/16] %v4182, 128
    %4223 = vxpose.xlu0.b32.cont [2/16] %v4183, 128
    %4224 = vxpose.xlu0.b32.cont [3/16] %v4184, 128
    %4225 = vxpose.xlu0.b32.cont [4/16] %v4185, 128
    %4226 = vxpose.xlu0.b32.cont [5/16] %v4186, 128
    %4227 = vxpose.xlu0.b32.cont [6/16] %v4187, 128
    %4228 = vxpose.xlu0.b32.cont [7/16] %v4188, 128
    %4229 = vxpose.xlu0.b32.cont [8/16] %v4189, 128
    %4230 = vxpose.xlu0.b32.cont [9/16] 0.0, 128
    %4231 = vxpose.xlu0.b32.cont [10/16] 0.0, 128
    %4232 = vxpose.xlu0.b32.cont [11/16] 0.0, 128
    %4233 = vxpose.xlu0.b32.cont [12/16] 0.0, 128
    %4234 = vxpose.xlu0.b32.cont [13/16] 0.0, 128
    %4235 = vxpose.xlu0.b32.cont [14/16] 0.0, 128
    %4236 = vxpose.xlu0.b32.cont [15/16] 0.0, 128
    %4237 = vxpose.xlu0.b32.end [16/16] 0.0, 128
    %v4238 = vpop.trf.xlu0
    %v4239 = vpop.trf.xlu0
    %v4240 = vpop.trf.xlu0
    %v4241 = vpop.trf.xlu0
    %v4242 = vpop.trf.xlu0
    %v4243 = vpop.trf.xlu0
    %v4244 = vpop.trf.xlu0
    %v4245 = vpop.trf.xlu0
    %v4246 = vpop.trf.xlu0
    %v4247 = vpop.trf.xlu0
    %v4248 = vpop.trf.xlu0
    %v4249 = vpop.trf.xlu0
    %v4250 = vpop.trf.xlu0
    %v4251 = vpop.trf.xlu0
    %v4252 = vpop.trf.xlu0
    %v4253 = vpop.trf.xlu0
    %4254 = vst.msk [vmem:[#allocation8] sm:$0xff] %vm1310, %v4206
    %4255 = vst.msk [vmem:[#allocation8 + $0x8] sm:$0xff] %vm1310, %v4207
    %4256 = vst.msk [vmem:[#allocation8 + $0x10] sm:$0xff] %vm1310, %v4208
    %4257 = vst.msk [vmem:[#allocation8 + $0x18] sm:$0xff] %vm1310, %v4209
    %4258 = vst.msk [vmem:[#allocation8 + $0x20] sm:$0xff] %vm1310, %v4238
    %4259 = vst.msk [vmem:[#allocation8 + $0x28] sm:$0xff] %vm1310, %v4239
    %4260 = vst.msk [vmem:[#allocation8 + $0x30] sm:$0xff] %vm1310, %v4240
    %4261 = vst.msk [vmem:[#allocation8 + $0x38] sm:$0xff] %vm1310, %v4241
    // Predicated region
    $region66: #{tpu_custom_call.1} parent=1 // pred_check
      _
    $region67: #{tpu_custom_call.1} parent=1 // pred_check_branch
      %4263 = sbr.rel (0) target = $region69
    $region68: #{tpu_custom_call.1} parent=1 // pred_region
      %4265 = vsyncadd [#allocation4], 0
      %s4266 = sshll.u32 [#allocation8], 4
      %s4267 = int_to_ptr.vmem [resolvable:$true] %s4266
      %s4268 = sshll.u32 %s13, 4
      %s4269 = int_to_ptr.hbm [resolvable:$true] %s4268
      %4274 = dma.vmem_to_hbm [thread:$0]  %s4267, 1024, %s4269, [#allocation4], 128, 128, 8
    $region69: #{tpu_custom_call.1} parent=1 // pred_fallthru
      _
    // Predicated region
    $region70: #{tpu_custom_call.1} parent=1 // pred_check
      _
    $region71: #{tpu_custom_call.1} parent=1 // pred_check_branch
      %4276 = sbr.rel (0) target = $region73
    $region72: #{tpu_custom_call.1} parent=1 // pred_region
      %4278 = dma.done [#allocation4], 1024
    $region73: #{tpu_custom_call.1} parent=1 // pred_fallthru
      _
    %4279 = vsyncpa [#allocation3], 1
    %4280 = vsyncpa [#allocation6], 1
    %4281 = vsyncpa [#allocation4], 1

</llo_original>
